<compile_context>
chip_gen: v7x
topology: tpu7x:2x2x1
jax: 0.10.0
libtpu: 0.0.40
codegen_flags: <defaults>
</compile_context>

<pallas_src>
import functools
import math

import jax
import jax.numpy as jnp
import numpy as np
from jax.experimental import pallas as pl
from jax.experimental.pallas import tpu as pltpu


def _block_kernel(x_ref,
                  g1_ref, be1_ref,
                  wqkv_ref, bqkv_ref,
                  wproj_ref, bproj_ref,
                  g2_ref, be2_ref,
                  wfc_ref, bfc_ref,
                  wout_ref, bout_ref,
                  o_ref,
                  *, num_heads: int, seq_len: int, ffn_chunk: int):
    R, E = x_ref.shape                 # R = SB * T rows (SB whole sequences)
    H = num_heads
    D = E // H
    T = seq_len
    SB = R // T
    eps = 1e-5
    f32 = jnp.float32
    bf16 = jnp.bfloat16

    x = x_ref[...].astype(f32)         # (R, E), residual path stays f32

    def layer_norm(v, g, b):
        mu = jnp.mean(v, axis=-1, keepdims=True)
        var = jnp.mean((v - mu) ** 2, axis=-1, keepdims=True)
        return (v - mu) * jax.lax.rsqrt(var + eps) * g + b

    # ---------------- LayerNorm 1 + fused QKV projection ----------------
    h1 = layer_norm(x, g1_ref[0], be1_ref[0])
    qkv = jnp.dot(h1.astype(bf16), wqkv_ref[...],
                  preferred_element_type=f32) + bqkv_ref[0]        # (R, 3E) f32

    # ---------------- Per-sequence batched causal attention ----------------
    # E-boundary slices (lane-aligned when E % 128 == 0), then a cheap
    # leading-axis reshape to (SB, T, E).
    q = qkv[:, 0 * E:1 * E].reshape(SB, T, E)
    k = qkv[:, 1 * E:2 * E].reshape(SB, T, E)
    v = qkv[:, 2 * E:3 * E].reshape(SB, T, E)

    rows = jax.lax.broadcasted_iota(jnp.int32, (T, T), 0)
    cols = jax.lax.broadcasted_iota(jnp.int32, (T, T), 1)
    causal = (rows >= cols)[None]                                  # (1, T, T)
    neg_inf = jnp.float32(-1e30)
    scale = 1.0 / math.sqrt(D)

    # TODO(synk): per-head lane slices at h*D are unaligned when D < 128; pad
    # per-head width to 128 in the QKV weight layout for production embed sizes.
    ctx_heads = []
    for h in range(H):
        qh = (q[:, :, h * D:(h + 1) * D] * scale).astype(bf16)     # (SB, T, D)
        kh = k[:, :, h * D:(h + 1) * D].astype(bf16)
        vh = v[:, :, h * D:(h + 1) * D].astype(bf16)

        s = jnp.einsum('bqd,bkd->bqk', qh, kh,
                       preferred_element_type=f32)                 # (SB, T, T)
        s = jnp.where(causal, s, neg_inf)
        m = jnp.max(s, axis=-1, keepdims=True)
        p = jnp.exp(s - m)
        inv_l = pl.reciprocal(jnp.sum(p, axis=-1, keepdims=True), approx=True)
        att = (p * inv_l).astype(bf16)                             # (SB, T, T)
        ctx_heads.append(jnp.einsum('bqk,bkd->bqd', att, vh,
                                    preferred_element_type=f32))   # (SB, T, D)

    # One full-width output projection: (R, E) @ (E, E) with K = E MXU fill.
    ctx = jnp.concatenate(ctx_heads, axis=-1).reshape(R, E).astype(bf16)
    x = x + jnp.dot(ctx, wproj_ref[...],
                    preferred_element_type=f32) + bproj_ref[0]     # residual 1

    # ---------------- LayerNorm 2 + chunked feed-forward ----------------
    h2 = layer_norm(x, g2_ref[0], be2_ref[0]).astype(bf16)
    bfc = bfc_ref[0]                                               # (4E,) f32
    F4 = wfc_ref.shape[1]
    ff_acc = jnp.zeros((R, E), dtype=f32)
    for c0 in range(0, F4, ffn_chunk):
        c1 = c0 + ffn_chunk
        hid = jnp.dot(h2, wfc_ref[:, c0:c1],
                      preferred_element_type=f32) + bfc[c0:c1]     # (R, chunk)
        hid = jnp.maximum(hid, 0.0).astype(bf16)                   # ReLU
        ff_acc = ff_acc + jnp.dot(hid, wout_ref[c0:c1, :],
                                  preferred_element_type=f32)

    o_ref[...] = (x + ff_acc + bout_ref[0]).astype(o_ref.dtype)    # residual 2


def _pick_seq_block(batch, seq_len, row_budget=512):
    """Sequences per grid step: rows fit the budget and (8, .) sublane tiling,
    while keeping >= 2 grid steps when batch > 1 (v7x dual-TC / megacore)."""
    max_sb = batch if batch == 1 else max(1, batch // 2)
    candidates = [sb for sb in range(1, max_sb + 1)
                  if batch % sb == 0
                  and (sb * seq_len) % 8 == 0
                  and sb * seq_len <= row_budget]
    if candidates:
        return max(candidates)
    # Fall back to the whole batch: block == full array dim, always legal.
    return batch


def _vmem_limit_bytes():
    """~3/4 of physical VMEM, capped at 64 MiB (v5e/v6e: 64 MiB, v7x: 48 MiB)."""
    try:
        cap = pltpu.get_tpu_info().vmem_capacity_bytes
    except Exception:
        cap = 128 * 1024 * 1024
    return int(min(64 * 1024 * 1024, (cap * 3) // 4))


def gpt_block(x, params, *, num_heads, row_budget=512):
    B, T, E = x.shape
    (g1, be1, wqkv, bqkv, wproj, bproj, g2, be2, wfc, bfc, wout, bout) = params

    # bf16 weights: native MXU dtype and half the HBM->VMEM DMA bytes.
    # LN params and biases stay f32 (added on the f32 accumulator path).
    bf16 = jnp.bfloat16
    kparams = (g1, be1,
               wqkv.astype(bf16), bqkv,
               wproj.astype(bf16), bproj,
               g2, be2,
               wfc.astype(bf16), bfc,
               wout.astype(bf16), bout)

    SB = _pick_seq_block(B, T, row_budget)
    R = SB * T
    x2 = x.reshape(B * T, E)          # flattened row slab

    ffn_chunk = 512 if (4 * E) % 512 == 0 else 4 * E
    kernel = functools.partial(_block_kernel, num_heads=num_heads, seq_len=T,
                               ffn_chunk=ffn_chunk)

    def make_call(single_buffer_weights):
        def weight_spec(shape):
            if single_buffer_weights:
                # Weights are grid-invariant (constant index map): one VMEM
                # buffer suffices; default double-buffering is pure waste and
                # nearly exhausts v7x's 64 MiB VMEM at production E.
                return pl.BlockSpec(shape, lambda b: (0,) * len(shape),
                                    pipeline_mode=pl.Buffered(1))
            return pl.BlockSpec(shape, lambda b: (0,) * len(shape))

        in_specs = [pl.BlockSpec((R, E), lambda b: (b, 0))] + [
            weight_spec(p.shape) for p in kparams]
        out_spec = pl.BlockSpec((R, E), lambda b: (b, 0))

        return pl.pallas_call(
            kernel,
            out_shape=jax.ShapeDtypeStruct((B * T, E), x.dtype),
            grid_spec=pltpu.PrefetchScalarGridSpec(
                num_scalar_prefetch=0,
                grid=((B * T) // R,),
                in_specs=in_specs,
                out_specs=out_spec,
            ),
            compiler_params=pltpu.CompilerParams(
                dimension_semantics=("parallel",),
                vmem_limit_bytes=_vmem_limit_bytes(),
            ),
        )

    # TODO(synk): for E >= 2048 on v7x, stream weight chunks (K-blocked grid
    # axis or emit_pipeline) instead of holding full weights in VMEM.
    try:
        out2 = make_call(True)(x2, *kparams)
    except Exception:
        # Some jax versions reject Buffered(1); fall back to default specs.
        out2 = make_call(False)(x2, *kparams)
    return out2.reshape(B, T, E)


def gpt_block_ref(x, params, *, num_heads):
    """Pure-JAX f32 reference for correctness checking."""
    (g1, be1, wqkv, bqkv, wproj, bproj, g2, be2, wfc, bfc, wout, bout) = params
    B, T, E = x.shape
    H = num_heads
    D = E // H
    eps = 1e-5

    def ln(v, g, b):
        mu = jnp.mean(v, axis=-1, keepdims=True)
        var = jnp.mean((v - mu) ** 2, axis=-1, keepdims=True)
        return (v - mu) / jnp.sqrt(var + eps) * g + b

    h = ln(x, g1[0], be1[0])
    qkv = h @ wqkv + bqkv[0]
    q, k, v = jnp.split(qkv, 3, axis=-1)
    q = q.reshape(B, T, H, D)
    k = k.reshape(B, T, H, D)
    v = v.reshape(B, T, H, D)
    scores = jnp.einsum('bthd,bshd->bhts', q, k) / math.sqrt(D)
    mask = jnp.tril(jnp.ones((T, T), dtype=bool))
    scores = jnp.where(mask[None, None], scores, -1e30)
    att = jax.nn.softmax(scores, axis=-1)
    ctx = jnp.einsum('bhts,bshd->bthd', att, v).reshape(B, T, E)
    x = x + ctx @ wproj + bproj[0]

    h2 = ln(x, g2[0], be2[0])
    ff = jnp.maximum(h2 @ wfc + bfc[0], 0.0) @ wout + bout[0]
    return x + ff


def init_params(key, embed_size):
    E = embed_size
    ks = jax.random.split(key, 6)
    s = 0.02
    g1 = jnp.ones((1, E), jnp.float32)
    be1 = jnp.zeros((1, E), jnp.float32)
    wqkv = s * jax.random.normal(ks[0], (E, 3 * E), jnp.float32)
    bqkv = s * jax.random.normal(ks[1], (1, 3 * E), jnp.float32)
    wproj = s * jax.random.normal(ks[2], (E, E), jnp.float32)
    bproj = jnp.zeros((1, E), jnp.float32)
    g2 = jnp.ones((1, E), jnp.float32)
    be2 = jnp.zeros((1, E), jnp.float32)
    wfc = s * jax.random.normal(ks[3], (E, 4 * E), jnp.float32)
    bfc = s * jax.random.normal(ks[4], (1, 4 * E), jnp.float32)
    wout = s * jax.random.normal(ks[5], (4 * E, E), jnp.float32)
    bout = jnp.zeros((1, E), jnp.float32)
    return (g1, be1, wqkv, bqkv, wproj, bproj, g2, be2, wfc, bfc, wout, bout)


if __name__ == "__main__":
    B, T, E, H = 2, 8, 32, 4   # batch, seq len, embed size, heads

    key = jax.random.PRNGKey(0)
    k_x, k_p = jax.random.split(key)
    x = jax.random.normal(k_x, (B, T, E), jnp.float32)
    params = init_params(k_p, E)

    out = jax.block_until_ready(gpt_block(x, params, num_heads=H))

    ref = gpt_block_ref(x, params, num_heads=H)
    # bf16 matmuls + approx reciprocal => loosened tolerance vs. pure-f32 ref.
    np.testing.assert_allclose(np.asarray(out), np.asarray(ref),
                               rtol=2e-2, atol=2e-2)

    print("KERNEL_OK")
</pallas_src>

<mosaic_0001>
module attributes {stable_mosaic.version = 11 : i64} {
  func.func @_block_kernel(%arg0: i32, %arg1: memref<8x32xf32, #tpu.memory_space<vmem>>, %arg2: memref<1x32xf32, #tpu.memory_space<vmem>>, %arg3: memref<1x32xf32, #tpu.memory_space<vmem>>, %arg4: memref<32x96xbf16, #tpu.memory_space<vmem>>, %arg5: memref<1x96xf32, #tpu.memory_space<vmem>>, %arg6: memref<32x32xbf16, #tpu.memory_space<vmem>>, %arg7: memref<1x32xf32, #tpu.memory_space<vmem>>, %arg8: memref<1x32xf32, #tpu.memory_space<vmem>>, %arg9: memref<1x32xf32, #tpu.memory_space<vmem>>, %arg10: memref<32x128xbf16, #tpu.memory_space<vmem>>, %arg11: memref<1x128xf32, #tpu.memory_space<vmem>>, %arg12: memref<128x32xbf16, #tpu.memory_space<vmem>>, %arg13: memref<1x32xf32, #tpu.memory_space<vmem>>, %arg14: memref<8x32xf32, #tpu.memory_space<vmem>>) attributes {dimension_semantics = [#tpu.dimension_semantics<parallel>], iteration_bounds = array<i64: 2>, scalar_prefetch = 0 : i64, scratch_operands = 0 : i64, tpu.core_type = #tpu.core_type<tc>, window_params = [{transform_indices = @transform_0, window_bounds = array<i64: 8, 32>}, {pipeline_mode = #tpu.pipeline_mode<synchronous>, transform_indices = @transform_1, window_bounds = array<i64: 1, 32>}, {pipeline_mode = #tpu.pipeline_mode<synchronous>, transform_indices = @transform_2, window_bounds = array<i64: 1, 32>}, {pipeline_mode = #tpu.pipeline_mode<synchronous>, transform_indices = @transform_3, window_bounds = array<i64: 32, 96>}, {pipeline_mode = #tpu.pipeline_mode<synchronous>, transform_indices = @transform_4, window_bounds = array<i64: 1, 96>}, {pipeline_mode = #tpu.pipeline_mode<synchronous>, transform_indices = @transform_5, window_bounds = array<i64: 32, 32>}, {pipeline_mode = #tpu.pipeline_mode<synchronous>, transform_indices = @transform_6, window_bounds = array<i64: 1, 32>}, {pipeline_mode = #tpu.pipeline_mode<synchronous>, transform_indices = @transform_7, window_bounds = array<i64: 1, 32>}, {pipeline_mode = #tpu.pipeline_mode<synchronous>, transform_indices = @transform_8, window_bounds = array<i64: 1, 32>}, {pipeline_mode = #tpu.pipeline_mode<synchronous>, transform_indices = @transform_9, window_bounds = array<i64: 32, 128>}, {pipeline_mode = #tpu.pipeline_mode<synchronous>, transform_indices = @transform_10, window_bounds = array<i64: 1, 128>}, {pipeline_mode = #tpu.pipeline_mode<synchronous>, transform_indices = @transform_11, window_bounds = array<i64: 128, 32>}, {pipeline_mode = #tpu.pipeline_mode<synchronous>, transform_indices = @transform_12, window_bounds = array<i64: 1, 32>}, {transform_indices = @transform_13, window_bounds = array<i64: 8, 32>}]} {
    %c0 = arith.constant 0 : index
    %c0_0 = arith.constant 0 : index
    %0 = vector.load %arg1[%c0, %c0_0] : memref<8x32xf32, #tpu.memory_space<vmem>>, vector<8x32xf32>
    %c0_1 = arith.constant 0 : index
    %c0_2 = arith.constant 0 : index
    %1 = vector.load %arg2[%c0_1, %c0_2] : memref<1x32xf32, #tpu.memory_space<vmem>>, vector<1x32xf32>
    %2 = vector.shape_cast %1 : vector<1x32xf32> to vector<32xf32>
    %c0_3 = arith.constant 0 : index
    %c0_4 = arith.constant 0 : index
    %3 = vector.load %arg3[%c0_3, %c0_4] : memref<1x32xf32, #tpu.memory_space<vmem>>, vector<1x32xf32>
    %4 = vector.shape_cast %3 : vector<1x32xf32> to vector<32xf32>
    %cst = arith.constant dense<0.000000e+00> : vector<8xf32>
    %5 = vector.multi_reduction <add>, %0, %cst [1] : vector<8x32xf32> to vector<8xf32>
    %6 = vector.shape_cast %5 : vector<8xf32> to vector<8x1xf32>
    %cst_5 = arith.constant 3.200000e+01 : f32
    %7 = vector.broadcast %cst_5 : f32 to vector<8x1xf32>
    %8 = arith.divf %6, %7 : vector<8x1xf32>
    %9 = vector.broadcast %8 : vector<8x1xf32> to vector<8x32xf32>
    %10 = arith.subf %0, %9 : vector<8x32xf32>
    %11 = arith.mulf %10, %10 : vector<8x32xf32>
    %cst_6 = arith.constant dense<0.000000e+00> : vector<8xf32>
    %12 = vector.multi_reduction <add>, %11, %cst_6 [1] : vector<8x32xf32> to vector<8xf32>
    %13 = vector.shape_cast %12 : vector<8xf32> to vector<8x1xf32>
    %cst_7 = arith.constant 3.200000e+01 : f32
    %14 = vector.broadcast %cst_7 : f32 to vector<8x1xf32>
    %15 = arith.divf %13, %14 : vector<8x1xf32>
    %16 = vector.broadcast %8 : vector<8x1xf32> to vector<8x32xf32>
    %17 = arith.subf %0, %16 : vector<8x32xf32>
    %cst_8 = arith.constant 9.99999974E-6 : f32
    %18 = vector.broadcast %cst_8 : f32 to vector<8x1xf32>
    %19 = arith.addf %15, %18 : vector<8x1xf32>
    %20 = math.rsqrt %19 : vector<8x1xf32>
    %21 = vector.broadcast %20 : vector<8x1xf32> to vector<8x32xf32>
    %22 = arith.mulf %17, %21 : vector<8x32xf32>
    %23 = vector.shape_cast %2 : vector<32xf32> to vector<1x32xf32>
    %24 = vector.broadcast %23 : vector<1x32xf32> to vector<8x32xf32>
    %25 = arith.mulf %22, %24 : vector<8x32xf32>
    %26 = vector.shape_cast %4 : vector<32xf32> to vector<1x32xf32>
    %27 = vector.broadcast %26 : vector<1x32xf32> to vector<8x32xf32>
    %28 = arith.addf %25, %27 : vector<8x32xf32>
    %29 = arith.truncf %28 : vector<8x32xf32> to vector<8x32xbf16>
    %c0_9 = arith.constant 0 : index
    %c0_10 = arith.constant 0 : index
    %30 = vector.load %arg4[%c0_9, %c0_10] : memref<32x96xbf16, #tpu.memory_space<vmem>>, vector<32x96xbf16>
    %cst_11 = arith.constant dense<0.000000e+00> : vector<8x96xf32>
    %31 = tpu.matmul %29, %30, %cst_11 {dimension_numbers = #tpu.dot_dimension_numbers<[1], [0], [0], [1], [0, 0, 1, 1], [], []>} : vector<8x32xbf16>, vector<32x96xbf16>, vector<8x96xf32> -> vector<8x96xf32>
    %c0_12 = arith.constant 0 : index
    %c0_13 = arith.constant 0 : index
    %32 = vector.load %arg5[%c0_12, %c0_13] : memref<1x96xf32, #tpu.memory_space<vmem>>, vector<1x96xf32>
    %33 = vector.shape_cast %32 : vector<1x96xf32> to vector<96xf32>
    %34 = vector.shape_cast %33 : vector<96xf32> to vector<1x96xf32>
    %35 = vector.broadcast %34 : vector<1x96xf32> to vector<8x96xf32>
    %36 = arith.addf %31, %35 : vector<8x96xf32>
    %37 = vector.extract_strided_slice %36 {offsets = [0, 0], sizes = [8, 32], strides = [1, 1]} : vector<8x96xf32> to vector<8x32xf32>
    %38 = vector.shape_cast %37 : vector<8x32xf32> to vector<1x8x32xf32>
    %39 = vector.extract_strided_slice %36 {offsets = [0, 32], sizes = [8, 32], strides = [1, 1]} : vector<8x96xf32> to vector<8x32xf32>
    %40 = vector.shape_cast %39 : vector<8x32xf32> to vector<1x8x32xf32>
    %41 = vector.extract_strided_slice %36 {offsets = [0, 64], sizes = [8, 32], strides = [1, 1]} : vector<8x96xf32> to vector<8x32xf32>
    %42 = vector.shape_cast %41 : vector<8x32xf32> to vector<1x8x32xf32>
    %43 = tpu.iota {dimensions = array<i32: 0>} : vector<8x8xi32>
    %44 = tpu.iota {dimensions = array<i32: 1>} : vector<8x8xi32>
    %45 = arith.cmpi sge, %43, %44 : vector<8x8xi32>
    %46 = vector.shape_cast %45 : vector<8x8xi1> to vector<1x8x8xi1>
    %47 = vector.extract_strided_slice %38 {offsets = [0, 0, 0], sizes = [1, 8, 8], strides = [1, 1, 1]} : vector<1x8x32xf32> to vector<1x8x8xf32>
    %cst_14 = arith.constant 0.353553385 : f32
    %48 = vector.broadcast %cst_14 : f32 to vector<1x8x8xf32>
    %49 = arith.mulf %47, %48 : vector<1x8x8xf32>
    %50 = arith.truncf %49 : vector<1x8x8xf32> to vector<1x8x8xbf16>
    %51 = vector.extract_strided_slice %40 {offsets = [0, 0, 0], sizes = [1, 8, 8], strides = [1, 1, 1]} : vector<1x8x32xf32> to vector<1x8x8xf32>
    %52 = arith.truncf %51 : vector<1x8x8xf32> to vector<1x8x8xbf16>
    %53 = vector.extract_strided_slice %42 {offsets = [0, 0, 0], sizes = [1, 8, 8], strides = [1, 1, 1]} : vector<1x8x32xf32> to vector<1x8x8xf32>
    %54 = arith.truncf %53 : vector<1x8x8xf32> to vector<1x8x8xbf16>
    "tpu.trace_start"() <{level = 10 : i32, message = "bqd,bkd->bqk"}> : () -> ()
    %cst_15 = arith.constant dense<0.000000e+00> : vector<1x8x8xf32>
    %55 = tpu.matmul %50, %52, %cst_15 {dimension_numbers = #tpu.dot_dimension_numbers<[2], [2], [1], [1], [0, 0, 0, 1, 1, 1], [0], [0]>} : vector<1x8x8xbf16>, vector<1x8x8xbf16>, vector<1x8x8xf32> -> vector<1x8x8xf32>
    %cst_16 = arith.constant -1.000000e+30 : f32
    "tpu.trace_stop"() : () -> ()
    %56 = vector.broadcast %cst_16 : f32 to vector<1x8x8xf32>
    %57 = arith.select %46, %55, %56 : vector<1x8x8xi1>, vector<1x8x8xf32>
    %cst_17 = arith.constant dense<0xFF800000> : vector<1x8xf32>
    %58 = vector.multi_reduction <maximumf>, %57, %cst_17 [2] : vector<1x8x8xf32> to vector<1x8xf32>
    %59 = vector.shape_cast %58 : vector<1x8xf32> to vector<1x8x1xf32>
    %60 = vector.broadcast %59 : vector<1x8x1xf32> to vector<1x8x8xf32>
    %61 = arith.subf %57, %60 : vector<1x8x8xf32>
    %62 = math.exp %61 : vector<1x8x8xf32>
    %cst_18 = arith.constant dense<0.000000e+00> : vector<1x8xf32>
    %63 = vector.multi_reduction <add>, %62, %cst_18 [2] : vector<1x8x8xf32> to vector<1x8xf32>
    %64 = vector.shape_cast %63 : vector<1x8xf32> to vector<1x8x1xf32>
    %65 = tpu.reciprocal %64 {approx = true} : vector<1x8x1xf32> -> vector<1x8x1xf32>
    %66 = vector.broadcast %65 : vector<1x8x1xf32> to vector<1x8x8xf32>
    %67 = arith.mulf %62, %66 : vector<1x8x8xf32>
    %68 = arith.truncf %67 : vector<1x8x8xf32> to vector<1x8x8xbf16>
    "tpu.trace_start"() <{level = 10 : i32, message = "bqk,bkd->bqd"}> : () -> ()
    %cst_19 = arith.constant dense<0.000000e+00> : vector<1x8x8xf32>
    %69 = tpu.matmul %68, %54, %cst_19 {dimension_numbers = #tpu.dot_dimension_numbers<[2], [1], [1], [2], [0, 0, 0, 1, 1, 2], [0], [0]>} : vector<1x8x8xbf16>, vector<1x8x8xbf16>, vector<1x8x8xf32> -> vector<1x8x8xf32>
    "tpu.trace_stop"() : () -> ()
    %70 = vector.extract_strided_slice %38 {offsets = [0, 0, 8], sizes = [1, 8, 8], strides = [1, 1, 1]} : vector<1x8x32xf32> to vector<1x8x8xf32>
    %cst_20 = arith.constant 0.353553385 : f32
    %71 = vector.broadcast %cst_20 : f32 to vector<1x8x8xf32>
    %72 = arith.mulf %70, %71 : vector<1x8x8xf32>
    %73 = arith.truncf %72 : vector<1x8x8xf32> to vector<1x8x8xbf16>
    %74 = vector.extract_strided_slice %40 {offsets = [0, 0, 8], sizes = [1, 8, 8], strides = [1, 1, 1]} : vector<1x8x32xf32> to vector<1x8x8xf32>
    %75 = arith.truncf %74 : vector<1x8x8xf32> to vector<1x8x8xbf16>
    %76 = vector.extract_strided_slice %42 {offsets = [0, 0, 8], sizes = [1, 8, 8], strides = [1, 1, 1]} : vector<1x8x32xf32> to vector<1x8x8xf32>
    %77 = arith.truncf %76 : vector<1x8x8xf32> to vector<1x8x8xbf16>
    "tpu.trace_start"() <{level = 10 : i32, message = "bqd,bkd->bqk"}> : () -> ()
    %cst_21 = arith.constant dense<0.000000e+00> : vector<1x8x8xf32>
    %78 = tpu.matmul %73, %75, %cst_21 {dimension_numbers = #tpu.dot_dimension_numbers<[2], [2], [1], [1], [0, 0, 0, 1, 1, 1], [0], [0]>} : vector<1x8x8xbf16>, vector<1x8x8xbf16>, vector<1x8x8xf32> -> vector<1x8x8xf32>
    %cst_22 = arith.constant -1.000000e+30 : f32
    "tpu.trace_stop"() : () -> ()
    %79 = vector.broadcast %cst_22 : f32 to vector<1x8x8xf32>
    %80 = arith.select %46, %78, %79 : vector<1x8x8xi1>, vector<1x8x8xf32>
    %cst_23 = arith.constant dense<0xFF800000> : vector<1x8xf32>
    %81 = vector.multi_reduction <maximumf>, %80, %cst_23 [2] : vector<1x8x8xf32> to vector<1x8xf32>
    %82 = vector.shape_cast %81 : vector<1x8xf32> to vector<1x8x1xf32>
    %83 = vector.broadcast %82 : vector<1x8x1xf32> to vector<1x8x8xf32>
    %84 = arith.subf %80, %83 : vector<1x8x8xf32>
    %85 = math.exp %84 : vector<1x8x8xf32>
    %cst_24 = arith.constant dense<0.000000e+00> : vector<1x8xf32>
    %86 = vector.multi_reduction <add>, %85, %cst_24 [2] : vector<1x8x8xf32> to vector<1x8xf32>
    %87 = vector.shape_cast %86 : vector<1x8xf32> to vector<1x8x1xf32>
    %88 = tpu.reciprocal %87 {approx = true} : vector<1x8x1xf32> -> vector<1x8x1xf32>
    %89 = vector.broadcast %88 : vector<1x8x1xf32> to vector<1x8x8xf32>
    %90 = arith.mulf %85, %89 : vector<1x8x8xf32>
    %91 = arith.truncf %90 : vector<1x8x8xf32> to vector<1x8x8xbf16>
    "tpu.trace_start"() <{level = 10 : i32, message = "bqk,bkd->bqd"}> : () -> ()
    %cst_25 = arith.constant dense<0.000000e+00> : vector<1x8x8xf32>
    %92 = tpu.matmul %91, %77, %cst_25 {dimension_numbers = #tpu.dot_dimension_numbers<[2], [1], [1], [2], [0, 0, 0, 1, 1, 2], [0], [0]>} : vector<1x8x8xbf16>, vector<1x8x8xbf16>, vector<1x8x8xf32> -> vector<1x8x8xf32>
    "tpu.trace_stop"() : () -> ()
    %93 = vector.extract_strided_slice %38 {offsets = [0, 0, 16], sizes = [1, 8, 8], strides = [1, 1, 1]} : vector<1x8x32xf32> to vector<1x8x8xf32>
    %cst_26 = arith.constant 0.353553385 : f32
    %94 = vector.broadcast %cst_26 : f32 to vector<1x8x8xf32>
    %95 = arith.mulf %93, %94 : vector<1x8x8xf32>
    %96 = arith.truncf %95 : vector<1x8x8xf32> to vector<1x8x8xbf16>
    %97 = vector.extract_strided_slice %40 {offsets = [0, 0, 16], sizes = [1, 8, 8], strides = [1, 1, 1]} : vector<1x8x32xf32> to vector<1x8x8xf32>
    %98 = arith.truncf %97 : vector<1x8x8xf32> to vector<1x8x8xbf16>
    %99 = vector.extract_strided_slice %42 {offsets = [0, 0, 16], sizes = [1, 8, 8], strides = [1, 1, 1]} : vector<1x8x32xf32> to vector<1x8x8xf32>
    %100 = arith.truncf %99 : vector<1x8x8xf32> to vector<1x8x8xbf16>
    "tpu.trace_start"() <{level = 10 : i32, message = "bqd,bkd->bqk"}> : () -> ()
    %cst_27 = arith.constant dense<0.000000e+00> : vector<1x8x8xf32>
    %101 = tpu.matmul %96, %98, %cst_27 {dimension_numbers = #tpu.dot_dimension_numbers<[2], [2], [1], [1], [0, 0, 0, 1, 1, 1], [0], [0]>} : vector<1x8x8xbf16>, vector<1x8x8xbf16>, vector<1x8x8xf32> -> vector<1x8x8xf32>
    %cst_28 = arith.constant -1.000000e+30 : f32
    "tpu.trace_stop"() : () -> ()
    %102 = vector.broadcast %cst_28 : f32 to vector<1x8x8xf32>
    %103 = arith.select %46, %101, %102 : vector<1x8x8xi1>, vector<1x8x8xf32>
    %cst_29 = arith.constant dense<0xFF800000> : vector<1x8xf32>
    %104 = vector.multi_reduction <maximumf>, %103, %cst_29 [2] : vector<1x8x8xf32> to vector<1x8xf32>
    %105 = vector.shape_cast %104 : vector<1x8xf32> to vector<1x8x1xf32>
    %106 = vector.broadcast %105 : vector<1x8x1xf32> to vector<1x8x8xf32>
    %107 = arith.subf %103, %106 : vector<1x8x8xf32>
    %108 = math.exp %107 : vector<1x8x8xf32>
    %cst_30 = arith.constant dense<0.000000e+00> : vector<1x8xf32>
    %109 = vector.multi_reduction <add>, %108, %cst_30 [2] : vector<1x8x8xf32> to vector<1x8xf32>
    %110 = vector.shape_cast %109 : vector<1x8xf32> to vector<1x8x1xf32>
    %111 = tpu.reciprocal %110 {approx = true} : vector<1x8x1xf32> -> vector<1x8x1xf32>
    %112 = vector.broadcast %111 : vector<1x8x1xf32> to vector<1x8x8xf32>
    %113 = arith.mulf %108, %112 : vector<1x8x8xf32>
    %114 = arith.truncf %113 : vector<1x8x8xf32> to vector<1x8x8xbf16>
    "tpu.trace_start"() <{level = 10 : i32, message = "bqk,bkd->bqd"}> : () -> ()
    %cst_31 = arith.constant dense<0.000000e+00> : vector<1x8x8xf32>
    %115 = tpu.matmul %114, %100, %cst_31 {dimension_numbers = #tpu.dot_dimension_numbers<[2], [1], [1], [2], [0, 0, 0, 1, 1, 2], [0], [0]>} : vector<1x8x8xbf16>, vector<1x8x8xbf16>, vector<1x8x8xf32> -> vector<1x8x8xf32>
    "tpu.trace_stop"() : () -> ()
    %116 = vector.extract_strided_slice %38 {offsets = [0, 0, 24], sizes = [1, 8, 8], strides = [1, 1, 1]} : vector<1x8x32xf32> to vector<1x8x8xf32>
    %cst_32 = arith.constant 0.353553385 : f32
    %117 = vector.broadcast %cst_32 : f32 to vector<1x8x8xf32>
    %118 = arith.mulf %116, %117 : vector<1x8x8xf32>
    %119 = arith.truncf %118 : vector<1x8x8xf32> to vector<1x8x8xbf16>
    %120 = vector.extract_strided_slice %40 {offsets = [0, 0, 24], sizes = [1, 8, 8], strides = [1, 1, 1]} : vector<1x8x32xf32> to vector<1x8x8xf32>
    %121 = arith.truncf %120 : vector<1x8x8xf32> to vector<1x8x8xbf16>
    %122 = vector.extract_strided_slice %42 {offsets = [0, 0, 24], sizes = [1, 8, 8], strides = [1, 1, 1]} : vector<1x8x32xf32> to vector<1x8x8xf32>
    %123 = arith.truncf %122 : vector<1x8x8xf32> to vector<1x8x8xbf16>
    "tpu.trace_start"() <{level = 10 : i32, message = "bqd,bkd->bqk"}> : () -> ()
    %cst_33 = arith.constant dense<0.000000e+00> : vector<1x8x8xf32>
    %124 = tpu.matmul %119, %121, %cst_33 {dimension_numbers = #tpu.dot_dimension_numbers<[2], [2], [1], [1], [0, 0, 0, 1, 1, 1], [0], [0]>} : vector<1x8x8xbf16>, vector<1x8x8xbf16>, vector<1x8x8xf32> -> vector<1x8x8xf32>
    %cst_34 = arith.constant -1.000000e+30 : f32
    "tpu.trace_stop"() : () -> ()
    %125 = vector.broadcast %cst_34 : f32 to vector<1x8x8xf32>
    %126 = arith.select %46, %124, %125 : vector<1x8x8xi1>, vector<1x8x8xf32>
    %cst_35 = arith.constant dense<0xFF800000> : vector<1x8xf32>
    %127 = vector.multi_reduction <maximumf>, %126, %cst_35 [2] : vector<1x8x8xf32> to vector<1x8xf32>
    %128 = vector.shape_cast %127 : vector<1x8xf32> to vector<1x8x1xf32>
    %129 = vector.broadcast %128 : vector<1x8x1xf32> to vector<1x8x8xf32>
    %130 = arith.subf %126, %129 : vector<1x8x8xf32>
    %131 = math.exp %130 : vector<1x8x8xf32>
    %cst_36 = arith.constant dense<0.000000e+00> : vector<1x8xf32>
    %132 = vector.multi_reduction <add>, %131, %cst_36 [2] : vector<1x8x8xf32> to vector<1x8xf32>
    %133 = vector.shape_cast %132 : vector<1x8xf32> to vector<1x8x1xf32>
    %134 = tpu.reciprocal %133 {approx = true} : vector<1x8x1xf32> -> vector<1x8x1xf32>
    %135 = vector.broadcast %134 : vector<1x8x1xf32> to vector<1x8x8xf32>
    %136 = arith.mulf %131, %135 : vector<1x8x8xf32>
    %137 = arith.truncf %136 : vector<1x8x8xf32> to vector<1x8x8xbf16>
    "tpu.trace_start"() <{level = 10 : i32, message = "bqk,bkd->bqd"}> : () -> ()
    %cst_37 = arith.constant dense<0.000000e+00> : vector<1x8x8xf32>
    %138 = tpu.matmul %137, %123, %cst_37 {dimension_numbers = #tpu.dot_dimension_numbers<[2], [1], [1], [2], [0, 0, 0, 1, 1, 2], [0], [0]>} : vector<1x8x8xbf16>, vector<1x8x8xbf16>, vector<1x8x8xf32> -> vector<1x8x8xf32>
    "tpu.trace_stop"() : () -> ()
    %139 = tpu.concatenate %69, %92, %115, %138 in 2 : vector<1x8x8xf32>, vector<1x8x8xf32>, vector<1x8x8xf32>, vector<1x8x8xf32> -> vector<1x8x32xf32>
    %140 = vector.shape_cast %139 : vector<1x8x32xf32> to vector<8x32xf32>
    %141 = arith.truncf %140 : vector<8x32xf32> to vector<8x32xbf16>
    %c0_38 = arith.constant 0 : index
    %c0_39 = arith.constant 0 : index
    %142 = vector.load %arg6[%c0_38, %c0_39] : memref<32x32xbf16, #tpu.memory_space<vmem>>, vector<32x32xbf16>
    %cst_40 = arith.constant dense<0.000000e+00> : vector<8x32xf32>
    %143 = tpu.matmul %141, %142, %cst_40 {dimension_numbers = #tpu.dot_dimension_numbers<[1], [0], [0], [1], [0, 0, 1, 1], [], []>} : vector<8x32xbf16>, vector<32x32xbf16>, vector<8x32xf32> -> vector<8x32xf32>
    %144 = arith.addf %0, %143 : vector<8x32xf32>
    %c0_41 = arith.constant 0 : index
    %c0_42 = arith.constant 0 : index
    %145 = vector.load %arg7[%c0_41, %c0_42] : memref<1x32xf32, #tpu.memory_space<vmem>>, vector<1x32xf32>
    %146 = vector.shape_cast %145 : vector<1x32xf32> to vector<32xf32>
    %147 = vector.shape_cast %146 : vector<32xf32> to vector<1x32xf32>
    %148 = vector.broadcast %147 : vector<1x32xf32> to vector<8x32xf32>
    %149 = arith.addf %144, %148 : vector<8x32xf32>
    %c0_43 = arith.constant 0 : index
    %c0_44 = arith.constant 0 : index
    %150 = vector.load %arg8[%c0_43, %c0_44] : memref<1x32xf32, #tpu.memory_space<vmem>>, vector<1x32xf32>
    %151 = vector.shape_cast %150 : vector<1x32xf32> to vector<32xf32>
    %c0_45 = arith.constant 0 : index
    %c0_46 = arith.constant 0 : index
    %152 = vector.load %arg9[%c0_45, %c0_46] : memref<1x32xf32, #tpu.memory_space<vmem>>, vector<1x32xf32>
    %153 = vector.shape_cast %152 : vector<1x32xf32> to vector<32xf32>
    %cst_47 = arith.constant dense<0.000000e+00> : vector<8xf32>
    %154 = vector.multi_reduction <add>, %149, %cst_47 [1] : vector<8x32xf32> to vector<8xf32>
    %155 = vector.shape_cast %154 : vector<8xf32> to vector<8x1xf32>
    %cst_48 = arith.constant 3.200000e+01 : f32
    %156 = vector.broadcast %cst_48 : f32 to vector<8x1xf32>
    %157 = arith.divf %155, %156 : vector<8x1xf32>
    %158 = vector.broadcast %157 : vector<8x1xf32> to vector<8x32xf32>
    %159 = arith.subf %149, %158 : vector<8x32xf32>
    %160 = arith.mulf %159, %159 : vector<8x32xf32>
    %cst_49 = arith.constant dense<0.000000e+00> : vector<8xf32>
    %161 = vector.multi_reduction <add>, %160, %cst_49 [1] : vector<8x32xf32> to vector<8xf32>
    %162 = vector.shape_cast %161 : vector<8xf32> to vector<8x1xf32>
    %cst_50 = arith.constant 3.200000e+01 : f32
    %163 = vector.broadcast %cst_50 : f32 to vector<8x1xf32>
    %164 = arith.divf %162, %163 : vector<8x1xf32>
    %165 = vector.broadcast %157 : vector<8x1xf32> to vector<8x32xf32>
    %166 = arith.subf %149, %165 : vector<8x32xf32>
    %cst_51 = arith.constant 9.99999974E-6 : f32
    %167 = vector.broadcast %cst_51 : f32 to vector<8x1xf32>
    %168 = arith.addf %164, %167 : vector<8x1xf32>
    %169 = math.rsqrt %168 : vector<8x1xf32>
    %170 = vector.broadcast %169 : vector<8x1xf32> to vector<8x32xf32>
    %171 = arith.mulf %166, %170 : vector<8x32xf32>
    %172 = vector.shape_cast %151 : vector<32xf32> to vector<1x32xf32>
    %173 = vector.broadcast %172 : vector<1x32xf32> to vector<8x32xf32>
    %174 = arith.mulf %171, %173 : vector<8x32xf32>
    %175 = vector.shape_cast %153 : vector<32xf32> to vector<1x32xf32>
    %176 = vector.broadcast %175 : vector<1x32xf32> to vector<8x32xf32>
    %177 = arith.addf %174, %176 : vector<8x32xf32>
    %178 = arith.truncf %177 : vector<8x32xf32> to vector<8x32xbf16>
    %c0_52 = arith.constant 0 : index
    %c0_53 = arith.constant 0 : index
    %179 = vector.load %arg11[%c0_52, %c0_53] : memref<1x128xf32, #tpu.memory_space<vmem>>, vector<1x128xf32>
    %180 = vector.shape_cast %179 : vector<1x128xf32> to vector<128xf32>
    %cst_54 = arith.constant 0.000000e+00 : f32
    %181 = vector.broadcast %cst_54 : f32 to vector<8x32xf32>
    %c0_55 = arith.constant 0 : index
    %c0_56 = arith.constant 0 : index
    %182 = vector.load %arg10[%c0_55, %c0_56] : memref<32x128xbf16, #tpu.memory_space<vmem>>, vector<32x128xbf16>
    %cst_57 = arith.constant dense<0.000000e+00> : vector<8x128xf32>
    %183 = tpu.matmul %178, %182, %cst_57 {dimension_numbers = #tpu.dot_dimension_numbers<[1], [0], [0], [1], [0, 0, 1, 1], [], []>} : vector<8x32xbf16>, vector<32x128xbf16>, vector<8x128xf32> -> vector<8x128xf32>
    %184 = vector.shape_cast %180 : vector<128xf32> to vector<1x128xf32>
    %185 = vector.broadcast %184 : vector<1x128xf32> to vector<8x128xf32>
    %186 = arith.addf %183, %185 : vector<8x128xf32>
    %cst_58 = arith.constant 0.000000e+00 : f32
    %187 = vector.broadcast %cst_58 : f32 to vector<8x128xf32>
    %188 = arith.maximumf %186, %187 : vector<8x128xf32>
    %189 = arith.truncf %188 : vector<8x128xf32> to vector<8x128xbf16>
    %c0_59 = arith.constant 0 : index
    %c0_60 = arith.constant 0 : index
    %190 = vector.load %arg12[%c0_59, %c0_60] : memref<128x32xbf16, #tpu.memory_space<vmem>>, vector<128x32xbf16>
    %cst_61 = arith.constant dense<0.000000e+00> : vector<8x32xf32>
    %191 = tpu.matmul %189, %190, %cst_61 {dimension_numbers = #tpu.dot_dimension_numbers<[1], [0], [0], [1], [0, 0, 1, 1], [], []>} : vector<8x128xbf16>, vector<128x32xbf16>, vector<8x32xf32> -> vector<8x32xf32>
    %192 = arith.addf %181, %191 : vector<8x32xf32>
    %193 = arith.addf %149, %192 : vector<8x32xf32>
    %c0_62 = arith.constant 0 : index
    %c0_63 = arith.constant 0 : index
    %194 = vector.load %arg13[%c0_62, %c0_63] : memref<1x32xf32, #tpu.memory_space<vmem>>, vector<1x32xf32>
    %195 = vector.shape_cast %194 : vector<1x32xf32> to vector<32xf32>
    %196 = vector.shape_cast %195 : vector<32xf32> to vector<1x32xf32>
    %197 = vector.broadcast %196 : vector<1x32xf32> to vector<8x32xf32>
    %198 = arith.addf %193, %197 : vector<8x32xf32>
    %c0_64 = arith.constant 0 : index
    %c0_65 = arith.constant 0 : index
    %199 = vector.load %arg14[%c0_64, %c0_65] : memref<8x32xf32, #tpu.memory_space<vmem>>, vector<8x32xf32>
    tpu.vector_store %arg14[%c0_64, %c0_65], %198 {strides = array<i32>} : memref<8x32xf32, #tpu.memory_space<vmem>>, vector<8x32xf32>,
    return
  }
  func.func @transform_0(%arg0: i32) -> (i32, i32) {
    %c0_i32 = arith.constant 0 : i32
    %c0_i32_0 = arith.constant 0 : i32
    return %arg0, %c0_i32 : i32, i32
  }
  func.func @transform_1(%arg0: i32) -> (i32, i32) {
    %c0_i32 = arith.constant 0 : i32
    %c0_i32_0 = arith.constant 0 : i32
    %c0_i32_1 = arith.constant 0 : i32
    return %c0_i32, %c0_i32_0 : i32, i32
  }
  func.func @transform_2(%arg0: i32) -> (i32, i32) {
    %c0_i32 = arith.constant 0 : i32
    %c0_i32_0 = arith.constant 0 : i32
    %c0_i32_1 = arith.constant 0 : i32
    return %c0_i32, %c0_i32_0 : i32, i32
  }
  func.func @transform_3(%arg0: i32) -> (i32, i32) {
    %c0_i32 = arith.constant 0 : i32
    %c0_i32_0 = arith.constant 0 : i32
    %c0_i32_1 = arith.constant 0 : i32
    return %c0_i32, %c0_i32_0 : i32, i32
  }
  func.func @transform_4(%arg0: i32) -> (i32, i32) {
    %c0_i32 = arith.constant 0 : i32
    %c0_i32_0 = arith.constant 0 : i32
    %c0_i32_1 = arith.constant 0 : i32
    return %c0_i32, %c0_i32_0 : i32, i32
  }
  func.func @transform_5(%arg0: i32) -> (i32, i32) {
    %c0_i32 = arith.constant 0 : i32
    %c0_i32_0 = arith.constant 0 : i32
    %c0_i32_1 = arith.constant 0 : i32
    return %c0_i32, %c0_i32_0 : i32, i32
  }
  func.func @transform_6(%arg0: i32) -> (i32, i32) {
    %c0_i32 = arith.constant 0 : i32
    %c0_i32_0 = arith.constant 0 : i32
    %c0_i32_1 = arith.constant 0 : i32
    return %c0_i32, %c0_i32_0 : i32, i32
  }
  func.func @transform_7(%arg0: i32) -> (i32, i32) {
    %c0_i32 = arith.constant 0 : i32
    %c0_i32_0 = arith.constant 0 : i32
    %c0_i32_1 = arith.constant 0 : i32
    return %c0_i32, %c0_i32_0 : i32, i32
  }
  func.func @transform_8(%arg0: i32) -> (i32, i32) {
    %c0_i32 = arith.constant 0 : i32
    %c0_i32_0 = arith.constant 0 : i32
    %c0_i32_1 = arith.constant 0 : i32
    return %c0_i32, %c0_i32_0 : i32, i32
  }
  func.func @transform_9(%arg0: i32) -> (i32, i32) {
    %c0_i32 = arith.constant 0 : i32
    %c0_i32_0 = arith.constant 0 : i32
    %c0_i32_1 = arith.constant 0 : i32
    return %c0_i32, %c0_i32_0 : i32, i32
  }
  func.func @transform_10(%arg0: i32) -> (i32, i32) {
    %c0_i32 = arith.constant 0 : i32
    %c0_i32_0 = arith.constant 0 : i32
    %c0_i32_1 = arith.constant 0 : i32
    return %c0_i32, %c0_i32_0 : i32, i32
  }
  func.func @transform_11(%arg0: i32) -> (i32, i32) {
    %c0_i32 = arith.constant 0 : i32
    %c0_i32_0 = arith.constant 0 : i32
    %c0_i32_1 = arith.constant 0 : i32
    return %c0_i32, %c0_i32_0 : i32, i32
  }
  func.func @transform_12(%arg0: i32) -> (i32, i32) {
    %c0_i32 = arith.constant 0 : i32
    %c0_i32_0 = arith.constant 0 : i32
    %c0_i32_1 = arith.constant 0 : i32
    return %c0_i32, %c0_i32_0 : i32, i32
  }
  func.func @transform_13(%arg0: i32) -> (i32, i32) {
    %c0_i32 = arith.constant 0 : i32
    %c0_i32_0 = arith.constant 0 : i32
    return %arg0, %c0_i32 : i32, i32
  }
}

module attributes {stable_mosaic.version = 11 : i64} {
  func.func @_block_kernel(%arg0: i32, %arg1: memref<8x32xf32, #tpu.memory_space<vmem>>, %arg2: memref<1x32xf32, #tpu.memory_space<vmem>>, %arg3: memref<1x32xf32, #tpu.memory_space<vmem>>, %arg4: memref<32x96xbf16, #tpu.memory_space<vmem>>, %arg5: memref<1x96xf32, #tpu.memory_space<vmem>>, %arg6: memref<32x32xbf16, #tpu.memory_space<vmem>>, %arg7: memref<1x32xf32, #tpu.memory_space<vmem>>, %arg8: memref<1x32xf32, #tpu.memory_space<vmem>>, %arg9: memref<1x32xf32, #tpu.memory_space<vmem>>, %arg10: memref<32x128xbf16, #tpu.memory_space<vmem>>, %arg11: memref<1x128xf32, #tpu.memory_space<vmem>>, %arg12: memref<128x32xbf16, #tpu.memory_space<vmem>>, %arg13: memref<1x32xf32, #tpu.memory_space<vmem>>, %arg14: memref<8x32xf32, #tpu.memory_space<vmem>>) attributes {dimension_semantics = [#tpu.dimension_semantics<parallel>], iteration_bounds = array<i64: 2>, scalar_prefetch = 0 : i64, scratch_operands = 0 : i64, tpu.core_type = #tpu.core_type<tc>, window_params = [{transform_indices = @transform_0, window_bounds = array<i64: 8, 32>}, {pipeline_mode = #tpu.pipeline_mode<synchronous>, transform_indices = @transform_1, window_bounds = array<i64: 1, 32>}, {pipeline_mode = #tpu.pipeline_mode<synchronous>, transform_indices = @transform_2, window_bounds = array<i64: 1, 32>}, {pipeline_mode = #tpu.pipeline_mode<synchronous>, transform_indices = @transform_3, window_bounds = array<i64: 32, 96>}, {pipeline_mode = #tpu.pipeline_mode<synchronous>, transform_indices = @transform_4, window_bounds = array<i64: 1, 96>}, {pipeline_mode = #tpu.pipeline_mode<synchronous>, transform_indices = @transform_5, window_bounds = array<i64: 32, 32>}, {pipeline_mode = #tpu.pipeline_mode<synchronous>, transform_indices = @transform_6, window_bounds = array<i64: 1, 32>}, {pipeline_mode = #tpu.pipeline_mode<synchronous>, transform_indices = @transform_7, window_bounds = array<i64: 1, 32>}, {pipeline_mode = #tpu.pipeline_mode<synchronous>, transform_indices = @transform_8, window_bounds = array<i64: 1, 32>}, {pipeline_mode = #tpu.pipeline_mode<synchronous>, transform_indices = @transform_9, window_bounds = array<i64: 32, 128>}, {pipeline_mode = #tpu.pipeline_mode<synchronous>, transform_indices = @transform_10, window_bounds = array<i64: 1, 128>}, {pipeline_mode = #tpu.pipeline_mode<synchronous>, transform_indices = @transform_11, window_bounds = array<i64: 128, 32>}, {pipeline_mode = #tpu.pipeline_mode<synchronous>, transform_indices = @transform_12, window_bounds = array<i64: 1, 32>}, {transform_indices = @transform_13, window_bounds = array<i64: 8, 32>}]} {
    %c0 = arith.constant 0 : index
    %c0_0 = arith.constant 0 : index
    %0 = vector.load %arg1[%c0, %c0_0] : memref<8x32xf32, #tpu.memory_space<vmem>>, vector<8x32xf32>
    %c0_1 = arith.constant 0 : index
    %c0_2 = arith.constant 0 : index
    %1 = vector.load %arg2[%c0_1, %c0_2] : memref<1x32xf32, #tpu.memory_space<vmem>>, vector<1x32xf32>
    %2 = vector.shape_cast %1 : vector<1x32xf32> to vector<32xf32>
    %c0_3 = arith.constant 0 : index
    %c0_4 = arith.constant 0 : index
    %3 = vector.load %arg3[%c0_3, %c0_4] : memref<1x32xf32, #tpu.memory_space<vmem>>, vector<1x32xf32>
    %4 = vector.shape_cast %3 : vector<1x32xf32> to vector<32xf32>
    %cst = arith.constant dense<0.000000e+00> : vector<8xf32>
    %5 = vector.multi_reduction <add>, %0, %cst [1] : vector<8x32xf32> to vector<8xf32>
    %6 = vector.shape_cast %5 : vector<8xf32> to vector<8x1xf32>
    %cst_5 = arith.constant 3.200000e+01 : f32
    %7 = vector.broadcast %cst_5 : f32 to vector<8x1xf32>
    %8 = arith.divf %6, %7 : vector<8x1xf32>
    %9 = vector.broadcast %8 : vector<8x1xf32> to vector<8x32xf32>
    %10 = arith.subf %0, %9 : vector<8x32xf32>
    %11 = arith.mulf %10, %10 : vector<8x32xf32>
    %cst_6 = arith.constant dense<0.000000e+00> : vector<8xf32>
    %12 = vector.multi_reduction <add>, %11, %cst_6 [1] : vector<8x32xf32> to vector<8xf32>
    %13 = vector.shape_cast %12 : vector<8xf32> to vector<8x1xf32>
    %cst_7 = arith.constant 3.200000e+01 : f32
    %14 = vector.broadcast %cst_7 : f32 to vector<8x1xf32>
    %15 = arith.divf %13, %14 : vector<8x1xf32>
    %16 = vector.broadcast %8 : vector<8x1xf32> to vector<8x32xf32>
    %17 = arith.subf %0, %16 : vector<8x32xf32>
    %cst_8 = arith.constant 9.99999974E-6 : f32
    %18 = vector.broadcast %cst_8 : f32 to vector<8x1xf32>
    %19 = arith.addf %15, %18 : vector<8x1xf32>
    %20 = math.rsqrt %19 : vector<8x1xf32>
    %21 = vector.broadcast %20 : vector<8x1xf32> to vector<8x32xf32>
    %22 = arith.mulf %17, %21 : vector<8x32xf32>
    %23 = vector.shape_cast %2 : vector<32xf32> to vector<1x32xf32>
    %24 = vector.broadcast %23 : vector<1x32xf32> to vector<8x32xf32>
    %25 = arith.mulf %22, %24 : vector<8x32xf32>
    %26 = vector.shape_cast %4 : vector<32xf32> to vector<1x32xf32>
    %27 = vector.broadcast %26 : vector<1x32xf32> to vector<8x32xf32>
    %28 = arith.addf %25, %27 : vector<8x32xf32>
    %29 = arith.truncf %28 : vector<8x32xf32> to vector<8x32xbf16>
    %c0_9 = arith.constant 0 : index
    %c0_10 = arith.constant 0 : index
    %30 = vector.load %arg4[%c0_9, %c0_10] : memref<32x96xbf16, #tpu.memory_space<vmem>>, vector<32x96xbf16>
    %cst_11 = arith.constant dense<0.000000e+00> : vector<8x96xf32>
    %31 = tpu.matmul %29, %30, %cst_11 {dimension_numbers = #tpu.dot_dimension_numbers<[1], [0], [0], [1], [0, 0, 1, 1], [], []>} : vector<8x32xbf16>, vector<32x96xbf16>, vector<8x96xf32> -> vector<8x96xf32>
    %c0_12 = arith.constant 0 : index
    %c0_13 = arith.constant 0 : index
    %32 = vector.load %arg5[%c0_12, %c0_13] : memref<1x96xf32, #tpu.memory_space<vmem>>, vector<1x96xf32>
    %33 = vector.shape_cast %32 : vector<1x96xf32> to vector<96xf32>
    %34 = vector.shape_cast %33 : vector<96xf32> to vector<1x96xf32>
    %35 = vector.broadcast %34 : vector<1x96xf32> to vector<8x96xf32>
    %36 = arith.addf %31, %35 : vector<8x96xf32>
    %37 = vector.extract_strided_slice %36 {offsets = [0, 0], sizes = [8, 32], strides = [1, 1]} : vector<8x96xf32> to vector<8x32xf32>
    %38 = vector.shape_cast %37 : vector<8x32xf32> to vector<1x8x32xf32>
    %39 = vector.extract_strided_slice %36 {offsets = [0, 32], sizes = [8, 32], strides = [1, 1]} : vector<8x96xf32> to vector<8x32xf32>
    %40 = vector.shape_cast %39 : vector<8x32xf32> to vector<1x8x32xf32>
    %41 = vector.extract_strided_slice %36 {offsets = [0, 64], sizes = [8, 32], strides = [1, 1]} : vector<8x96xf32> to vector<8x32xf32>
    %42 = vector.shape_cast %41 : vector<8x32xf32> to vector<1x8x32xf32>
    %43 = tpu.iota {dimensions = array<i32: 0>} : vector<8x8xi32>
    %44 = tpu.iota {dimensions = array<i32: 1>} : vector<8x8xi32>
    %45 = arith.cmpi sge, %43, %44 : vector<8x8xi32>
    %46 = vector.shape_cast %45 : vector<8x8xi1> to vector<1x8x8xi1>
    %47 = vector.extract_strided_slice %38 {offsets = [0, 0, 0], sizes = [1, 8, 8], strides = [1, 1, 1]} : vector<1x8x32xf32> to vector<1x8x8xf32>
    %cst_14 = arith.constant 0.353553385 : f32
    %48 = vector.broadcast %cst_14 : f32 to vector<1x8x8xf32>
    %49 = arith.mulf %47, %48 : vector<1x8x8xf32>
    %50 = arith.truncf %49 : vector<1x8x8xf32> to vector<1x8x8xbf16>
    %51 = vector.extract_strided_slice %40 {offsets = [0, 0, 0], sizes = [1, 8, 8], strides = [1, 1, 1]} : vector<1x8x32xf32> to vector<1x8x8xf32>
    %52 = arith.truncf %51 : vector<1x8x8xf32> to vector<1x8x8xbf16>
    %53 = vector.extract_strided_slice %42 {offsets = [0, 0, 0], sizes = [1, 8, 8], strides = [1, 1, 1]} : vector<1x8x32xf32> to vector<1x8x8xf32>
    %54 = arith.truncf %53 : vector<1x8x8xf32> to vector<1x8x8xbf16>
    "tpu.trace_start"() <{level = 10 : i32, message = "bqd,bkd->bqk"}> : () -> ()
    %cst_15 = arith.constant dense<0.000000e+00> : vector<1x8x8xf32>
    %55 = tpu.matmul %50, %52, %cst_15 {dimension_numbers = #tpu.dot_dimension_numbers<[2], [2], [1], [1], [0, 0, 0, 1, 1, 1], [0], [0]>} : vector<1x8x8xbf16>, vector<1x8x8xbf16>, vector<1x8x8xf32> -> vector<1x8x8xf32>
    %cst_16 = arith.constant -1.000000e+30 : f32
    "tpu.trace_stop"() : () -> ()
    %56 = vector.broadcast %cst_16 : f32 to vector<1x8x8xf32>
    %57 = arith.select %46, %55, %56 : vector<1x8x8xi1>, vector<1x8x8xf32>
    %cst_17 = arith.constant dense<0xFF800000> : vector<1x8xf32>
    %58 = vector.multi_reduction <maximumf>, %57, %cst_17 [2] : vector<1x8x8xf32> to vector<1x8xf32>
    %59 = vector.shape_cast %58 : vector<1x8xf32> to vector<1x8x1xf32>
    %60 = vector.broadcast %59 : vector<1x8x1xf32> to vector<1x8x8xf32>
    %61 = arith.subf %57, %60 : vector<1x8x8xf32>
    %62 = math.exp %61 : vector<1x8x8xf32>
    %cst_18 = arith.constant dense<0.000000e+00> : vector<1x8xf32>
    %63 = vector.multi_reduction <add>, %62, %cst_18 [2] : vector<1x8x8xf32> to vector<1x8xf32>
    %64 = vector.shape_cast %63 : vector<1x8xf32> to vector<1x8x1xf32>
    %65 = tpu.reciprocal %64 {approx = true} : vector<1x8x1xf32> -> vector<1x8x1xf32>
    %66 = vector.broadcast %65 : vector<1x8x1xf32> to vector<1x8x8xf32>
    %67 = arith.mulf %62, %66 : vector<1x8x8xf32>
    %68 = arith.truncf %67 : vector<1x8x8xf32> to vector<1x8x8xbf16>
    "tpu.trace_start"() <{level = 10 : i32, message = "bqk,bkd->bqd"}> : () -> ()
    %cst_19 = arith.constant dense<0.000000e+00> : vector<1x8x8xf32>
    %69 = tpu.matmul %68, %54, %cst_19 {dimension_numbers = #tpu.dot_dimension_numbers<[2], [1], [1], [2], [0, 0, 0, 1, 1, 2], [0], [0]>} : vector<1x8x8xbf16>, vector<1x8x8xbf16>, vector<1x8x8xf32> -> vector<1x8x8xf32>
    "tpu.trace_stop"() : () -> ()
    %70 = vector.extract_strided_slice %38 {offsets = [0, 0, 8], sizes = [1, 8, 8], strides = [1, 1, 1]} : vector<1x8x32xf32> to vector<1x8x8xf32>
    %cst_20 = arith.constant 0.353553385 : f32
    %71 = vector.broadcast %cst_20 : f32 to vector<1x8x8xf32>
    %72 = arith.mulf %70, %71 : vector<1x8x8xf32>
    %73 = arith.truncf %72 : vector<1x8x8xf32> to vector<1x8x8xbf16>
    %74 = vector.extract_strided_slice %40 {offsets = [0, 0, 8], sizes = [1, 8, 8], strides = [1, 1, 1]} : vector<1x8x32xf32> to vector<1x8x8xf32>
    %75 = arith.truncf %74 : vector<1x8x8xf32> to vector<1x8x8xbf16>
    %76 = vector.extract_strided_slice %42 {offsets = [0, 0, 8], sizes = [1, 8, 8], strides = [1, 1, 1]} : vector<1x8x32xf32> to vector<1x8x8xf32>
    %77 = arith.truncf %76 : vector<1x8x8xf32> to vector<1x8x8xbf16>
    "tpu.trace_start"() <{level = 10 : i32, message = "bqd,bkd->bqk"}> : () -> ()
    %cst_21 = arith.constant dense<0.000000e+00> : vector<1x8x8xf32>
    %78 = tpu.matmul %73, %75, %cst_21 {dimension_numbers = #tpu.dot_dimension_numbers<[2], [2], [1], [1], [0, 0, 0, 1, 1, 1], [0], [0]>} : vector<1x8x8xbf16>, vector<1x8x8xbf16>, vector<1x8x8xf32> -> vector<1x8x8xf32>
    %cst_22 = arith.constant -1.000000e+30 : f32
    "tpu.trace_stop"() : () -> ()
    %79 = vector.broadcast %cst_22 : f32 to vector<1x8x8xf32>
    %80 = arith.select %46, %78, %79 : vector<1x8x8xi1>, vector<1x8x8xf32>
    %cst_23 = arith.constant dense<0xFF800000> : vector<1x8xf32>
    %81 = vector.multi_reduction <maximumf>, %80, %cst_23 [2] : vector<1x8x8xf32> to vector<1x8xf32>
    %82 = vector.shape_cast %81 : vector<1x8xf32> to vector<1x8x1xf32>
    %83 = vector.broadcast %82 : vector<1x8x1xf32> to vector<1x8x8xf32>
    %84 = arith.subf %80, %83 : vector<1x8x8xf32>
    %85 = math.exp %84 : vector<1x8x8xf32>
    %cst_24 = arith.constant dense<0.000000e+00> : vector<1x8xf32>
    %86 = vector.multi_reduction <add>, %85, %cst_24 [2] : vector<1x8x8xf32> to vector<1x8xf32>
    %87 = vector.shape_cast %86 : vector<1x8xf32> to vector<1x8x1xf32>
    %88 = tpu.reciprocal %87 {approx = true} : vector<1x8x1xf32> -> vector<1x8x1xf32>
    %89 = vector.broadcast %88 : vector<1x8x1xf32> to vector<1x8x8xf32>
    %90 = arith.mulf %85, %89 : vector<1x8x8xf32>
    %91 = arith.truncf %90 : vector<1x8x8xf32> to vector<1x8x8xbf16>
    "tpu.trace_start"() <{level = 10 : i32, message = "bqk,bkd->bqd"}> : () -> ()
    %cst_25 = arith.constant dense<0.000000e+00> : vector<1x8x8xf32>
    %92 = tpu.matmul %91, %77, %cst_25 {dimension_numbers = #tpu.dot_dimension_numbers<[2], [1], [1], [2], [0, 0, 0, 1, 1, 2], [0], [0]>} : vector<1x8x8xbf16>, vector<1x8x8xbf16>, vector<1x8x8xf32> -> vector<1x8x8xf32>
    "tpu.trace_stop"() : () -> ()
    %93 = vector.extract_strided_slice %38 {offsets = [0, 0, 16], sizes = [1, 8, 8], strides = [1, 1, 1]} : vector<1x8x32xf32> to vector<1x8x8xf32>
    %cst_26 = arith.constant 0.353553385 : f32
    %94 = vector.broadcast %cst_26 : f32 to vector<1x8x8xf32>
    %95 = arith.mulf %93, %94 : vector<1x8x8xf32>
    %96 = arith.truncf %95 : vector<1x8x8xf32> to vector<1x8x8xbf16>
    %97 = vector.extract_strided_slice %40 {offsets = [0, 0, 16], sizes = [1, 8, 8], strides = [1, 1, 1]} : vector<1x8x32xf32> to vector<1x8x8xf32>
    %98 = arith.truncf %97 : vector<1x8x8xf32> to vector<1x8x8xbf16>
    %99 = vector.extract_strided_slice %42 {offsets = [0, 0, 16], sizes = [1, 8, 8], strides = [1, 1, 1]} : vector<1x8x32xf32> to vector<1x8x8xf32>
    %100 = arith.truncf %99 : vector<1x8x8xf32> to vector<1x8x8xbf16>
    "tpu.trace_start"() <{level = 10 : i32, message = "bqd,bkd->bqk"}> : () -> ()
    %cst_27 = arith.constant dense<0.000000e+00> : vector<1x8x8xf32>
    %101 = tpu.matmul %96, %98, %cst_27 {dimension_numbers = #tpu.dot_dimension_numbers<[2], [2], [1], [1], [0, 0, 0, 1, 1, 1], [0], [0]>} : vector<1x8x8xbf16>, vector<1x8x8xbf16>, vector<1x8x8xf32> -> vector<1x8x8xf32>
    %cst_28 = arith.constant -1.000000e+30 : f32
    "tpu.trace_stop"() : () -> ()
    %102 = vector.broadcast %cst_28 : f32 to vector<1x8x8xf32>
    %103 = arith.select %46, %101, %102 : vector<1x8x8xi1>, vector<1x8x8xf32>
    %cst_29 = arith.constant dense<0xFF800000> : vector<1x8xf32>
    %104 = vector.multi_reduction <maximumf>, %103, %cst_29 [2] : vector<1x8x8xf32> to vector<1x8xf32>
    %105 = vector.shape_cast %104 : vector<1x8xf32> to vector<1x8x1xf32>
    %106 = vector.broadcast %105 : vector<1x8x1xf32> to vector<1x8x8xf32>
    %107 = arith.subf %103, %106 : vector<1x8x8xf32>
    %108 = math.exp %107 : vector<1x8x8xf32>
    %cst_30 = arith.constant dense<0.000000e+00> : vector<1x8xf32>
    %109 = vector.multi_reduction <add>, %108, %cst_30 [2] : vector<1x8x8xf32> to vector<1x8xf32>
    %110 = vector.shape_cast %109 : vector<1x8xf32> to vector<1x8x1xf32>
    %111 = tpu.reciprocal %110 {approx = true} : vector<1x8x1xf32> -> vector<1x8x1xf32>
    %112 = vector.broadcast %111 : vector<1x8x1xf32> to vector<1x8x8xf32>
    %113 = arith.mulf %108, %112 : vector<1x8x8xf32>
    %114 = arith.truncf %113 : vector<1x8x8xf32> to vector<1x8x8xbf16>
    "tpu.trace_start"() <{level = 10 : i32, message = "bqk,bkd->bqd"}> : () -> ()
    %cst_31 = arith.constant dense<0.000000e+00> : vector<1x8x8xf32>
    %115 = tpu.matmul %114, %100, %cst_31 {dimension_numbers = #tpu.dot_dimension_numbers<[2], [1], [1], [2], [0, 0, 0, 1, 1, 2], [0], [0]>} : vector<1x8x8xbf16>, vector<1x8x8xbf16>, vector<1x8x8xf32> -> vector<1x8x8xf32>
    "tpu.trace_stop"() : () -> ()
    %116 = vector.extract_strided_slice %38 {offsets = [0, 0, 24], sizes = [1, 8, 8], strides = [1, 1, 1]} : vector<1x8x32xf32> to vector<1x8x8xf32>
    %cst_32 = arith.constant 0.353553385 : f32
    %117 = vector.broadcast %cst_32 : f32 to vector<1x8x8xf32>
    %118 = arith.mulf %116, %117 : vector<1x8x8xf32>
    %119 = arith.truncf %118 : vector<1x8x8xf32> to vector<1x8x8xbf16>
    %120 = vector.extract_strided_slice %40 {offsets = [0, 0, 24], sizes = [1, 8, 8], strides = [1, 1, 1]} : vector<1x8x32xf32> to vector<1x8x8xf32>
    %121 = arith.truncf %120 : vector<1x8x8xf32> to vector<1x8x8xbf16>
    %122 = vector.extract_strided_slice %42 {offsets = [0, 0, 24], sizes = [1, 8, 8], strides = [1, 1, 1]} : vector<1x8x32xf32> to vector<1x8x8xf32>
    %123 = arith.truncf %122 : vector<1x8x8xf32> to vector<1x8x8xbf16>
    "tpu.trace_start"() <{level = 10 : i32, message = "bqd,bkd->bqk"}> : () -> ()
    %cst_33 = arith.constant dense<0.000000e+00> : vector<1x8x8xf32>
    %124 = tpu.matmul %119, %121, %cst_33 {dimension_numbers = #tpu.dot_dimension_numbers<[2], [2], [1], [1], [0, 0, 0, 1, 1, 1], [0], [0]>} : vector<1x8x8xbf16>, vector<1x8x8xbf16>, vector<1x8x8xf32> -> vector<1x8x8xf32>
    %cst_34 = arith.constant -1.000000e+30 : f32
    "tpu.trace_stop"() : () -> ()
    %125 = vector.broadcast %cst_34 : f32 to vector<1x8x8xf32>
    %126 = arith.select %46, %124, %125 : vector<1x8x8xi1>, vector<1x8x8xf32>
    %cst_35 = arith.constant dense<0xFF800000> : vector<1x8xf32>
    %127 = vector.multi_reduction <maximumf>, %126, %cst_35 [2] : vector<1x8x8xf32> to vector<1x8xf32>
    %128 = vector.shape_cast %127 : vector<1x8xf32> to vector<1x8x1xf32>
    %129 = vector.broadcast %128 : vector<1x8x1xf32> to vector<1x8x8xf32>
    %130 = arith.subf %126, %129 : vector<1x8x8xf32>
    %131 = math.exp %130 : vector<1x8x8xf32>
    %cst_36 = arith.constant dense<0.000000e+00> : vector<1x8xf32>
    %132 = vector.multi_reduction <add>, %131, %cst_36 [2] : vector<1x8x8xf32> to vector<1x8xf32>
    %133 = vector.shape_cast %132 : vector<1x8xf32> to vector<1x8x1xf32>
    %134 = tpu.reciprocal %133 {approx = true} : vector<1x8x1xf32> -> vector<1x8x1xf32>
    %135 = vector.broadcast %134 : vector<1x8x1xf32> to vector<1x8x8xf32>
    %136 = arith.mulf %131, %135 : vector<1x8x8xf32>
    %137 = arith.truncf %136 : vector<1x8x8xf32> to vector<1x8x8xbf16>
    "tpu.trace_start"() <{level = 10 : i32, message = "bqk,bkd->bqd"}> : () -> ()
    %cst_37 = arith.constant dense<0.000000e+00> : vector<1x8x8xf32>
    %138 = tpu.matmul %137, %123, %cst_37 {dimension_numbers = #tpu.dot_dimension_numbers<[2], [1], [1], [2], [0, 0, 0, 1, 1, 2], [0], [0]>} : vector<1x8x8xbf16>, vector<1x8x8xbf16>, vector<1x8x8xf32> -> vector<1x8x8xf32>
    "tpu.trace_stop"() : () -> ()
    %139 = tpu.concatenate %69, %92, %115, %138 in 2 : vector<1x8x8xf32>, vector<1x8x8xf32>, vector<1x8x8xf32>, vector<1x8x8xf32> -> vector<1x8x32xf32>
    %140 = vector.shape_cast %139 : vector<1x8x32xf32> to vector<8x32xf32>
    %141 = arith.truncf %140 : vector<8x32xf32> to vector<8x32xbf16>
    %c0_38 = arith.constant 0 : index
    %c0_39 = arith.constant 0 : index
    %142 = vector.load %arg6[%c0_38, %c0_39] : memref<32x32xbf16, #tpu.memory_space<vmem>>, vector<32x32xbf16>
    %cst_40 = arith.constant dense<0.000000e+00> : vector<8x32xf32>
    %143 = tpu.matmul %141, %142, %cst_40 {dimension_numbers = #tpu.dot_dimension_numbers<[1], [0], [0], [1], [0, 0, 1, 1], [], []>} : vector<8x32xbf16>, vector<32x32xbf16>, vector<8x32xf32> -> vector<8x32xf32>
    %144 = arith.addf %0, %143 : vector<8x32xf32>
    %c0_41 = arith.constant 0 : index
    %c0_42 = arith.constant 0 : index
    %145 = vector.load %arg7[%c0_41, %c0_42] : memref<1x32xf32, #tpu.memory_space<vmem>>, vector<1x32xf32>
    %146 = vector.shape_cast %145 : vector<1x32xf32> to vector<32xf32>
    %147 = vector.shape_cast %146 : vector<32xf32> to vector<1x32xf32>
    %148 = vector.broadcast %147 : vector<1x32xf32> to vector<8x32xf32>
    %149 = arith.addf %144, %148 : vector<8x32xf32>
    %c0_43 = arith.constant 0 : index
    %c0_44 = arith.constant 0 : index
    %150 = vector.load %arg8[%c0_43, %c0_44] : memref<1x32xf32, #tpu.memory_space<vmem>>, vector<1x32xf32>
    %151 = vector.shape_cast %150 : vector<1x32xf32> to vector<32xf32>
    %c0_45 = arith.constant 0 : index
    %c0_46 = arith.constant 0 : index
    %152 = vector.load %arg9[%c0_45, %c0_46] : memref<1x32xf32, #tpu.memory_space<vmem>>, vector<1x32xf32>
    %153 = vector.shape_cast %152 : vector<1x32xf32> to vector<32xf32>
    %cst_47 = arith.constant dense<0.000000e+00> : vector<8xf32>
    %154 = vector.multi_reduction <add>, %149, %cst_47 [1] : vector<8x32xf32> to vector<8xf32>
    %155 = vector.shape_cast %154 : vector<8xf32> to vector<8x1xf32>
    %cst_48 = arith.constant 3.200000e+01 : f32
    %156 = vector.broadcast %cst_48 : f32 to vector<8x1xf32>
    %157 = arith.divf %155, %156 : vector<8x1xf32>
    %158 = vector.broadcast %157 : vector<8x1xf32> to vector<8x32xf32>
    %159 = arith.subf %149, %158 : vector<8x32xf32>
    %160 = arith.mulf %159, %159 : vector<8x32xf32>
    %cst_49 = arith.constant dense<0.000000e+00> : vector<8xf32>
    %161 = vector.multi_reduction <add>, %160, %cst_49 [1] : vector<8x32xf32> to vector<8xf32>
    %162 = vector.shape_cast %161 : vector<8xf32> to vector<8x1xf32>
    %cst_50 = arith.constant 3.200000e+01 : f32
    %163 = vector.broadcast %cst_50 : f32 to vector<8x1xf32>
    %164 = arith.divf %162, %163 : vector<8x1xf32>
    %165 = vector.broadcast %157 : vector<8x1xf32> to vector<8x32xf32>
    %166 = arith.subf %149, %165 : vector<8x32xf32>
    %cst_51 = arith.constant 9.99999974E-6 : f32
    %167 = vector.broadcast %cst_51 : f32 to vector<8x1xf32>
    %168 = arith.addf %164, %167 : vector<8x1xf32>
    %169 = math.rsqrt %168 : vector<8x1xf32>
    %170 = vector.broadcast %169 : vector<8x1xf32> to vector<8x32xf32>
    %171 = arith.mulf %166, %170 : vector<8x32xf32>
    %172 = vector.shape_cast %151 : vector<32xf32> to vector<1x32xf32>
    %173 = vector.broadcast %172 : vector<1x32xf32> to vector<8x32xf32>
    %174 = arith.mulf %171, %173 : vector<8x32xf32>
    %175 = vector.shape_cast %153 : vector<32xf32> to vector<1x32xf32>
    %176 = vector.broadcast %175 : vector<1x32xf32> to vector<8x32xf32>
    %177 = arith.addf %174, %176 : vector<8x32xf32>
    %178 = arith.truncf %177 : vector<8x32xf32> to vector<8x32xbf16>
    %c0_52 = arith.constant 0 : index
    %c0_53 = arith.constant 0 : index
    %179 = vector.load %arg11[%c0_52, %c0_53] : memref<1x128xf32, #tpu.memory_space<vmem>>, vector<1x128xf32>
    %180 = vector.shape_cast %179 : vector<1x128xf32> to vector<128xf32>
    %cst_54 = arith.constant 0.000000e+00 : f32
    %181 = vector.broadcast %cst_54 : f32 to vector<8x32xf32>
    %c0_55 = arith.constant 0 : index
    %c0_56 = arith.constant 0 : index
    %182 = vector.load %arg10[%c0_55, %c0_56] : memref<32x128xbf16, #tpu.memory_space<vmem>>, vector<32x128xbf16>
    %cst_57 = arith.constant dense<0.000000e+00> : vector<8x128xf32>
    %183 = tpu.matmul %178, %182, %cst_57 {dimension_numbers = #tpu.dot_dimension_numbers<[1], [0], [0], [1], [0, 0, 1, 1], [], []>} : vector<8x32xbf16>, vector<32x128xbf16>, vector<8x128xf32> -> vector<8x128xf32>
    %184 = vector.shape_cast %180 : vector<128xf32> to vector<1x128xf32>
    %185 = vector.broadcast %184 : vector<1x128xf32> to vector<8x128xf32>
    %186 = arith.addf %183, %185 : vector<8x128xf32>
    %cst_58 = arith.constant 0.000000e+00 : f32
    %187 = vector.broadcast %cst_58 : f32 to vector<8x128xf32>
    %188 = arith.maximumf %186, %187 : vector<8x128xf32>
    %189 = arith.truncf %188 : vector<8x128xf32> to vector<8x128xbf16>
    %c0_59 = arith.constant 0 : index
    %c0_60 = arith.constant 0 : index
    %190 = vector.load %arg12[%c0_59, %c0_60] : memref<128x32xbf16, #tpu.memory_space<vmem>>, vector<128x32xbf16>
    %cst_61 = arith.constant dense<0.000000e+00> : vector<8x32xf32>
    %191 = tpu.matmul %189, %190, %cst_61 {dimension_numbers = #tpu.dot_dimension_numbers<[1], [0], [0], [1], [0, 0, 1, 1], [], []>} : vector<8x128xbf16>, vector<128x32xbf16>, vector<8x32xf32> -> vector<8x32xf32>
    %192 = arith.addf %181, %191 : vector<8x32xf32>
    %193 = arith.addf %149, %192 : vector<8x32xf32>
    %c0_62 = arith.constant 0 : index
    %c0_63 = arith.constant 0 : index
    %194 = vector.load %arg13[%c0_62, %c0_63] : memref<1x32xf32, #tpu.memory_space<vmem>>, vector<1x32xf32>
    %195 = vector.shape_cast %194 : vector<1x32xf32> to vector<32xf32>
    %196 = vector.shape_cast %195 : vector<32xf32> to vector<1x32xf32>
    %197 = vector.broadcast %196 : vector<1x32xf32> to vector<8x32xf32>
    %198 = arith.addf %193, %197 : vector<8x32xf32>
    %c0_64 = arith.constant 0 : index
    %c0_65 = arith.constant 0 : index
    %199 = vector.load %arg14[%c0_64, %c0_65] : memref<8x32xf32, #tpu.memory_space<vmem>>, vector<8x32xf32>
    tpu.vector_store %arg14[%c0_64, %c0_65], %198 {strides = array<i32>} : memref<8x32xf32, #tpu.memory_space<vmem>>, vector<8x32xf32>,
    return
  }
  func.func @transform_0(%arg0: i32) -> (i32, i32) {
    %c0_i32 = arith.constant 0 : i32
    %c0_i32_0 = arith.constant 0 : i32
    return %arg0, %c0_i32 : i32, i32
  }
  func.func @transform_1(%arg0: i32) -> (i32, i32) {
    %c0_i32 = arith.constant 0 : i32
    %c0_i32_0 = arith.constant 0 : i32
    %c0_i32_1 = arith.constant 0 : i32
    return %c0_i32, %c0_i32_0 : i32, i32
  }
  func.func @transform_2(%arg0: i32) -> (i32, i32) {
    %c0_i32 = arith.constant 0 : i32
    %c0_i32_0 = arith.constant 0 : i32
    %c0_i32_1 = arith.constant 0 : i32
    return %c0_i32, %c0_i32_0 : i32, i32
  }
  func.func @transform_3(%arg0: i32) -> (i32, i32) {
    %c0_i32 = arith.constant 0 : i32
    %c0_i32_0 = arith.constant 0 : i32
    %c0_i32_1 = arith.constant 0 : i32
    return %c0_i32, %c0_i32_0 : i32, i32
  }
  func.func @transform_4(%arg0: i32) -> (i32, i32) {
    %c0_i32 = arith.constant 0 : i32
    %c0_i32_0 = arith.constant 0 : i32
    %c0_i32_1 = arith.constant 0 : i32
    return %c0_i32, %c0_i32_0 : i32, i32
  }
  func.func @transform_5(%arg0: i32) -> (i32, i32) {
    %c0_i32 = arith.constant 0 : i32
    %c0_i32_0 = arith.constant 0 : i32
    %c0_i32_1 = arith.constant 0 : i32
    return %c0_i32, %c0_i32_0 : i32, i32
  }
  func.func @transform_6(%arg0: i32) -> (i32, i32) {
    %c0_i32 = arith.constant 0 : i32
    %c0_i32_0 = arith.constant 0 : i32
    %c0_i32_1 = arith.constant 0 : i32
    return %c0_i32, %c0_i32_0 : i32, i32
  }
  func.func @transform_7(%arg0: i32) -> (i32, i32) {
    %c0_i32 = arith.constant 0 : i32
    %c0_i32_0 = arith.constant 0 : i32
    %c0_i32_1 = arith.constant 0 : i32
    return %c0_i32, %c0_i32_0 : i32, i32
  }
  func.func @transform_8(%arg0: i32) -> (i32, i32) {
    %c0_i32 = arith.constant 0 : i32
    %c0_i32_0 = arith.constant 0 : i32
    %c0_i32_1 = arith.constant 0 : i32
    return %c0_i32, %c0_i32_0 : i32, i32
  }
  func.func @transform_9(%arg0: i32) -> (i32, i32) {
    %c0_i32 = arith.constant 0 : i32
    %c0_i32_0 = arith.constant 0 : i32
    %c0_i32_1 = arith.constant 0 : i32
    return %c0_i32, %c0_i32_0 : i32, i32
  }
  func.func @transform_10(%arg0: i32) -> (i32, i32) {
    %c0_i32 = arith.constant 0 : i32
    %c0_i32_0 = arith.constant 0 : i32
    %c0_i32_1 = arith.constant 0 : i32
    return %c0_i32, %c0_i32_0 : i32, i32
  }
  func.func @transform_11(%arg0: i32) -> (i32, i32) {
    %c0_i32 = arith.constant 0 : i32
    %c0_i32_0 = arith.constant 0 : i32
    %c0_i32_1 = arith.constant 0 : i32
    return %c0_i32, %c0_i32_0 : i32, i32
  }
  func.func @transform_12(%arg0: i32) -> (i32, i32) {
    %c0_i32 = arith.constant 0 : i32
    %c0_i32_0 = arith.constant 0 : i32
    %c0_i32_1 = arith.constant 0 : i32
    return %c0_i32, %c0_i32_0 : i32, i32
  }
  func.func @transform_13(%arg0: i32) -> (i32, i32) {
    %c0_i32 = arith.constant 0 : i32
    %c0_i32_0 = arith.constant 0 : i32
    return %arg0, %c0_i32 : i32, i32
  }
}

</mosaic_0001>

<llo_original>
// kernel: tpu_custom_call.1
$region0: #{tpu_custom_call.1}
  #allocation0 [shape = 'u32[]', space=smem, size = 0x4, offset = 0x4, fixed_abs, tag = 'smem constant byte address 0x4 - core index']
  #allocation1 [shape = 'u32[144,128]{1,0:T(1,128)}', space=vmem, size = 0x12000, scoped, tag = 'internal scratch']
  %s0 = inlined_call_operand.hbm [shape: f32[16,32], index: 0, kind: input, shape index: {}]
  %s1 = inlined_call_operand.hbm [shape: f32[1,32], index: 1, kind: input, shape index: {}]
  %s2 = inlined_call_operand.hbm [shape: f32[1,32], index: 2, kind: input, shape index: {}]
  %s3 = inlined_call_operand.hbm [shape: bf16[32,96], index: 3, kind: input, shape index: {}]
  %s4 = inlined_call_operand.hbm [shape: f32[1,96], index: 4, kind: input, shape index: {}]
  %s5 = inlined_call_operand.hbm [shape: bf16[32,32], index: 5, kind: input, shape index: {}]
  %s6 = inlined_call_operand.hbm [shape: f32[1,32], index: 6, kind: input, shape index: {}]
  %s7 = inlined_call_operand.hbm [shape: f32[1,32], index: 7, kind: input, shape index: {}]
  %s8 = inlined_call_operand.hbm [shape: f32[1,32], index: 8, kind: input, shape index: {}]
  %s9 = inlined_call_operand.hbm [shape: bf16[32,128], index: 9, kind: input, shape index: {}]
  %s10 = inlined_call_operand.hbm [shape: f32[1,128], index: 10, kind: input, shape index: {}]
  %s11 = inlined_call_operand.hbm [shape: bf16[128,32], index: 11, kind: input, shape index: {}]
  %s12 = inlined_call_operand.hbm [shape: f32[1,32], index: 12, kind: input, shape index: {}]
  %s13 = inlined_call_operand.hbm [shape: f32[16,32], index: 13, kind: output, shape index: {}]
  %s14 = sld [smem:[#allocation0]]
  $region137: #{tpu_custom_call.1} parent=0
    _
  %s16 = ssub.s32 1, %s14
  %s17 = scalar_select 0, %s16, %s14
  $region1: #{tpu_custom_call.1} parent=0
    #allocation2 [shape = 'u8[8192]{0}', space=vmem, size = 0x2000, scoped, tag = 'input window, operand 0']
    #allocation3 [shape = 's32[2]{0}', space=sflag, size = 0x8, scoped, tag = 'scoped memory for tpu_custom_call.1']
    #allocation4 [shape = 's32[2]{0}', space=sflag, size = 0x8, scoped, tag = 'scoped memory for tpu_custom_call.1']
    #allocation5 [shape = 'u8[512]{0}', space=vmem, size = 0x400, scoped, tag = 'input window, operand 1, single buffered']
    #allocation6 [shape = 's32[1]{0}', space=sflag, size = 0x4, scoped, tag = 'scoped memory for tpu_custom_call.1']
    #allocation7 [shape = 'u8[512]{0}', space=vmem, size = 0x400, scoped, tag = 'input window, operand 2, single buffered']
    #allocation8 [shape = 'u8[8192]{0}', space=vmem, size = 0x2000, scoped, tag = 'input window, operand 3, single buffered']
    #allocation9 [shape = 's32[1]{0}', space=sflag, size = 0x4, scoped, tag = 'scoped memory for tpu_custom_call.1']
    #allocation10 [shape = 'u8[512]{0}', space=vmem, size = 0x400, scoped, tag = 'input window, operand 4, single buffered']
    #allocation11 [shape = 'u8[8192]{0}', space=vmem, size = 0x2000, scoped, tag = 'input window, operand 5, single buffered']
    #allocation12 [shape = 's32[1]{0}', space=sflag, size = 0x4, scoped, tag = 'scoped memory for tpu_custom_call.1']
    #allocation13 [shape = 'u8[512]{0}', space=vmem, size = 0x400, scoped, tag = 'input window, operand 6, single buffered']
    #allocation14 [shape = 'u8[512]{0}', space=vmem, size = 0x400, scoped, tag = 'input window, operand 7, single buffered']
    #allocation15 [shape = 's32[1]{0}', space=sflag, size = 0x4, scoped, tag = 'scoped memory for tpu_custom_call.1']
    #allocation16 [shape = 'u8[512]{0}', space=vmem, size = 0x400, scoped, tag = 'input window, operand 8, single buffered']
    #allocation17 [shape = 'u8[8192]{0}', space=vmem, size = 0x2000, scoped, tag = 'input window, operand 9, single buffered']
    #allocation18 [shape = 's32[1]{0}', space=sflag, size = 0x4, scoped, tag = 'scoped memory for tpu_custom_call.1']
    #allocation19 [shape = 'u8[512]{0}', space=vmem, size = 0x400, scoped, tag = 'input window, operand 10, single buffered']
    #allocation20 [shape = 'u8[32768]{0}', space=vmem, size = 0x8000, scoped, tag = 'input window, operand 11, single buffered']
    #allocation21 [shape = 's32[1]{0}', space=sflag, size = 0x4, scoped, tag = 'scoped memory for tpu_custom_call.1']
    #allocation22 [shape = 'u8[512]{0}', space=vmem, size = 0x400, scoped, tag = 'input window, operand 12, single buffered']
    #allocation23 [shape = 'u8[8192]{0}', space=vmem, size = 0x2000, scoped, tag = 'output window, operand 0']
    %18 = vsyncpa [#allocation3], 0
    %s19 = scalar_lea.sflag [#allocation3], 1
    %20 = vsyncpa %s19, 0
    %21 = vsyncpa [#allocation6], 0
    %22 = vsyncpa [#allocation9], 0
    %23 = vsyncpa [#allocation12], 0
    %24 = vsyncpa [#allocation15], 0
    %25 = vsyncpa [#allocation18], 0
    %26 = vsyncpa [#allocation21], 0
    %27 = vsyncpa [#allocation4], 0
    %s28 = scalar_lea.sflag [#allocation4], 1
    %29 = vsyncpa %s28, 0
    loop: start=0, step=1, limit=4
    $region2: #{tpu_custom_call.1} parent=1 // loop_pre_header
      _
    $region3: #{tpu_custom_call.1} parent=1 // loop_header
      %s31 = sphi 0, %s35
      %p32 = scmp.ge.s32.totalorder %s31, 4
      %s41 = sphi 0, %s43
      %s44 = sphi 0, %s41
      %s45 = sphi 0, %s44
      %s61 = sphi 0, %s45
      %s65 = sphi 0, %s65
      %s67 = sphi 0, %s65
      %s68 = sphi 0, %s67
      %s82 = sphi 0, %s68
      %s86 = sphi 0, %s86
      %s88 = sphi 0, %s86
      %s89 = sphi 0, %s88
      %s103 = sphi 0, %s89
      %s107 = sphi 0, %s107
      %s109 = sphi 0, %s107
      %s110 = sphi 0, %s109
      %s124 = sphi 0, %s110
      %s128 = sphi 0, %s128
      %s130 = sphi 0, %s128
      %s131 = sphi 0, %s130
      %s145 = sphi 0, %s131
      %s149 = sphi 0, %s149
      %s151 = sphi 0, %s149
      %s152 = sphi 0, %s151
      %s166 = sphi 0, %s152
      %s170 = sphi 0, %s170
      %s172 = sphi 0, %s170
      %s173 = sphi 0, %s172
      %s187 = sphi 0, %s173
      %s191 = sphi 0, %s191
      %s193 = sphi 0, %s191
      %s194 = sphi 0, %s193
      %s208 = sphi 0, %s194
      %s212 = sphi 0, %s212
      %s214 = sphi 0, %s212
      %s215 = sphi 0, %s214
      %s229 = sphi 0, %s215
      %s233 = sphi 0, %s233
      %s235 = sphi 0, %s233
      %s236 = sphi 0, %s235
      %s250 = sphi 0, %s236
      %s254 = sphi 0, %s254
      %s256 = sphi 0, %s254
      %s257 = sphi 0, %s256
      %s271 = sphi 0, %s257
      %s275 = sphi 0, %s275
      %s277 = sphi 0, %s275
      %s278 = sphi 0, %s277
      %s292 = sphi 0, %s278
      %s296 = sphi 0, %s296
      %s298 = sphi 0, %s296
      %s299 = sphi 0, %s298
      %s313 = sphi 0, %s299
      %s319 = sphi 0, %s321
      %s322 = sphi 0, %s319
      %s323 = sphi 0, %s322
      %s339 = sphi 0, %s323
    $region4: #{tpu_custom_call.1} parent=1 // loop_header_branch
      %34 = sbr.rel (%p32) target = $region8
    $region5: #{tpu_custom_call.1} parent=1 // loop_body
      %s36 = ssub.s32 %s31, 1
      %s37 = ssub.s32 %s31, 2
      %s38 = sadd.s32 %s31, 1
      %s39 = ssub.s32 %s31, %s38
      %p40 = scmp.eq.s32.totalorder %s39, 0
      %s42 = sadd.s32 %s41, 1
      %s43 = scalar_select %p40, %s41, %s42
      %p46 = pneg %p40
      %p47 = scmp.eq.s32.totalorder %s31, 1
      %p48 = por %p46, %p47
      %p49 = scmp.ne.s32.totalorder %s41, %s44
      %p50 = scmp.eq.s32.totalorder %s31, 0
      %p51 = por %p49, %p50
      %p52 = scmp.ne.s32.totalorder %s41, %s44
      %p53 = scmp.eq.s32.totalorder %s36, 1
      %p54 = por %p52, %p53
      %p55 = scmp.ne.s32.totalorder %s44, %s45
      %p56 = scmp.eq.s32.totalorder %s36, 0
      %p57 = por %p55, %p56
      %p58 = scmp.ne.s32.totalorder %s44, %s45
      %p59 = scmp.eq.s32.totalorder %s37, 1
      %p60 = por %p58, %p59
      %p62 = scmp.ne.s32.totalorder %s45, %s61
      %p63 = scmp.eq.s32.totalorder %s37, 0
      %p64 = por %p62, %p63
      %s66 = sadd.s32 %s65, 1
      %p69 = scmp.eq.s32.totalorder %s31, 1
      %p70 = scmp.ne.s32.totalorder %s65, %s67
      %p71 = scmp.eq.s32.totalorder %s31, 0
      %p72 = por %p70, %p71
      %p73 = scmp.ne.s32.totalorder %s65, %s67
      %p74 = scmp.eq.s32.totalorder %s36, 1
      %p75 = por %p73, %p74
      %p76 = scmp.ne.s32.totalorder %s67, %s68
      %p77 = scmp.eq.s32.totalorder %s36, 0
      %p78 = por %p76, %p77
      %p79 = scmp.ne.s32.totalorder %s67, %s68
      %p80 = scmp.eq.s32.totalorder %s37, 1
      %p81 = por %p79, %p80
      %p83 = scmp.ne.s32.totalorder %s68, %s82
      %p84 = scmp.eq.s32.totalorder %s37, 0
      %p85 = por %p83, %p84
      %s87 = sadd.s32 %s86, 1
      %p90 = scmp.eq.s32.totalorder %s31, 1
      %p91 = scmp.ne.s32.totalorder %s86, %s88
      %p92 = scmp.eq.s32.totalorder %s31, 0
      %p93 = por %p91, %p92
      %p94 = scmp.ne.s32.totalorder %s86, %s88
      %p95 = scmp.eq.s32.totalorder %s36, 1
      %p96 = por %p94, %p95
      %p97 = scmp.ne.s32.totalorder %s88, %s89
      %p98 = scmp.eq.s32.totalorder %s36, 0
      %p99 = por %p97, %p98
      %p100 = scmp.ne.s32.totalorder %s88, %s89
      %p101 = scmp.eq.s32.totalorder %s37, 1
      %p102 = por %p100, %p101
      %p104 = scmp.ne.s32.totalorder %s89, %s103
      %p105 = scmp.eq.s32.totalorder %s37, 0
      %p106 = por %p104, %p105
      %s108 = sadd.s32 %s107, 1
      %p111 = scmp.eq.s32.totalorder %s31, 1
      %p112 = scmp.ne.s32.totalorder %s107, %s109
      %p113 = scmp.eq.s32.totalorder %s31, 0
      %p114 = por %p112, %p113
      %p115 = scmp.ne.s32.totalorder %s107, %s109
      %p116 = scmp.eq.s32.totalorder %s36, 1
      %p117 = por %p115, %p116
      %p118 = scmp.ne.s32.totalorder %s109, %s110
      %p119 = scmp.eq.s32.totalorder %s36, 0
      %p120 = por %p118, %p119
      %p121 = scmp.ne.s32.totalorder %s109, %s110
      %p122 = scmp.eq.s32.totalorder %s37, 1
      %p123 = por %p121, %p122
      %p125 = scmp.ne.s32.totalorder %s110, %s124
      %p126 = scmp.eq.s32.totalorder %s37, 0
      %p127 = por %p125, %p126
      %s129 = sadd.s32 %s128, 1
      %p132 = scmp.eq.s32.totalorder %s31, 1
      %p133 = scmp.ne.s32.totalorder %s128, %s130
      %p134 = scmp.eq.s32.totalorder %s31, 0
      %p135 = por %p133, %p134
      %p136 = scmp.ne.s32.totalorder %s128, %s130
      %p137 = scmp.eq.s32.totalorder %s36, 1
      %p138 = por %p136, %p137
      %p139 = scmp.ne.s32.totalorder %s130, %s131
      %p140 = scmp.eq.s32.totalorder %s36, 0
      %p141 = por %p139, %p140
      %p142 = scmp.ne.s32.totalorder %s130, %s131
      %p143 = scmp.eq.s32.totalorder %s37, 1
      %p144 = por %p142, %p143
      %p146 = scmp.ne.s32.totalorder %s131, %s145
      %p147 = scmp.eq.s32.totalorder %s37, 0
      %p148 = por %p146, %p147
      %s150 = sadd.s32 %s149, 1
      %p153 = scmp.eq.s32.totalorder %s31, 1
      %p154 = scmp.ne.s32.totalorder %s149, %s151
      %p155 = scmp.eq.s32.totalorder %s31, 0
      %p156 = por %p154, %p155
      %p157 = scmp.ne.s32.totalorder %s149, %s151
      %p158 = scmp.eq.s32.totalorder %s36, 1
      %p159 = por %p157, %p158
      %p160 = scmp.ne.s32.totalorder %s151, %s152
      %p161 = scmp.eq.s32.totalorder %s36, 0
      %p162 = por %p160, %p161
      %p163 = scmp.ne.s32.totalorder %s151, %s152
      %p164 = scmp.eq.s32.totalorder %s37, 1
      %p165 = por %p163, %p164
      %p167 = scmp.ne.s32.totalorder %s152, %s166
      %p168 = scmp.eq.s32.totalorder %s37, 0
      %p169 = por %p167, %p168
      %s171 = sadd.s32 %s170, 1
      %p174 = scmp.eq.s32.totalorder %s31, 1
      %p175 = scmp.ne.s32.totalorder %s170, %s172
      %p176 = scmp.eq.s32.totalorder %s31, 0
      %p177 = por %p175, %p176
      %p178 = scmp.ne.s32.totalorder %s170, %s172
      %p179 = scmp.eq.s32.totalorder %s36, 1
      %p180 = por %p178, %p179
      %p181 = scmp.ne.s32.totalorder %s172, %s173
      %p182 = scmp.eq.s32.totalorder %s36, 0
      %p183 = por %p181, %p182
      %p184 = scmp.ne.s32.totalorder %s172, %s173
      %p185 = scmp.eq.s32.totalorder %s37, 1
      %p186 = por %p184, %p185
      %p188 = scmp.ne.s32.totalorder %s173, %s187
      %p189 = scmp.eq.s32.totalorder %s37, 0
      %p190 = por %p188, %p189
      %s192 = sadd.s32 %s191, 1
      %p195 = scmp.eq.s32.totalorder %s31, 1
      %p196 = scmp.ne.s32.totalorder %s191, %s193
      %p197 = scmp.eq.s32.totalorder %s31, 0
      %p198 = por %p196, %p197
      %p199 = scmp.ne.s32.totalorder %s191, %s193
      %p200 = scmp.eq.s32.totalorder %s36, 1
      %p201 = por %p199, %p200
      %p202 = scmp.ne.s32.totalorder %s193, %s194
      %p203 = scmp.eq.s32.totalorder %s36, 0
      %p204 = por %p202, %p203
      %p205 = scmp.ne.s32.totalorder %s193, %s194
      %p206 = scmp.eq.s32.totalorder %s37, 1
      %p207 = por %p205, %p206
      %p209 = scmp.ne.s32.totalorder %s194, %s208
      %p210 = scmp.eq.s32.totalorder %s37, 0
      %p211 = por %p209, %p210
      %s213 = sadd.s32 %s212, 1
      %p216 = scmp.eq.s32.totalorder %s31, 1
      %p217 = scmp.ne.s32.totalorder %s212, %s214
      %p218 = scmp.eq.s32.totalorder %s31, 0
      %p219 = por %p217, %p218
      %p220 = scmp.ne.s32.totalorder %s212, %s214
      %p221 = scmp.eq.s32.totalorder %s36, 1
      %p222 = por %p220, %p221
      %p223 = scmp.ne.s32.totalorder %s214, %s215
      %p224 = scmp.eq.s32.totalorder %s36, 0
      %p225 = por %p223, %p224
      %p226 = scmp.ne.s32.totalorder %s214, %s215
      %p227 = scmp.eq.s32.totalorder %s37, 1
      %p228 = por %p226, %p227
      %p230 = scmp.ne.s32.totalorder %s215, %s229
      %p231 = scmp.eq.s32.totalorder %s37, 0
      %p232 = por %p230, %p231
      %s234 = sadd.s32 %s233, 1
      %p237 = scmp.eq.s32.totalorder %s31, 1
      %p238 = scmp.ne.s32.totalorder %s233, %s235
      %p239 = scmp.eq.s32.totalorder %s31, 0
      %p240 = por %p238, %p239
      %p241 = scmp.ne.s32.totalorder %s233, %s235
      %p242 = scmp.eq.s32.totalorder %s36, 1
      %p243 = por %p241, %p242
      %p244 = scmp.ne.s32.totalorder %s235, %s236
      %p245 = scmp.eq.s32.totalorder %s36, 0
      %p246 = por %p244, %p245
      %p247 = scmp.ne.s32.totalorder %s235, %s236
      %p248 = scmp.eq.s32.totalorder %s37, 1
      %p249 = por %p247, %p248
      %p251 = scmp.ne.s32.totalorder %s236, %s250
      %p252 = scmp.eq.s32.totalorder %s37, 0
      %p253 = por %p251, %p252
      %s255 = sadd.s32 %s254, 1
      %p258 = scmp.eq.s32.totalorder %s31, 1
      %p259 = scmp.ne.s32.totalorder %s254, %s256
      %p260 = scmp.eq.s32.totalorder %s31, 0
      %p261 = por %p259, %p260
      %p262 = scmp.ne.s32.totalorder %s254, %s256
      %p263 = scmp.eq.s32.totalorder %s36, 1
      %p264 = por %p262, %p263
      %p265 = scmp.ne.s32.totalorder %s256, %s257
      %p266 = scmp.eq.s32.totalorder %s36, 0
      %p267 = por %p265, %p266
      %p268 = scmp.ne.s32.totalorder %s256, %s257
      %p269 = scmp.eq.s32.totalorder %s37, 1
      %p270 = por %p268, %p269
      %p272 = scmp.ne.s32.totalorder %s257, %s271
      %p273 = scmp.eq.s32.totalorder %s37, 0
      %p274 = por %p272, %p273
      %s276 = sadd.s32 %s275, 1
      %p279 = scmp.eq.s32.totalorder %s31, 1
      %p280 = scmp.ne.s32.totalorder %s275, %s277
      %p281 = scmp.eq.s32.totalorder %s31, 0
      %p282 = por %p280, %p281
      %p283 = scmp.ne.s32.totalorder %s275, %s277
      %p284 = scmp.eq.s32.totalorder %s36, 1
      %p285 = por %p283, %p284
      %p286 = scmp.ne.s32.totalorder %s277, %s278
      %p287 = scmp.eq.s32.totalorder %s36, 0
      %p288 = por %p286, %p287
      %p289 = scmp.ne.s32.totalorder %s277, %s278
      %p290 = scmp.eq.s32.totalorder %s37, 1
      %p291 = por %p289, %p290
      %p293 = scmp.ne.s32.totalorder %s278, %s292
      %p294 = scmp.eq.s32.totalorder %s37, 0
      %p295 = por %p293, %p294
      %s297 = sadd.s32 %s296, 1
      %p300 = scmp.eq.s32.totalorder %s31, 1
      %p301 = scmp.ne.s32.totalorder %s296, %s298
      %p302 = scmp.eq.s32.totalorder %s31, 0
      %p303 = por %p301, %p302
      %p304 = scmp.ne.s32.totalorder %s296, %s298
      %p305 = scmp.eq.s32.totalorder %s36, 1
      %p306 = por %p304, %p305
      %p307 = scmp.ne.s32.totalorder %s298, %s299
      %p308 = scmp.eq.s32.totalorder %s36, 0
      %p309 = por %p307, %p308
      %p310 = scmp.ne.s32.totalorder %s298, %s299
      %p311 = scmp.eq.s32.totalorder %s37, 1
      %p312 = por %p310, %p311
      %p314 = scmp.ne.s32.totalorder %s299, %s313
      %p315 = scmp.eq.s32.totalorder %s37, 0
      %p316 = por %p314, %p315
      %s317 = ssub.s32 %s31, %s38
      %p318 = scmp.eq.s32.totalorder %s317, 0
      %s320 = sadd.s32 %s319, 1
      %s321 = scalar_select %p318, %s319, %s320
      %p324 = pneg %p318
      %p325 = scmp.eq.s32.totalorder %s31, 1
      %p326 = por %p324, %p325
      %p327 = scmp.ne.s32.totalorder %s319, %s322
      %p328 = scmp.eq.s32.totalorder %s31, 0
      %p329 = por %p327, %p328
      %p330 = scmp.ne.s32.totalorder %s319, %s322
      %p331 = scmp.eq.s32.totalorder %s36, 1
      %p332 = por %p330, %p331
      %p333 = scmp.ne.s32.totalorder %s322, %s323
      %p334 = scmp.eq.s32.totalorder %s36, 0
      %p335 = por %p333, %p334
      %p336 = scmp.ne.s32.totalorder %s322, %s323
      %p337 = scmp.eq.s32.totalorder %s37, 1
      %p338 = por %p336, %p337
      %p340 = scmp.ne.s32.totalorder %s323, %s339
      %p341 = scmp.eq.s32.totalorder %s37, 0
      %p342 = por %p340, %p341
      %p343 = scmp.le.s32.totalorder 1, %s31
      %p344 = scmp.lt.s32.totalorder %s31, 3
      %p345 = pnand %p343, %p344
      %p346 = pneg %p345
      // Predicated region
      $region9: #{tpu_custom_call.1} parent=5 // pred_check
        _
      $region10: #{tpu_custom_call.1} parent=5 // pred_check_branch
        %348 = sbr.rel (%p345) target = $region12
      $region11: #{tpu_custom_call.1} parent=5 // pred_region
        %s349 = ssub.s32 %s31, 1
        // Predicated region
        $region13: #{tpu_custom_call.1} parent=11 // pred_check
          %p350 = pneg %p78
        $region14: #{tpu_custom_call.1} parent=11 // pred_check_branch
          %352 = sbr.rel (%p350) target = $region16
        $region15: #{tpu_custom_call.1} parent=11 // pred_region
          %s354 = ssub.s32 16, 16
          %355 = vsyncadd [#allocation6], %s354
          %s357 = sshll.u32 [#allocation5], 4
          %s358 = int_to_ptr.vmem [resolvable:$true] %s357
          %360 = dma.hbm_to_vmem [thread:$0]  %s1, 16, %s358, [#allocation6]
        $region16: #{tpu_custom_call.1} parent=11 // pred_fallthru
          _
        // Predicated region
        $region17: #{tpu_custom_call.1} parent=11 // pred_check
          %p361 = pneg %p99
        $region18: #{tpu_custom_call.1} parent=11 // pred_check_branch
          %363 = sbr.rel (%p361) target = $region20
        $region19: #{tpu_custom_call.1} parent=11 // pred_region
          %s365 = ssub.s32 16, 16
          %366 = vsyncadd [#allocation6], %s365
          %s368 = sshll.u32 [#allocation7], 4
          %s369 = int_to_ptr.vmem [resolvable:$true] %s368
          %371 = dma.hbm_to_vmem [thread:$0]  %s2, 16, %s369, [#allocation6]
        $region20: #{tpu_custom_call.1} parent=11 // pred_fallthru
          _
        // Predicated region
        $region21: #{tpu_custom_call.1} parent=11 // pred_check
          %p372 = pneg %p120
        $region22: #{tpu_custom_call.1} parent=11 // pred_check_branch
          %374 = sbr.rel (%p372) target = $region24
        $region23: #{tpu_custom_call.1} parent=11 // pred_region
          %s376 = ssub.s32 256, 256
          %377 = vsyncadd [#allocation9], %s376
          %s378 = sshll.u32 [#allocation8], 4
          %s379 = int_to_ptr.vmem [resolvable:$true] %s378
          %384 = dma.hbm_to_vmem [thread:$0]  %s3, 256, %s379, [#allocation9], 64, 64, 4
        $region24: #{tpu_custom_call.1} parent=11 // pred_fallthru
          _
        // Predicated region
        $region25: #{tpu_custom_call.1} parent=11 // pred_check
          %p385 = pneg %p141
        $region26: #{tpu_custom_call.1} parent=11 // pred_check_branch
          %387 = sbr.rel (%p385) target = $region28
        $region27: #{tpu_custom_call.1} parent=11 // pred_region
          %s389 = ssub.s32 16, 16
          %390 = vsyncadd [#allocation9], %s389
          %s392 = sshll.u32 [#allocation10], 4
          %s393 = int_to_ptr.vmem [resolvable:$true] %s392
          %395 = dma.hbm_to_vmem [thread:$0]  %s4, 16, %s393, [#allocation9]
        $region28: #{tpu_custom_call.1} parent=11 // pred_fallthru
          _
        // Predicated region
        $region29: #{tpu_custom_call.1} parent=11 // pred_check
          %p396 = pneg %p162
        $region30: #{tpu_custom_call.1} parent=11 // pred_check_branch
          %398 = sbr.rel (%p396) target = $region32
        $region31: #{tpu_custom_call.1} parent=11 // pred_region
          %s400 = ssub.s32 256, 256
          %401 = vsyncadd [#allocation12], %s400
          %s402 = sshll.u32 [#allocation11], 4
          %s403 = int_to_ptr.vmem [resolvable:$true] %s402
          %408 = dma.hbm_to_vmem [thread:$0]  %s5, 256, %s403, [#allocation12], 64, 64, 4
        $region32: #{tpu_custom_call.1} parent=11 // pred_fallthru
          _
        // Predicated region
        $region33: #{tpu_custom_call.1} parent=11 // pred_check
          %p409 = pneg %p183
        $region34: #{tpu_custom_call.1} parent=11 // pred_check_branch
          %411 = sbr.rel (%p409) target = $region36
        $region35: #{tpu_custom_call.1} parent=11 // pred_region
          %s413 = ssub.s32 16, 16
          %414 = vsyncadd [#allocation12], %s413
          %s416 = sshll.u32 [#allocation13], 4
          %s417 = int_to_ptr.vmem [resolvable:$true] %s416
          %419 = dma.hbm_to_vmem [thread:$0]  %s6, 16, %s417, [#allocation12]
        $region36: #{tpu_custom_call.1} parent=11 // pred_fallthru
          _
        // Predicated region
        $region37: #{tpu_custom_call.1} parent=11 // pred_check
          %p420 = pneg %p204
        $region38: #{tpu_custom_call.1} parent=11 // pred_check_branch
          %422 = sbr.rel (%p420) target = $region40
        $region39: #{tpu_custom_call.1} parent=11 // pred_region
          %s424 = ssub.s32 16, 16
          %425 = vsyncadd [#allocation15], %s424
          %s427 = sshll.u32 [#allocation14], 4
          %s428 = int_to_ptr.vmem [resolvable:$true] %s427
          %430 = dma.hbm_to_vmem [thread:$0]  %s7, 16, %s428, [#allocation15]
        $region40: #{tpu_custom_call.1} parent=11 // pred_fallthru
          _
        // Predicated region
        $region41: #{tpu_custom_call.1} parent=11 // pred_check
          %p431 = pneg %p225
        $region42: #{tpu_custom_call.1} parent=11 // pred_check_branch
          %433 = sbr.rel (%p431) target = $region44
        $region43: #{tpu_custom_call.1} parent=11 // pred_region
          %s435 = ssub.s32 16, 16
          %436 = vsyncadd [#allocation15], %s435
          %s438 = sshll.u32 [#allocation16], 4
          %s439 = int_to_ptr.vmem [resolvable:$true] %s438
          %441 = dma.hbm_to_vmem [thread:$0]  %s8, 16, %s439, [#allocation15]
        $region44: #{tpu_custom_call.1} parent=11 // pred_fallthru
          _
        // Predicated region
        $region45: #{tpu_custom_call.1} parent=11 // pred_check
          %p442 = pneg %p246
        $region46: #{tpu_custom_call.1} parent=11 // pred_check_branch
          %444 = sbr.rel (%p442) target = $region48
        $region47: #{tpu_custom_call.1} parent=11 // pred_region
          %s446 = ssub.s32 256, 256
          %447 = vsyncadd [#allocation18], %s446
          %s448 = sshll.u32 [#allocation17], 4
          %s449 = int_to_ptr.vmem [resolvable:$true] %s448
          %454 = dma.hbm_to_vmem [thread:$0]  %s9, 256, %s449, [#allocation18], 64, 64, 4
        $region48: #{tpu_custom_call.1} parent=11 // pred_fallthru
          _
        // Predicated region
        $region49: #{tpu_custom_call.1} parent=11 // pred_check
          %p455 = pneg %p267
        $region50: #{tpu_custom_call.1} parent=11 // pred_check_branch
          %457 = sbr.rel (%p455) target = $region52
        $region51: #{tpu_custom_call.1} parent=11 // pred_region
          %s459 = ssub.s32 16, 16
          %460 = vsyncadd [#allocation18], %s459
          %s462 = sshll.u32 [#allocation19], 4
          %s463 = int_to_ptr.vmem [resolvable:$true] %s462
          %465 = dma.hbm_to_vmem [thread:$0]  %s10, 16, %s463, [#allocation18]
        $region52: #{tpu_custom_call.1} parent=11 // pred_fallthru
          _
        // Predicated region
        $region53: #{tpu_custom_call.1} parent=11 // pred_check
          %p466 = pneg %p288
        $region54: #{tpu_custom_call.1} parent=11 // pred_check_branch
          %468 = sbr.rel (%p466) target = $region56
        $region55: #{tpu_custom_call.1} parent=11 // pred_region
          %s470 = ssub.s32 1024, 1024
          %471 = vsyncadd [#allocation21], %s470
          %s472 = sshll.u32 [#allocation20], 4
          %s473 = int_to_ptr.vmem [resolvable:$true] %s472
          %478 = dma.hbm_to_vmem [thread:$0]  %s11, 1024, %s473, [#allocation21], 64, 64, 4
        $region56: #{tpu_custom_call.1} parent=11 // pred_fallthru
          _
        // Predicated region
        $region57: #{tpu_custom_call.1} parent=11 // pred_check
          %p479 = pneg %p309
        $region58: #{tpu_custom_call.1} parent=11 // pred_check_branch
          %481 = sbr.rel (%p479) target = $region60
        $region59: #{tpu_custom_call.1} parent=11 // pred_region
          %s483 = ssub.s32 16, 16
          %484 = vsyncadd [#allocation21], %s483
          %s486 = sshll.u32 [#allocation22], 4
          %s487 = int_to_ptr.vmem [resolvable:$true] %s486
          %489 = dma.hbm_to_vmem [thread:$0]  %s12, 16, %s487, [#allocation21]
        $region60: #{tpu_custom_call.1} parent=11 // pred_fallthru
          _
      $region12: #{tpu_custom_call.1} parent=5 // pred_fallthru
        _
      %p490 = scmp.lt.s32.totalorder %s31, 2
      // Predicated region
      $region61: #{tpu_custom_call.1} parent=5 // pred_check
        %p491 = pneg %p490
      $region62: #{tpu_custom_call.1} parent=5 // pred_check_branch
        %493 = sbr.rel (%p491) target = $region64
      $region63: #{tpu_custom_call.1} parent=5 // pred_region
        // Predicated region
        $region65: #{tpu_custom_call.1} parent=63 // pred_check
          %p494 = pneg %p51
        $region66: #{tpu_custom_call.1} parent=63 // pred_check_branch
          %496 = sbr.rel (%p494) target = $region68
        $region67: #{tpu_custom_call.1} parent=63 // pred_region
          %s497 = sand.u32 %s41, 1
          %s498 = scalar_lea.sflag [#allocation3], %s497
          %s499 = sand.u32 %s41, 1
          %s500 = smul.addr %s499, 8
          %s501 = scalar_lea.vmem [#allocation2], %s500
          %s503 = ssub.s32 128, 128
          %504 = vsyncadd %s498, %s503
          %s505 = smul.addr %s31, 128
          %s506 = scalar_lea.hbm %s0, %s505
          %s508 = sshll.u32 %s501, 4
          %s509 = int_to_ptr.vmem [resolvable:$true] %s508
          %511 = dma.hbm_to_vmem [thread:$0]  %s506, 128, %s509, %s498
        $region68: #{tpu_custom_call.1} parent=63 // pred_fallthru
          _
      $region64: #{tpu_custom_call.1} parent=5 // pred_fallthru
        _
      %p512 = scmp.le.s32.totalorder 1, %s31
      %p513 = scmp.lt.s32.totalorder %s31, 3
      %p514 = pnand %p512, %p513
      %p515 = pneg %p514
      // Predicated region
      $region69: #{tpu_custom_call.1} parent=5 // pred_check
        _
      $region70: #{tpu_custom_call.1} parent=5 // pred_check_branch
        %517 = sbr.rel (%p514) target = $region72
      $region71: #{tpu_custom_call.1} parent=5 // pred_region
        %s518 = ssub.s32 %s31, 1
        %s519 = sand.u32 %s44, 1
        %s520 = scalar_lea.sflag [#allocation3], %s519
        %s521 = sand.u32 %s44, 1
        %s522 = smul.addr %s521, 8
        %s523 = scalar_lea.vmem [#allocation2], %s522
        // Predicated region
        $region73: #{tpu_custom_call.1} parent=71 // pred_check
          %p524 = pneg %p57
        $region74: #{tpu_custom_call.1} parent=71 // pred_check_branch
          %526 = sbr.rel (%p524) target = $region76
        $region75: #{tpu_custom_call.1} parent=71 // pred_region
          %527 = dma.done %s520, 128
        $region76: #{tpu_custom_call.1} parent=71 // pred_fallthru
          _
        // Predicated region
        $region77: #{tpu_custom_call.1} parent=71 // pred_check
          %p528 = pneg %p78
        $region78: #{tpu_custom_call.1} parent=71 // pred_check_branch
          %530 = sbr.rel (%p528) target = $region80
        $region79: #{tpu_custom_call.1} parent=71 // pred_region
          %531 = dma.done [#allocation6], 16
        $region80: #{tpu_custom_call.1} parent=71 // pred_fallthru
          _
        // Predicated region
        $region81: #{tpu_custom_call.1} parent=71 // pred_check
          %p532 = pneg %p99
        $region82: #{tpu_custom_call.1} parent=71 // pred_check_branch
          %534 = sbr.rel (%p532) target = $region84
        $region83: #{tpu_custom_call.1} parent=71 // pred_region
          %535 = dma.done [#allocation6], 16
        $region84: #{tpu_custom_call.1} parent=71 // pred_fallthru
          _
        // Predicated region
        $region85: #{tpu_custom_call.1} parent=71 // pred_check
          %p536 = pneg %p120
        $region86: #{tpu_custom_call.1} parent=71 // pred_check_branch
          %538 = sbr.rel (%p536) target = $region88
        $region87: #{tpu_custom_call.1} parent=71 // pred_region
          %539 = dma.done [#allocation9], 256
        $region88: #{tpu_custom_call.1} parent=71 // pred_fallthru
          _
        // Predicated region
        $region89: #{tpu_custom_call.1} parent=71 // pred_check
          %p540 = pneg %p141
        $region90: #{tpu_custom_call.1} parent=71 // pred_check_branch
          %542 = sbr.rel (%p540) target = $region92
        $region91: #{tpu_custom_call.1} parent=71 // pred_region
          %543 = dma.done [#allocation9], 16
        $region92: #{tpu_custom_call.1} parent=71 // pred_fallthru
          _
        // Predicated region
        $region93: #{tpu_custom_call.1} parent=71 // pred_check
          %p544 = pneg %p162
        $region94: #{tpu_custom_call.1} parent=71 // pred_check_branch
          %546 = sbr.rel (%p544) target = $region96
        $region95: #{tpu_custom_call.1} parent=71 // pred_region
          %547 = dma.done [#allocation12], 256
        $region96: #{tpu_custom_call.1} parent=71 // pred_fallthru
          _
        // Predicated region
        $region97: #{tpu_custom_call.1} parent=71 // pred_check
          %p548 = pneg %p183
        $region98: #{tpu_custom_call.1} parent=71 // pred_check_branch
          %550 = sbr.rel (%p548) target = $region100
        $region99: #{tpu_custom_call.1} parent=71 // pred_region
          %551 = dma.done [#allocation12], 16
        $region100: #{tpu_custom_call.1} parent=71 // pred_fallthru
          _
        // Predicated region
        $region101: #{tpu_custom_call.1} parent=71 // pred_check
          %p552 = pneg %p204
        $region102: #{tpu_custom_call.1} parent=71 // pred_check_branch
          %554 = sbr.rel (%p552) target = $region104
        $region103: #{tpu_custom_call.1} parent=71 // pred_region
          %555 = dma.done [#allocation15], 16
        $region104: #{tpu_custom_call.1} parent=71 // pred_fallthru
          _
        // Predicated region
        $region105: #{tpu_custom_call.1} parent=71 // pred_check
          %p556 = pneg %p225
        $region106: #{tpu_custom_call.1} parent=71 // pred_check_branch
          %558 = sbr.rel (%p556) target = $region108
        $region107: #{tpu_custom_call.1} parent=71 // pred_region
          %559 = dma.done [#allocation15], 16
        $region108: #{tpu_custom_call.1} parent=71 // pred_fallthru
          _
        // Predicated region
        $region109: #{tpu_custom_call.1} parent=71 // pred_check
          %p560 = pneg %p246
        $region110: #{tpu_custom_call.1} parent=71 // pred_check_branch
          %562 = sbr.rel (%p560) target = $region112
        $region111: #{tpu_custom_call.1} parent=71 // pred_region
          %563 = dma.done [#allocation18], 256
        $region112: #{tpu_custom_call.1} parent=71 // pred_fallthru
          _
        // Predicated region
        $region113: #{tpu_custom_call.1} parent=71 // pred_check
          %p564 = pneg %p267
        $region114: #{tpu_custom_call.1} parent=71 // pred_check_branch
          %566 = sbr.rel (%p564) target = $region116
        $region115: #{tpu_custom_call.1} parent=71 // pred_region
          %567 = dma.done [#allocation18], 16
        $region116: #{tpu_custom_call.1} parent=71 // pred_fallthru
          _
        // Predicated region
        $region117: #{tpu_custom_call.1} parent=71 // pred_check
          %p568 = pneg %p288
        $region118: #{tpu_custom_call.1} parent=71 // pred_check_branch
          %570 = sbr.rel (%p568) target = $region120
        $region119: #{tpu_custom_call.1} parent=71 // pred_region
          %571 = dma.done [#allocation21], 1024
        $region120: #{tpu_custom_call.1} parent=71 // pred_fallthru
          _
        // Predicated region
        $region121: #{tpu_custom_call.1} parent=71 // pred_check
          %p572 = pneg %p309
        $region122: #{tpu_custom_call.1} parent=71 // pred_check_branch
          %574 = sbr.rel (%p572) target = $region124
        $region123: #{tpu_custom_call.1} parent=71 // pred_region
          %575 = dma.done [#allocation21], 16
        $region124: #{tpu_custom_call.1} parent=71 // pred_fallthru
          _
        %s576 = sand.u32 %s44, 1
        %s577 = scalar_lea.sflag [#allocation3], %s576
        %s578 = sand.u32 %s44, 1
        %s579 = smul.addr %s578, 8
        %s580 = scalar_lea.vmem [#allocation2], %s579
        %p581 = pneg %p57
        %p582 = pneg %p54
        %p583 = pneg %p78
        %p584 = pneg %p75
        %p585 = pneg %p99
        %p586 = pneg %p96
        %p587 = pneg %p120
        %p588 = pneg %p117
        %p589 = pneg %p141
        %p590 = pneg %p138
        %p591 = pneg %p162
        %p592 = pneg %p159
        %p593 = pneg %p183
        %p594 = pneg %p180
        %p595 = pneg %p204
        %p596 = pneg %p201
        %p597 = pneg %p225
        %p598 = pneg %p222
        %p599 = pneg %p246
        %p600 = pneg %p243
        %p601 = pneg %p267
        %p602 = pneg %p264
        %p603 = pneg %p288
        %p604 = pneg %p285
        %p605 = pneg %p309
        %p606 = pneg %p306
        %p607 = pneg %p335
        %p608 = pneg %p332
        %s609 = sand.u32 %s322, 1
        %s610 = scalar_lea.sflag [#allocation4], %s609
        %s611 = sand.u32 %s322, 1
        %s612 = smul.addr %s611, 8
        %s613 = scalar_lea.vmem [#allocation23], %s612
        %v615 = vld [vmem:[%s523] sm:$0xff]
        %v616 = vld [vmem:[#allocation5] sm:$0x1]
        %v617 = vld [vmem:[#allocation7] sm:$0x1]
        %vm618 = vcmask 261120
        %v619 = vsel %vm618, %v615, 0.0
        %620 = vadd.xlane.f32.xlu0 %v619
        %v621 = vpop.xlane.xlu0 %620
        %v622 = vrcp.pop 32.0
        %v623 = vmul.f32 %v621, %v622
        %v624 = vsub.f32 %v615, %v623
        %v625 = vmul.f32 %v624, %v624
        %v626 = vsel %vm618, %v625, 0.0
        %627 = vadd.xlane.f32.xlu0 %v626
        %v628 = vpop.xlane.xlu0 %627
        %v629 = vmul.f32 %v628, %v622
        %v630 = vadd.f32 %v629, 1e-05
        %v631 = vrsqrt.pop %v630
        %v632 = vmul.f32 %v624, %v631
        %v634 = vlaneseq
        %v635 = vshrl.u32 %v634, 7
        %v636 = vsub.s32 0, %v635
        %v637 = vrot.slane %v616, %v636
        %v639 = vmul.f32 %v632, %v637
        %v641 = vlaneseq
        %v642 = vshrl.u32 %v641, 7
        %v643 = vsub.s32 0, %v642
        %v644 = vrot.slane %v617, %v643
        %v646 = vadd.f32 %v639, %v644
        %v647 = vpack.c.bf16 %v646, %v646
        %v648 = vld [vmem:[#allocation8] sm:$0xf]
        %v649 = vld [vmem:[#allocation8 + $0x4] sm:$0xf]
        %v650 = vld [vmem:[#allocation8 + $0x8] sm:$0xf]
        %v651 = vld [vmem:[#allocation8 + $0xc] sm:$0xf]
        %v652 = vld [vmem:[#allocation10] sm:$0x1]
        %v654 = vlaneseq
        %v655 = vshrl.u32 %v654, 7
        %v656 = vsub.s32 0, %v655
        %v657 = vrot.slane %v652, %v656
        %v663 = vunpack.c.l.b16 %v648
        %v664 = vunpack.c.l.b16 %v649
        %v665 = vunpack.c.l.b16 %v650
        %v666 = vunpack.c.l.b16 %v651
        %v667 = vpack.c.b16 %v664, %v663
        %v668 = vpack.c.b16 %v666, %v665
        %v672 = vsel %vm618, %v647, 0
        %674 = vmatprep.subr.bf16.mxu0 0
        %675 = vmatpush1.bf16.msra.mxu0 %v667
        %676 = vmatprep.subr.bf16.mxu0 0
        %677 = vmatpush1.bf16.msra.mxu0 %v668
        %678 = vmatprep.subr.bf16.mxu0 0
        %679 = vmatpush1.bf16.msra.mxu0 0
        %680 = vmatprep.subr.bf16.mxu0 0
        %681 = vmatpush1.bf16.msra.mxu0 0
        %682 = vmatprep.subr.bf16.mxu0 0
        %683 = vmatpush1.bf16.msra.mxu0 0
        %684 = vmatprep.subr.bf16.mxu0 0
        %685 = vmatpush1.bf16.msra.mxu0 0
        %686 = vmatprep.subr.bf16.mxu0 0
        %687 = vmatpush1.bf16.msra.mxu0 0
        %688 = vmatprep.subr.bf16.mxu0 0
        %689 = vmatpush1.bf16.msra.mxu0 0
        %690 = vmatprep.subr.bf16.mxu0 0
        %691 = vmatpush1.bf16.msra.mxu0 0
        %692 = vmatprep.subr.bf16.mxu0 0
        %693 = vmatpush1.bf16.msra.mxu0 0
        %694 = vmatprep.subr.bf16.mxu0 0
        %695 = vmatpush1.bf16.msra.mxu0 0
        %696 = vmatprep.subr.bf16.mxu0 0
        %697 = vmatpush1.bf16.msra.mxu0 0
        %698 = vmatprep.subr.bf16.mxu0 0
        %699 = vmatpush1.bf16.msra.mxu0 0
        %700 = vmatprep.subr.bf16.mxu0 0
        %701 = vmatpush1.bf16.msra.mxu0 0
        %702 = vmatprep.subr.bf16.mxu0 0
        %703 = vmatpush1.bf16.msra.mxu0 0
        %704 = vmatprep.subr.bf16.mxu0 0
        %705 = vmatpush1.bf16.msra.mxu0 0
        %706 = vmatprep.mubr.bf16.mxu0 0
        %707 = vmatmul.mubr.bf16.gmra.mrb[0].mxu0 %v672
        %v708 = vpop.f32.mrb[0].mxu0
        %v709 = vadd.f32 %v657, %v708
        %v710 = vpop.f32.mrb[0].mxu0
        %v711 = vpop.f32.mrb[0].mxu0
        %v712 = vpop.f32.mrb[0].mxu0
        %713 = vdwg.mxu0
        %v714 = vlaneseq
        %v715 = vshrl.u32 %v714, 7
        %v716 = vlaneseq
        %v717 = vand.u32 %v716, 127
        %vm718 = vcmp.ge.s32.totalorder %v715, %v717
        %v719 = vmul.f32 %v709, 0.35355338
        %v720 = vpack.c.bf16 %v719, %v719
        %v721 = vpack.c.bf16 %v709, %v709
        %723 = vrot.lane.b32.xlu0 %v721, 96
        %v724 = vpop.permute.xlu0 %723
        %vm725 = vcmask 64512
        %v727 = vsel %vm725, %v720, 0
        %v730 = vsel %vm725, %v724, 0
        %732 = vmatprep.subr.bf16.mxu0 0
        %733 = vmatpush1.bf16.xpose.msra.mxu0 %v730
        %734 = vmatprep.subr.bf16.mxu0 0
        %735 = vmatpush1.bf16.xpose.msra.mxu0 0
        %736 = vmatprep.subr.bf16.mxu0 0
        %737 = vmatpush1.bf16.xpose.msra.mxu0 0
        %738 = vmatprep.subr.bf16.mxu0 0
        %739 = vmatpush1.bf16.xpose.msra.mxu0 0
        %740 = vmatprep.subr.bf16.mxu0 0
        %741 = vmatpush1.bf16.xpose.msra.mxu0 0
        %742 = vmatprep.subr.bf16.mxu0 0
        %743 = vmatpush1.bf16.xpose.msra.mxu0 0
        %744 = vmatprep.subr.bf16.mxu0 0
        %745 = vmatpush1.bf16.xpose.msra.mxu0 0
        %746 = vmatprep.subr.bf16.mxu0 0
        %747 = vmatpush1.bf16.xpose.msra.mxu0 0
        %748 = vmatprep.subr.bf16.mxu0 0
        %749 = vmatpush1.bf16.xpose.msra.mxu0 0
        %750 = vmatprep.subr.bf16.mxu0 0
        %751 = vmatpush1.bf16.xpose.msra.mxu0 0
        %752 = vmatprep.subr.bf16.mxu0 0
        %753 = vmatpush1.bf16.xpose.msra.mxu0 0
        %754 = vmatprep.subr.bf16.mxu0 0
        %755 = vmatpush1.bf16.xpose.msra.mxu0 0
        %756 = vmatprep.subr.bf16.mxu0 0
        %757 = vmatpush1.bf16.xpose.msra.mxu0 0
        %758 = vmatprep.subr.bf16.mxu0 0
        %759 = vmatpush1.bf16.xpose.msra.mxu0 0
        %760 = vmatprep.subr.bf16.mxu0 0
        %761 = vmatpush1.bf16.xpose.msra.mxu0 0
        %762 = vmatprep.subr.bf16.mxu0 0
        %763 = vmatpush1.bf16.xpose.msra.mxu0 0
        %764 = vmatprep.mubr.bf16.mxu0 0
        %765 = vmatmul.mubr.bf16.gmra.mrb[0].mxu0 %v727
        %v766 = vpop.f32.mrb[0].mxu0
        %v767 = vadd.f32 0.0, %v766
        %v768 = vpop.f32.mrb[0].mxu0
        %v769 = vpop.f32.mrb[0].mxu0
        %v770 = vpop.f32.mrb[0].mxu0
        %771 = vdwg.mxu0
        %v772 = vsel %vm718, %v767, -1e+30
        %v773 = vsel %vm725, %v772, -inf
        %774 = vmax.xlane.f32.xlu0 %v773
        %v775 = vpop.xlane.xlu0 %774
        %v776 = vsub.f32 %v772, %v775
        %v777 = vmul.f32 %v776, 1.442695
        %v778 = vpow.pop %v777
        %v779 = vsel %vm725, %v778, 0.0
        %780 = vadd.xlane.f32.xlu0 %v779
        %v781 = vpop.xlane.xlu0 %780
        %v782 = vrcp.pop %v781
        %v783 = vmul.f32 %v778, %v782
        %v784 = vpack.c.bf16 %v783, %v783
        %785 = vrot.lane.b32.xlu0 %v721, 64
        %v786 = vpop.permute.xlu0 %785
        %v788 = vsel %vm725, %v784, 0
        %vm790 = vcmask 1043456
        %v792 = vsel %vm790, %v786, 0
        %794 = vmatprep.subr.bf16.mxu0 0
        %795 = vmatpush1.bf16.msra.mxu0 %v792
        %796 = vmatprep.subr.bf16.mxu0 0
        %797 = vmatpush1.bf16.msra.mxu0 0
        %798 = vmatprep.subr.bf16.mxu0 0
        %799 = vmatpush1.bf16.msra.mxu0 0
        %800 = vmatprep.subr.bf16.mxu0 0
        %801 = vmatpush1.bf16.msra.mxu0 0
        %802 = vmatprep.subr.bf16.mxu0 0
        %803 = vmatpush1.bf16.msra.mxu0 0
        %804 = vmatprep.subr.bf16.mxu0 0
        %805 = vmatpush1.bf16.msra.mxu0 0
        %806 = vmatprep.subr.bf16.mxu0 0
        %807 = vmatpush1.bf16.msra.mxu0 0
        %808 = vmatprep.subr.bf16.mxu0 0
        %809 = vmatpush1.bf16.msra.mxu0 0
        %810 = vmatprep.subr.bf16.mxu0 0
        %811 = vmatpush1.bf16.msra.mxu0 0
        %812 = vmatprep.subr.bf16.mxu0 0
        %813 = vmatpush1.bf16.msra.mxu0 0
        %814 = vmatprep.subr.bf16.mxu0 0
        %815 = vmatpush1.bf16.msra.mxu0 0
        %816 = vmatprep.subr.bf16.mxu0 0
        %817 = vmatpush1.bf16.msra.mxu0 0
        %818 = vmatprep.subr.bf16.mxu0 0
        %819 = vmatpush1.bf16.msra.mxu0 0
        %820 = vmatprep.subr.bf16.mxu0 0
        %821 = vmatpush1.bf16.msra.mxu0 0
        %822 = vmatprep.subr.bf16.mxu0 0
        %823 = vmatpush1.bf16.msra.mxu0 0
        %824 = vmatprep.subr.bf16.mxu0 0
        %825 = vmatpush1.bf16.msra.mxu0 0
        %826 = vmatprep.mubr.bf16.mxu0 0
        %827 = vmatmul.mubr.bf16.gmra.mrb[0].mxu0 %v788
        %v828 = vpop.f32.mrb[0].mxu0
        %v829 = vadd.f32 0.0, %v828
        %v830 = vpop.f32.mrb[0].mxu0
        %v831 = vpop.f32.mrb[0].mxu0
        %v832 = vpop.f32.mrb[0].mxu0
        %833 = vdwg.mxu0
        %835 = vrot.lane.b32.xlu0 %v720, 120
        %v836 = vpop.permute.xlu0 %835
        %837 = vrot.lane.b32.xlu0 %v721, 88
        %v838 = vpop.permute.xlu0 %837
        %v840 = vsel %vm725, %v836, 0
        %v843 = vsel %vm725, %v838, 0
        %845 = vmatprep.subr.bf16.mxu0 0
        %846 = vmatpush1.bf16.xpose.msra.mxu0 %v843
        %847 = vmatprep.subr.bf16.mxu0 0
        %848 = vmatpush1.bf16.xpose.msra.mxu0 0
        %849 = vmatprep.subr.bf16.mxu0 0
        %850 = vmatpush1.bf16.xpose.msra.mxu0 0
        %851 = vmatprep.subr.bf16.mxu0 0
        %852 = vmatpush1.bf16.xpose.msra.mxu0 0
        %853 = vmatprep.subr.bf16.mxu0 0
        %854 = vmatpush1.bf16.xpose.msra.mxu0 0
        %855 = vmatprep.subr.bf16.mxu0 0
        %856 = vmatpush1.bf16.xpose.msra.mxu0 0
        %857 = vmatprep.subr.bf16.mxu0 0
        %858 = vmatpush1.bf16.xpose.msra.mxu0 0
        %859 = vmatprep.subr.bf16.mxu0 0
        %860 = vmatpush1.bf16.xpose.msra.mxu0 0
        %861 = vmatprep.subr.bf16.mxu0 0
        %862 = vmatpush1.bf16.xpose.msra.mxu0 0
        %863 = vmatprep.subr.bf16.mxu0 0
        %864 = vmatpush1.bf16.xpose.msra.mxu0 0
        %865 = vmatprep.subr.bf16.mxu0 0
        %866 = vmatpush1.bf16.xpose.msra.mxu0 0
        %867 = vmatprep.subr.bf16.mxu0 0
        %868 = vmatpush1.bf16.xpose.msra.mxu0 0
        %869 = vmatprep.subr.bf16.mxu0 0
        %870 = vmatpush1.bf16.xpose.msra.mxu0 0
        %871 = vmatprep.subr.bf16.mxu0 0
        %872 = vmatpush1.bf16.xpose.msra.mxu0 0
        %873 = vmatprep.subr.bf16.mxu0 0
        %874 = vmatpush1.bf16.xpose.msra.mxu0 0
        %875 = vmatprep.subr.bf16.mxu0 0
        %876 = vmatpush1.bf16.xpose.msra.mxu0 0
        %877 = vmatprep.mubr.bf16.mxu0 0
        %878 = vmatmul.mubr.bf16.gmra.mrb[0].mxu0 %v840
        %v879 = vpop.f32.mrb[0].mxu0
        %v880 = vadd.f32 0.0, %v879
        %v881 = vpop.f32.mrb[0].mxu0
        %v882 = vpop.f32.mrb[0].mxu0
        %v883 = vpop.f32.mrb[0].mxu0
        %884 = vdwg.mxu0
        %v885 = vsel %vm718, %v880, -1e+30
        %v886 = vsel %vm725, %v885, -inf
        %887 = vmax.xlane.f32.xlu0 %v886
        %v888 = vpop.xlane.xlu0 %887
        %v889 = vsub.f32 %v885, %v888
        %v890 = vmul.f32 %v889, 1.442695
        %v891 = vpow.pop %v890
        %v892 = vsel %vm725, %v891, 0.0
        %893 = vadd.xlane.f32.xlu0 %v892
        %v894 = vpop.xlane.xlu0 %893
        %v895 = vrcp.pop %v894
        %v896 = vmul.f32 %v891, %v895
        %v897 = vpack.c.bf16 %v896, %v896
        %898 = vrot.lane.b32.xlu0 %v721, 56
        %v899 = vpop.permute.xlu0 %898
        %v901 = vsel %vm725, %v897, 0
        %v904 = vsel %vm790, %v899, 0
        %906 = vmatprep.subr.bf16.mxu0 0
        %907 = vmatpush1.bf16.msra.mxu0 %v904
        %908 = vmatprep.subr.bf16.mxu0 0
        %909 = vmatpush1.bf16.msra.mxu0 0
        %910 = vmatprep.subr.bf16.mxu0 0
        %911 = vmatpush1.bf16.msra.mxu0 0
        %912 = vmatprep.subr.bf16.mxu0 0
        %913 = vmatpush1.bf16.msra.mxu0 0
        %914 = vmatprep.subr.bf16.mxu0 0
        %915 = vmatpush1.bf16.msra.mxu0 0
        %916 = vmatprep.subr.bf16.mxu0 0
        %917 = vmatpush1.bf16.msra.mxu0 0
        %918 = vmatprep.subr.bf16.mxu0 0
        %919 = vmatpush1.bf16.msra.mxu0 0
        %920 = vmatprep.subr.bf16.mxu0 0
        %921 = vmatpush1.bf16.msra.mxu0 0
        %922 = vmatprep.subr.bf16.mxu0 0
        %923 = vmatpush1.bf16.msra.mxu0 0
        %924 = vmatprep.subr.bf16.mxu0 0
        %925 = vmatpush1.bf16.msra.mxu0 0
        %926 = vmatprep.subr.bf16.mxu0 0
        %927 = vmatpush1.bf16.msra.mxu0 0
        %928 = vmatprep.subr.bf16.mxu0 0
        %929 = vmatpush1.bf16.msra.mxu0 0
        %930 = vmatprep.subr.bf16.mxu0 0
        %931 = vmatpush1.bf16.msra.mxu0 0
        %932 = vmatprep.subr.bf16.mxu0 0
        %933 = vmatpush1.bf16.msra.mxu0 0
        %934 = vmatprep.subr.bf16.mxu0 0
        %935 = vmatpush1.bf16.msra.mxu0 0
        %936 = vmatprep.subr.bf16.mxu0 0
        %937 = vmatpush1.bf16.msra.mxu0 0
        %938 = vmatprep.mubr.bf16.mxu0 0
        %939 = vmatmul.mubr.bf16.gmra.mrb[0].mxu0 %v901
        %v940 = vpop.f32.mrb[0].mxu0
        %v941 = vadd.f32 0.0, %v940
        %v942 = vpop.f32.mrb[0].mxu0
        %v943 = vpop.f32.mrb[0].mxu0
        %v944 = vpop.f32.mrb[0].mxu0
        %945 = vdwg.mxu0
        %946 = vrot.lane.b32.xlu0 %v720, 112
        %v947 = vpop.permute.xlu0 %946
        %948 = vrot.lane.b32.xlu0 %v721, 80
        %v949 = vpop.permute.xlu0 %948
        %v951 = vsel %vm725, %v947, 0
        %v954 = vsel %vm725, %v949, 0
        %956 = vmatprep.subr.bf16.mxu0 0
        %957 = vmatpush1.bf16.xpose.msra.mxu0 %v954
        %958 = vmatprep.subr.bf16.mxu0 0
        %959 = vmatpush1.bf16.xpose.msra.mxu0 0
        %960 = vmatprep.subr.bf16.mxu0 0
        %961 = vmatpush1.bf16.xpose.msra.mxu0 0
        %962 = vmatprep.subr.bf16.mxu0 0
        %963 = vmatpush1.bf16.xpose.msra.mxu0 0
        %964 = vmatprep.subr.bf16.mxu0 0
        %965 = vmatpush1.bf16.xpose.msra.mxu0 0
        %966 = vmatprep.subr.bf16.mxu0 0
        %967 = vmatpush1.bf16.xpose.msra.mxu0 0
        %968 = vmatprep.subr.bf16.mxu0 0
        %969 = vmatpush1.bf16.xpose.msra.mxu0 0
        %970 = vmatprep.subr.bf16.mxu0 0
        %971 = vmatpush1.bf16.xpose.msra.mxu0 0
        %972 = vmatprep.subr.bf16.mxu0 0
        %973 = vmatpush1.bf16.xpose.msra.mxu0 0
        %974 = vmatprep.subr.bf16.mxu0 0
        %975 = vmatpush1.bf16.xpose.msra.mxu0 0
        %976 = vmatprep.subr.bf16.mxu0 0
        %977 = vmatpush1.bf16.xpose.msra.mxu0 0
        %978 = vmatprep.subr.bf16.mxu0 0
        %979 = vmatpush1.bf16.xpose.msra.mxu0 0
        %980 = vmatprep.subr.bf16.mxu0 0
        %981 = vmatpush1.bf16.xpose.msra.mxu0 0
        %982 = vmatprep.subr.bf16.mxu0 0
        %983 = vmatpush1.bf16.xpose.msra.mxu0 0
        %984 = vmatprep.subr.bf16.mxu0 0
        %985 = vmatpush1.bf16.xpose.msra.mxu0 0
        %986 = vmatprep.subr.bf16.mxu0 0
        %987 = vmatpush1.bf16.xpose.msra.mxu0 0
        %988 = vmatprep.mubr.bf16.mxu0 0
        %989 = vmatmul.mubr.bf16.gmra.mrb[0].mxu0 %v951
        %v990 = vpop.f32.mrb[0].mxu0
        %v991 = vadd.f32 0.0, %v990
        %v992 = vpop.f32.mrb[0].mxu0
        %v993 = vpop.f32.mrb[0].mxu0
        %v994 = vpop.f32.mrb[0].mxu0
        %995 = vdwg.mxu0
        %v996 = vsel %vm718, %v991, -1e+30
        %v997 = vsel %vm725, %v996, -inf
        %998 = vmax.xlane.f32.xlu0 %v997
        %v999 = vpop.xlane.xlu0 %998
        %v1000 = vsub.f32 %v996, %v999
        %v1001 = vmul.f32 %v1000, 1.442695
        %v1002 = vpow.pop %v1001
        %v1003 = vsel %vm725, %v1002, 0.0
        %1004 = vadd.xlane.f32.xlu0 %v1003
        %v1005 = vpop.xlane.xlu0 %1004
        %v1006 = vrcp.pop %v1005
        %v1007 = vmul.f32 %v1002, %v1006
        %v1008 = vpack.c.bf16 %v1007, %v1007
        %1009 = vrot.lane.b32.xlu0 %v721, 48
        %v1010 = vpop.permute.xlu0 %1009
        %v1012 = vsel %vm725, %v1008, 0
        %v1015 = vsel %vm790, %v1010, 0
        %1017 = vmatprep.subr.bf16.mxu0 0
        %1018 = vmatpush1.bf16.msra.mxu0 %v1015
        %1019 = vmatprep.subr.bf16.mxu0 0
        %1020 = vmatpush1.bf16.msra.mxu0 0
        %1021 = vmatprep.subr.bf16.mxu0 0
        %1022 = vmatpush1.bf16.msra.mxu0 0
        %1023 = vmatprep.subr.bf16.mxu0 0
        %1024 = vmatpush1.bf16.msra.mxu0 0
        %1025 = vmatprep.subr.bf16.mxu0 0
        %1026 = vmatpush1.bf16.msra.mxu0 0
        %1027 = vmatprep.subr.bf16.mxu0 0
        %1028 = vmatpush1.bf16.msra.mxu0 0
        %1029 = vmatprep.subr.bf16.mxu0 0
        %1030 = vmatpush1.bf16.msra.mxu0 0
        %1031 = vmatprep.subr.bf16.mxu0 0
        %1032 = vmatpush1.bf16.msra.mxu0 0
        %1033 = vmatprep.subr.bf16.mxu0 0
        %1034 = vmatpush1.bf16.msra.mxu0 0
        %1035 = vmatprep.subr.bf16.mxu0 0
        %1036 = vmatpush1.bf16.msra.mxu0 0
        %1037 = vmatprep.subr.bf16.mxu0 0
        %1038 = vmatpush1.bf16.msra.mxu0 0
        %1039 = vmatprep.subr.bf16.mxu0 0
        %1040 = vmatpush1.bf16.msra.mxu0 0
        %1041 = vmatprep.subr.bf16.mxu0 0
        %1042 = vmatpush1.bf16.msra.mxu0 0
        %1043 = vmatprep.subr.bf16.mxu0 0
        %1044 = vmatpush1.bf16.msra.mxu0 0
        %1045 = vmatprep.subr.bf16.mxu0 0
        %1046 = vmatpush1.bf16.msra.mxu0 0
        %1047 = vmatprep.subr.bf16.mxu0 0
        %1048 = vmatpush1.bf16.msra.mxu0 0
        %1049 = vmatprep.mubr.bf16.mxu0 0
        %1050 = vmatmul.mubr.bf16.gmra.mrb[0].mxu0 %v1012
        %v1051 = vpop.f32.mrb[0].mxu0
        %v1052 = vadd.f32 0.0, %v1051
        %v1053 = vpop.f32.mrb[0].mxu0
        %v1054 = vpop.f32.mrb[0].mxu0
        %v1055 = vpop.f32.mrb[0].mxu0
        %1056 = vdwg.mxu0
        %1057 = vrot.lane.b32.xlu0 %v720, 104
        %v1058 = vpop.permute.xlu0 %1057
        %1059 = vrot.lane.b32.xlu0 %v721, 72
        %v1060 = vpop.permute.xlu0 %1059
        %v1062 = vsel %vm725, %v1058, 0
        %v1065 = vsel %vm725, %v1060, 0
        %1067 = vmatprep.subr.bf16.mxu0 0
        %1068 = vmatpush1.bf16.xpose.msra.mxu0 %v1065
        %1069 = vmatprep.subr.bf16.mxu0 0
        %1070 = vmatpush1.bf16.xpose.msra.mxu0 0
        %1071 = vmatprep.subr.bf16.mxu0 0
        %1072 = vmatpush1.bf16.xpose.msra.mxu0 0
        %1073 = vmatprep.subr.bf16.mxu0 0
        %1074 = vmatpush1.bf16.xpose.msra.mxu0 0
        %1075 = vmatprep.subr.bf16.mxu0 0
        %1076 = vmatpush1.bf16.xpose.msra.mxu0 0
        %1077 = vmatprep.subr.bf16.mxu0 0
        %1078 = vmatpush1.bf16.xpose.msra.mxu0 0
        %1079 = vmatprep.subr.bf16.mxu0 0
        %1080 = vmatpush1.bf16.xpose.msra.mxu0 0
        %1081 = vmatprep.subr.bf16.mxu0 0
        %1082 = vmatpush1.bf16.xpose.msra.mxu0 0
        %1083 = vmatprep.subr.bf16.mxu0 0
        %1084 = vmatpush1.bf16.xpose.msra.mxu0 0
        %1085 = vmatprep.subr.bf16.mxu0 0
        %1086 = vmatpush1.bf16.xpose.msra.mxu0 0
        %1087 = vmatprep.subr.bf16.mxu0 0
        %1088 = vmatpush1.bf16.xpose.msra.mxu0 0
        %1089 = vmatprep.subr.bf16.mxu0 0
        %1090 = vmatpush1.bf16.xpose.msra.mxu0 0
        %1091 = vmatprep.subr.bf16.mxu0 0
        %1092 = vmatpush1.bf16.xpose.msra.mxu0 0
        %1093 = vmatprep.subr.bf16.mxu0 0
        %1094 = vmatpush1.bf16.xpose.msra.mxu0 0
        %1095 = vmatprep.subr.bf16.mxu0 0
        %1096 = vmatpush1.bf16.xpose.msra.mxu0 0
        %1097 = vmatprep.subr.bf16.mxu0 0
        %1098 = vmatpush1.bf16.xpose.msra.mxu0 0
        %1099 = vmatprep.mubr.bf16.mxu0 0
        %1100 = vmatmul.mubr.bf16.gmra.mrb[0].mxu0 %v1062
        %v1101 = vpop.f32.mrb[0].mxu0
        %v1102 = vadd.f32 0.0, %v1101
        %v1103 = vpop.f32.mrb[0].mxu0
        %v1104 = vpop.f32.mrb[0].mxu0
        %v1105 = vpop.f32.mrb[0].mxu0
        %1106 = vdwg.mxu0
        %v1107 = vsel %vm718, %v1102, -1e+30
        %v1108 = vsel %vm725, %v1107, -inf
        %1109 = vmax.xlane.f32.xlu0 %v1108
        %v1110 = vpop.xlane.xlu0 %1109
        %v1111 = vsub.f32 %v1107, %v1110
        %v1112 = vmul.f32 %v1111, 1.442695
        %v1113 = vpow.pop %v1112
        %v1114 = vsel %vm725, %v1113, 0.0
        %1115 = vadd.xlane.f32.xlu0 %v1114
        %v1116 = vpop.xlane.xlu0 %1115
        %v1117 = vrcp.pop %v1116
        %v1118 = vmul.f32 %v1113, %v1117
        %v1119 = vpack.c.bf16 %v1118, %v1118
        %1120 = vrot.lane.b32.xlu0 %v721, 40
        %v1121 = vpop.permute.xlu0 %1120
        %v1123 = vsel %vm725, %v1119, 0
        %v1126 = vsel %vm790, %v1121, 0
        %1128 = vmatprep.subr.bf16.mxu0 0
        %1129 = vmatpush1.bf16.msra.mxu0 %v1126
        %1130 = vmatprep.subr.bf16.mxu0 0
        %1131 = vmatpush1.bf16.msra.mxu0 0
        %1132 = vmatprep.subr.bf16.mxu0 0
        %1133 = vmatpush1.bf16.msra.mxu0 0
        %1134 = vmatprep.subr.bf16.mxu0 0
        %1135 = vmatpush1.bf16.msra.mxu0 0
        %1136 = vmatprep.subr.bf16.mxu0 0
        %1137 = vmatpush1.bf16.msra.mxu0 0
        %1138 = vmatprep.subr.bf16.mxu0 0
        %1139 = vmatpush1.bf16.msra.mxu0 0
        %1140 = vmatprep.subr.bf16.mxu0 0
        %1141 = vmatpush1.bf16.msra.mxu0 0
        %1142 = vmatprep.subr.bf16.mxu0 0
        %1143 = vmatpush1.bf16.msra.mxu0 0
        %1144 = vmatprep.subr.bf16.mxu0 0
        %1145 = vmatpush1.bf16.msra.mxu0 0
        %1146 = vmatprep.subr.bf16.mxu0 0
        %1147 = vmatpush1.bf16.msra.mxu0 0
        %1148 = vmatprep.subr.bf16.mxu0 0
        %1149 = vmatpush1.bf16.msra.mxu0 0
        %1150 = vmatprep.subr.bf16.mxu0 0
        %1151 = vmatpush1.bf16.msra.mxu0 0
        %1152 = vmatprep.subr.bf16.mxu0 0
        %1153 = vmatpush1.bf16.msra.mxu0 0
        %1154 = vmatprep.subr.bf16.mxu0 0
        %1155 = vmatpush1.bf16.msra.mxu0 0
        %1156 = vmatprep.subr.bf16.mxu0 0
        %1157 = vmatpush1.bf16.msra.mxu0 0
        %1158 = vmatprep.subr.bf16.mxu0 0
        %1159 = vmatpush1.bf16.msra.mxu0 0
        %1160 = vmatprep.mubr.bf16.mxu0 0
        %1161 = vmatmul.mubr.bf16.gmra.mrb[0].mxu0 %v1123
        %v1162 = vpop.f32.mrb[0].mxu0
        %v1163 = vadd.f32 0.0, %v1162
        %v1164 = vpop.f32.mrb[0].mxu0
        %v1165 = vpop.f32.mrb[0].mxu0
        %v1166 = vpop.f32.mrb[0].mxu0
        %1167 = vdwg.mxu0
        %1169 = vrot.lane.b32.xlu0 %v941, 8
        %v1170 = vpop.permute.xlu0 %1169
        %1173 = vrot.lane.b32.xlu0 %v1052, 16
        %v1174 = vpop.permute.xlu0 %1173
        %1177 = vrot.lane.b32.xlu0 %v1163, 24
        %v1178 = vpop.permute.xlu0 %1177
        %v1180 = vsel %vm725, %v829, %v1170
        %vm1181 = vcmask 130048
        %v1182 = vsel %vm1181, %v1180, %v1174
        %vm1183 = vcmask 195584
        %v1184 = vsel %vm1183, %v1182, %v1178
        %v1185 = vpack.c.bf16 %v1184, %v1184
        %v1186 = vld [vmem:[#allocation11] sm:$0xf]
        %v1187 = vld [vmem:[#allocation11 + $0x4] sm:$0xf]
        %v1188 = vld [vmem:[#allocation11 + $0x8] sm:$0xf]
        %v1189 = vld [vmem:[#allocation11 + $0xc] sm:$0xf]
        %v1194 = vunpack.c.l.b16 %v1186
        %v1195 = vunpack.c.l.b16 %v1187
        %v1196 = vunpack.c.l.b16 %v1188
        %v1197 = vunpack.c.l.b16 %v1189
        %v1198 = vpack.c.b16 %v1195, %v1194
        %v1199 = vpack.c.b16 %v1197, %v1196
        %v1203 = vsel %vm618, %v1185, 0
        %1205 = vmatprep.subr.bf16.mxu0 0
        %1206 = vmatpush1.bf16.msra.mxu0 %v1198
        %1207 = vmatprep.subr.bf16.mxu0 0
        %1208 = vmatpush1.bf16.msra.mxu0 %v1199
        %1209 = vmatprep.subr.bf16.mxu0 0
        %1210 = vmatpush1.bf16.msra.mxu0 0
        %1211 = vmatprep.subr.bf16.mxu0 0
        %1212 = vmatpush1.bf16.msra.mxu0 0
        %1213 = vmatprep.subr.bf16.mxu0 0
        %1214 = vmatpush1.bf16.msra.mxu0 0
        %1215 = vmatprep.subr.bf16.mxu0 0
        %1216 = vmatpush1.bf16.msra.mxu0 0
        %1217 = vmatprep.subr.bf16.mxu0 0
        %1218 = vmatpush1.bf16.msra.mxu0 0
        %1219 = vmatprep.subr.bf16.mxu0 0
        %1220 = vmatpush1.bf16.msra.mxu0 0
        %1221 = vmatprep.subr.bf16.mxu0 0
        %1222 = vmatpush1.bf16.msra.mxu0 0
        %1223 = vmatprep.subr.bf16.mxu0 0
        %1224 = vmatpush1.bf16.msra.mxu0 0
        %1225 = vmatprep.subr.bf16.mxu0 0
        %1226 = vmatpush1.bf16.msra.mxu0 0
        %1227 = vmatprep.subr.bf16.mxu0 0
        %1228 = vmatpush1.bf16.msra.mxu0 0
        %1229 = vmatprep.subr.bf16.mxu0 0
        %1230 = vmatpush1.bf16.msra.mxu0 0
        %1231 = vmatprep.subr.bf16.mxu0 0
        %1232 = vmatpush1.bf16.msra.mxu0 0
        %1233 = vmatprep.subr.bf16.mxu0 0
        %1234 = vmatpush1.bf16.msra.mxu0 0
        %1235 = vmatprep.subr.bf16.mxu0 0
        %1236 = vmatpush1.bf16.msra.mxu0 0
        %1237 = vmatprep.mubr.bf16.mxu0 0
        %1238 = vmatmul.mubr.bf16.gmra.mrb[0].mxu0 %v1203
        %v1239 = vpop.f32.mrb[0].mxu0
        %v1240 = vadd.f32 0.0, %v1239
        %v1241 = vpop.f32.mrb[0].mxu0
        %v1242 = vpop.f32.mrb[0].mxu0
        %v1243 = vpop.f32.mrb[0].mxu0
        %1244 = vdwg.mxu0
        %v1245 = vadd.f32 %v615, %v1240
        %v1246 = vld [vmem:[#allocation13] sm:$0x1]
        %v1248 = vlaneseq
        %v1249 = vshrl.u32 %v1248, 7
        %v1250 = vsub.s32 0, %v1249
        %v1251 = vrot.slane %v1246, %v1250
        %v1253 = vadd.f32 %v1245, %v1251
        %v1254 = vld [vmem:[#allocation14] sm:$0x1]
        %v1255 = vld [vmem:[#allocation16] sm:$0x1]
        %v1256 = vsel %vm618, %v1253, 0.0
        %1257 = vadd.xlane.f32.xlu0 %v1256
        %v1258 = vpop.xlane.xlu0 %1257
        %v1259 = vmul.f32 %v1258, %v622
        %v1260 = vsub.f32 %v1253, %v1259
        %v1261 = vmul.f32 %v1260, %v1260
        %v1262 = vsel %vm618, %v1261, 0.0
        %1263 = vadd.xlane.f32.xlu0 %v1262
        %v1264 = vpop.xlane.xlu0 %1263
        %v1265 = vmul.f32 %v1264, %v622
        %v1266 = vadd.f32 %v1265, 1e-05
        %v1267 = vrsqrt.pop %v1266
        %v1268 = vmul.f32 %v1260, %v1267
        %v1270 = vlaneseq
        %v1271 = vshrl.u32 %v1270, 7
        %v1272 = vsub.s32 0, %v1271
        %v1273 = vrot.slane %v1254, %v1272
        %v1275 = vmul.f32 %v1268, %v1273
        %v1277 = vlaneseq
        %v1278 = vshrl.u32 %v1277, 7
        %v1279 = vsub.s32 0, %v1278
        %v1280 = vrot.slane %v1255, %v1279
        %v1282 = vadd.f32 %v1275, %v1280
        %v1283 = vpack.c.bf16 %v1282, %v1282
        %v1284 = vld [vmem:[#allocation19] sm:$0x1]
        %v1285 = vld [vmem:[#allocation17] sm:$0xf]
        %v1286 = vld [vmem:[#allocation17 + $0x4] sm:$0xf]
        %v1287 = vld [vmem:[#allocation17 + $0x8] sm:$0xf]
        %v1288 = vld [vmem:[#allocation17 + $0xc] sm:$0xf]
        %v1290 = vlaneseq
        %v1291 = vshrl.u32 %v1290, 7
        %v1292 = vsub.s32 0, %v1291
        %v1293 = vrot.slane %v1284, %v1292
        %v1299 = vunpack.c.l.b16 %v1285
        %v1300 = vunpack.c.l.b16 %v1286
        %v1301 = vunpack.c.l.b16 %v1287
        %v1302 = vunpack.c.l.b16 %v1288
        %v1303 = vpack.c.b16 %v1300, %v1299
        %v1304 = vpack.c.b16 %v1302, %v1301
        %v1308 = vsel %vm618, %v1283, 0
        %1310 = vmatprep.subr.bf16.mxu0 0
        %1311 = vmatpush1.bf16.msra.mxu0 %v1303
        %1312 = vmatprep.subr.bf16.mxu0 0
        %1313 = vmatpush1.bf16.msra.mxu0 %v1304
        %1314 = vmatprep.subr.bf16.mxu0 0
        %1315 = vmatpush1.bf16.msra.mxu0 0
        %1316 = vmatprep.subr.bf16.mxu0 0
        %1317 = vmatpush1.bf16.msra.mxu0 0
        %1318 = vmatprep.subr.bf16.mxu0 0
        %1319 = vmatpush1.bf16.msra.mxu0 0
        %1320 = vmatprep.subr.bf16.mxu0 0
        %1321 = vmatpush1.bf16.msra.mxu0 0
        %1322 = vmatprep.subr.bf16.mxu0 0
        %1323 = vmatpush1.bf16.msra.mxu0 0
        %1324 = vmatprep.subr.bf16.mxu0 0
        %1325 = vmatpush1.bf16.msra.mxu0 0
        %1326 = vmatprep.subr.bf16.mxu0 0
        %1327 = vmatpush1.bf16.msra.mxu0 0
        %1328 = vmatprep.subr.bf16.mxu0 0
        %1329 = vmatpush1.bf16.msra.mxu0 0
        %1330 = vmatprep.subr.bf16.mxu0 0
        %1331 = vmatpush1.bf16.msra.mxu0 0
        %1332 = vmatprep.subr.bf16.mxu0 0
        %1333 = vmatpush1.bf16.msra.mxu0 0
        %1334 = vmatprep.subr.bf16.mxu0 0
        %1335 = vmatpush1.bf16.msra.mxu0 0
        %1336 = vmatprep.subr.bf16.mxu0 0
        %1337 = vmatpush1.bf16.msra.mxu0 0
        %1338 = vmatprep.subr.bf16.mxu0 0
        %1339 = vmatpush1.bf16.msra.mxu0 0
        %1340 = vmatprep.subr.bf16.mxu0 0
        %1341 = vmatpush1.bf16.msra.mxu0 0
        %1342 = vmatprep.mubr.bf16.mxu0 0
        %1343 = vmatmul.mubr.bf16.gmra.mrb[0].mxu0 %v1308
        %v1344 = vpop.f32.mrb[0].mxu0
        %v1345 = vadd.f32 %v1293, %v1344
        %v1346 = vpop.f32.mrb[0].mxu0
        %v1347 = vpop.f32.mrb[0].mxu0
        %v1348 = vpop.f32.mrb[0].mxu0
        %1349 = vdwg.mxu0
        %v1350 = vmax.f32 %v1345, 0.0
        %v1351 = vpack.c.bf16 %v1350, %v1350
        %v1352 = vld [vmem:[#allocation20] sm:$0xf]
        %v1353 = vld [vmem:[#allocation20 + $0x4] sm:$0xf]
        %v1354 = vld [vmem:[#allocation20 + $0x8] sm:$0xf]
        %v1355 = vld [vmem:[#allocation20 + $0xc] sm:$0xf]
        %v1356 = vld [vmem:[#allocation20 + $0x10] sm:$0xf]
        %v1357 = vld [vmem:[#allocation20 + $0x14] sm:$0xf]
        %v1358 = vld [vmem:[#allocation20 + $0x18] sm:$0xf]
        %v1359 = vld [vmem:[#allocation20 + $0x1c] sm:$0xf]
        %v1360 = vld [vmem:[#allocation20 + $0x20] sm:$0xf]
        %v1361 = vld [vmem:[#allocation20 + $0x24] sm:$0xf]
        %v1362 = vld [vmem:[#allocation20 + $0x28] sm:$0xf]
        %v1363 = vld [vmem:[#allocation20 + $0x2c] sm:$0xf]
        %v1364 = vld [vmem:[#allocation20 + $0x30] sm:$0xf]
        %v1365 = vld [vmem:[#allocation20 + $0x34] sm:$0xf]
        %v1366 = vld [vmem:[#allocation20 + $0x38] sm:$0xf]
        %v1367 = vld [vmem:[#allocation20 + $0x3c] sm:$0xf]
        %v1384 = vunpack.c.l.b16 %v1352
        %v1385 = vunpack.c.l.b16 %v1353
        %v1386 = vunpack.c.l.b16 %v1354
        %v1387 = vunpack.c.l.b16 %v1355
        %v1388 = vunpack.c.l.b16 %v1356
        %v1389 = vunpack.c.l.b16 %v1357
        %v1390 = vunpack.c.l.b16 %v1358
        %v1391 = vunpack.c.l.b16 %v1359
        %v1392 = vunpack.c.l.b16 %v1360
        %v1393 = vunpack.c.l.b16 %v1361
        %v1394 = vunpack.c.l.b16 %v1362
        %v1395 = vunpack.c.l.b16 %v1363
        %v1396 = vunpack.c.l.b16 %v1364
        %v1397 = vunpack.c.l.b16 %v1365
        %v1398 = vunpack.c.l.b16 %v1366
        %v1399 = vunpack.c.l.b16 %v1367
        %v1400 = vpack.c.b16 %v1385, %v1384
        %v1401 = vpack.c.b16 %v1387, %v1386
        %v1402 = vpack.c.b16 %v1389, %v1388
        %v1403 = vpack.c.b16 %v1391, %v1390
        %v1404 = vpack.c.b16 %v1393, %v1392
        %v1405 = vpack.c.b16 %v1395, %v1394
        %v1406 = vpack.c.b16 %v1397, %v1396
        %v1407 = vpack.c.b16 %v1399, %v1398
        %1416 = vmatprep.subr.bf16.mxu0 0
        %1417 = vmatpush1.bf16.msra.mxu0 %v1400
        %1418 = vmatprep.subr.bf16.mxu0 0
        %1419 = vmatpush1.bf16.msra.mxu0 %v1401
        %1420 = vmatprep.subr.bf16.mxu0 0
        %1421 = vmatpush1.bf16.msra.mxu0 %v1402
        %1422 = vmatprep.subr.bf16.mxu0 0
        %1423 = vmatpush1.bf16.msra.mxu0 %v1403
        %1424 = vmatprep.subr.bf16.mxu0 0
        %1425 = vmatpush1.bf16.msra.mxu0 %v1404
        %1426 = vmatprep.subr.bf16.mxu0 0
        %1427 = vmatpush1.bf16.msra.mxu0 %v1405
        %1428 = vmatprep.subr.bf16.mxu0 0
        %1429 = vmatpush1.bf16.msra.mxu0 %v1406
        %1430 = vmatprep.subr.bf16.mxu0 0
        %1431 = vmatpush1.bf16.msra.mxu0 %v1407
        %1432 = vmatprep.subr.bf16.mxu0 0
        %1433 = vmatpush1.bf16.msra.mxu0 0
        %1434 = vmatprep.subr.bf16.mxu0 0
        %1435 = vmatpush1.bf16.msra.mxu0 0
        %1436 = vmatprep.subr.bf16.mxu0 0
        %1437 = vmatpush1.bf16.msra.mxu0 0
        %1438 = vmatprep.subr.bf16.mxu0 0
        %1439 = vmatpush1.bf16.msra.mxu0 0
        %1440 = vmatprep.subr.bf16.mxu0 0
        %1441 = vmatpush1.bf16.msra.mxu0 0
        %1442 = vmatprep.subr.bf16.mxu0 0
        %1443 = vmatpush1.bf16.msra.mxu0 0
        %1444 = vmatprep.subr.bf16.mxu0 0
        %1445 = vmatpush1.bf16.msra.mxu0 0
        %1446 = vmatprep.subr.bf16.mxu0 0
        %1447 = vmatpush1.bf16.msra.mxu0 0
        %1448 = vmatprep.mubr.bf16.mxu0 0
        %1449 = vmatmul.mubr.bf16.gmra.mrb[0].mxu0 %v1351
        %v1450 = vpop.f32.mrb[0].mxu0
        %v1451 = vadd.f32 0.0, %v1450
        %v1452 = vpop.f32.mrb[0].mxu0
        %v1453 = vpop.f32.mrb[0].mxu0
        %v1454 = vpop.f32.mrb[0].mxu0
        %1455 = vdwg.mxu0
        %v1456 = vadd.f32 %v1253, %v1451
        %v1457 = vld [vmem:[#allocation22] sm:$0x1]
        %v1459 = vlaneseq
        %v1460 = vshrl.u32 %v1459, 7
        %v1461 = vsub.s32 0, %v1460
        %v1462 = vrot.slane %v1457, %v1461
        %v1464 = vadd.f32 %v1456, %v1462
        %1465 = vst.msk [vmem:[%s613] sm:$0xff] %vm618, %v1464
        %s1466 = sand.u32 %s322, 1
        %s1467 = scalar_lea.sflag [#allocation4], %s1466
        %s1468 = sand.u32 %s322, 1
        %s1469 = smul.addr %s1468, 8
        %s1470 = scalar_lea.vmem [#allocation23], %s1469
        // Predicated region
        $region125: #{tpu_custom_call.1} parent=71 // pred_check
          %p1471 = pneg %p332
        $region126: #{tpu_custom_call.1} parent=71 // pred_check_branch
          %1473 = sbr.rel (%p1471) target = $region128
        $region127: #{tpu_custom_call.1} parent=71 // pred_region
          %s1475 = ssub.s32 128, 128
          %1476 = vsyncadd %s1467, %s1475
          %s1477 = smul.addr %s36, 128
          %s1478 = scalar_lea.hbm %s13, %s1477
          %s1480 = sshll.u32 %s1470, 4
          %s1481 = int_to_ptr.vmem [resolvable:$true] %s1480
          %1483 = dma.vmem_to_hbm [thread:$0]  %s1481, 128, %s1478, %s1467
        $region128: #{tpu_custom_call.1} parent=71 // pred_fallthru
          _
      $region72: #{tpu_custom_call.1} parent=5 // pred_fallthru
        _
      %p1484 = scmp.le.s32.totalorder 2, %s31
      // Predicated region
      $region129: #{tpu_custom_call.1} parent=5 // pred_check
        %p1485 = pneg %p1484
      $region130: #{tpu_custom_call.1} parent=5 // pred_check_branch
        %1487 = sbr.rel (%p1485) target = $region132
      $region131: #{tpu_custom_call.1} parent=5 // pred_region
        %s1488 = ssub.s32 %s31, 2
        // Predicated region
        $region133: #{tpu_custom_call.1} parent=131 // pred_check
          %p1489 = pneg %p338
        $region134: #{tpu_custom_call.1} parent=131 // pred_check_branch
          %1491 = sbr.rel (%p1489) target = $region136
        $region135: #{tpu_custom_call.1} parent=131 // pred_region
          %s1492 = sand.u32 %s323, 1
          %s1493 = scalar_lea.sflag [#allocation4], %s1492
          %s1494 = sand.u32 %s323, 1
          %s1495 = smul.addr %s1494, 8
          %s1496 = scalar_lea.vmem [#allocation23], %s1495
          %1497 = dma.done %s1493, 128
        $region136: #{tpu_custom_call.1} parent=131 // pred_fallthru
          _
      $region132: #{tpu_custom_call.1} parent=5 // pred_fallthru
        _
    $region6: #{tpu_custom_call.1} parent=1 // loop_footer
      %s35 = sadd.s32 1, %s31
    $region7: #{tpu_custom_call.1} parent=1 // loop_footer_branch
      %30 = sbr.rel target = $region3
    $region8: #{tpu_custom_call.1} parent=1 // loop_exit
      _
    %1498 = vsyncpa [#allocation3], 1
    %s1499 = scalar_lea.sflag [#allocation3], 1
    %1500 = vsyncpa %s1499, 1
    %1501 = vsyncpa [#allocation6], 1
    %1502 = vsyncpa [#allocation9], 1
    %1503 = vsyncpa [#allocation12], 1
    %1504 = vsyncpa [#allocation15], 1
    %1505 = vsyncpa [#allocation18], 1
    %1506 = vsyncpa [#allocation21], 1
    %1507 = vsyncpa [#allocation4], 1
    %s1508 = scalar_lea.sflag [#allocation4], 1
    %1509 = vsyncpa %s1508, 1

// kernel: tpu_custom_call.1
$region0: #{tpu_custom_call.1}
  #allocation0 [shape = 'u32[]', space=smem, size = 0x4, offset = 0x4, fixed_abs, tag = 'smem constant byte address 0x4 - core index']
  #allocation1 [shape = 'u32[144,128]{1,0:T(1,128)}', space=vmem, size = 0x12000, scoped, tag = 'internal scratch']
  %s0 = inlined_call_operand.hbm [shape: f32[16,32], index: 0, kind: input, shape index: {}]
  %s1 = inlined_call_operand.hbm [shape: f32[1,32], index: 1, kind: input, shape index: {}]
  %s2 = inlined_call_operand.hbm [shape: f32[1,32], index: 2, kind: input, shape index: {}]
  %s3 = inlined_call_operand.hbm [shape: bf16[32,96], index: 3, kind: input, shape index: {}]
  %s4 = inlined_call_operand.hbm [shape: f32[1,96], index: 4, kind: input, shape index: {}]
  %s5 = inlined_call_operand.hbm [shape: bf16[32,32], index: 5, kind: input, shape index: {}]
  %s6 = inlined_call_operand.hbm [shape: f32[1,32], index: 6, kind: input, shape index: {}]
  %s7 = inlined_call_operand.hbm [shape: f32[1,32], index: 7, kind: input, shape index: {}]
  %s8 = inlined_call_operand.hbm [shape: f32[1,32], index: 8, kind: input, shape index: {}]
  %s9 = inlined_call_operand.hbm [shape: bf16[32,128], index: 9, kind: input, shape index: {}]
  %s10 = inlined_call_operand.hbm [shape: f32[1,128], index: 10, kind: input, shape index: {}]
  %s11 = inlined_call_operand.hbm [shape: bf16[128,32], index: 11, kind: input, shape index: {}]
  %s12 = inlined_call_operand.hbm [shape: f32[1,32], index: 12, kind: input, shape index: {}]
  %s13 = inlined_call_operand.hbm [shape: f32[16,32], index: 13, kind: output, shape index: {}]
  %s14 = sld [smem:[#allocation0]]
  $region137: #{tpu_custom_call.1} parent=0
    _
  %s16 = ssub.s32 1, %s14
  %s17 = scalar_select 0, %s16, %s14
  $region1: #{tpu_custom_call.1} parent=0
    #allocation2 [shape = 'u8[8192]{0}', space=vmem, size = 0x2000, scoped, tag = 'input window, operand 0']
    #allocation3 [shape = 's32[2]{0}', space=sflag, size = 0x8, scoped, tag = 'scoped memory for tpu_custom_call.1']
    #allocation4 [shape = 's32[2]{0}', space=sflag, size = 0x8, scoped, tag = 'scoped memory for tpu_custom_call.1']
    #allocation5 [shape = 'u8[512]{0}', space=vmem, size = 0x400, scoped, tag = 'input window, operand 1, single buffered']
    #allocation6 [shape = 's32[1]{0}', space=sflag, size = 0x4, scoped, tag = 'scoped memory for tpu_custom_call.1']
    #allocation7 [shape = 'u8[512]{0}', space=vmem, size = 0x400, scoped, tag = 'input window, operand 2, single buffered']
    #allocation8 [shape = 'u8[8192]{0}', space=vmem, size = 0x2000, scoped, tag = 'input window, operand 3, single buffered']
    #allocation9 [shape = 's32[1]{0}', space=sflag, size = 0x4, scoped, tag = 'scoped memory for tpu_custom_call.1']
    #allocation10 [shape = 'u8[512]{0}', space=vmem, size = 0x400, scoped, tag = 'input window, operand 4, single buffered']
    #allocation11 [shape = 'u8[8192]{0}', space=vmem, size = 0x2000, scoped, tag = 'input window, operand 5, single buffered']
    #allocation12 [shape = 's32[1]{0}', space=sflag, size = 0x4, scoped, tag = 'scoped memory for tpu_custom_call.1']
    #allocation13 [shape = 'u8[512]{0}', space=vmem, size = 0x400, scoped, tag = 'input window, operand 6, single buffered']
    #allocation14 [shape = 'u8[512]{0}', space=vmem, size = 0x400, scoped, tag = 'input window, operand 7, single buffered']
    #allocation15 [shape = 's32[1]{0}', space=sflag, size = 0x4, scoped, tag = 'scoped memory for tpu_custom_call.1']
    #allocation16 [shape = 'u8[512]{0}', space=vmem, size = 0x400, scoped, tag = 'input window, operand 8, single buffered']
    #allocation17 [shape = 'u8[8192]{0}', space=vmem, size = 0x2000, scoped, tag = 'input window, operand 9, single buffered']
    #allocation18 [shape = 's32[1]{0}', space=sflag, size = 0x4, scoped, tag = 'scoped memory for tpu_custom_call.1']
    #allocation19 [shape = 'u8[512]{0}', space=vmem, size = 0x400, scoped, tag = 'input window, operand 10, single buffered']
    #allocation20 [shape = 'u8[32768]{0}', space=vmem, size = 0x8000, scoped, tag = 'input window, operand 11, single buffered']
    #allocation21 [shape = 's32[1]{0}', space=sflag, size = 0x4, scoped, tag = 'scoped memory for tpu_custom_call.1']
    #allocation22 [shape = 'u8[512]{0}', space=vmem, size = 0x400, scoped, tag = 'input window, operand 12, single buffered']
    #allocation23 [shape = 'u8[8192]{0}', space=vmem, size = 0x2000, scoped, tag = 'output window, operand 0']
    %18 = vsyncpa [#allocation3], 0
    %s19 = scalar_lea.sflag [#allocation3], 1
    %20 = vsyncpa %s19, 0
    %21 = vsyncpa [#allocation6], 0
    %22 = vsyncpa [#allocation9], 0
    %23 = vsyncpa [#allocation12], 0
    %24 = vsyncpa [#allocation15], 0
    %25 = vsyncpa [#allocation18], 0
    %26 = vsyncpa [#allocation21], 0
    %27 = vsyncpa [#allocation4], 0
    %s28 = scalar_lea.sflag [#allocation4], 1
    %29 = vsyncpa %s28, 0
    loop: start=0, step=1, limit=4
    $region2: #{tpu_custom_call.1} parent=1 // loop_pre_header
      _
    $region3: #{tpu_custom_call.1} parent=1 // loop_header
      %s31 = sphi 0, %s35
      %p32 = scmp.ge.s32.totalorder %s31, 4
      %s41 = sphi 0, %s43
      %s44 = sphi 0, %s41
      %s45 = sphi 0, %s44
      %s61 = sphi 0, %s45
      %s65 = sphi 0, %s65
      %s67 = sphi 0, %s65
      %s68 = sphi 0, %s67
      %s82 = sphi 0, %s68
      %s86 = sphi 0, %s86
      %s88 = sphi 0, %s86
      %s89 = sphi 0, %s88
      %s103 = sphi 0, %s89
      %s107 = sphi 0, %s107
      %s109 = sphi 0, %s107
      %s110 = sphi 0, %s109
      %s124 = sphi 0, %s110
      %s128 = sphi 0, %s128
      %s130 = sphi 0, %s128
      %s131 = sphi 0, %s130
      %s145 = sphi 0, %s131
      %s149 = sphi 0, %s149
      %s151 = sphi 0, %s149
      %s152 = sphi 0, %s151
      %s166 = sphi 0, %s152
      %s170 = sphi 0, %s170
      %s172 = sphi 0, %s170
      %s173 = sphi 0, %s172
      %s187 = sphi 0, %s173
      %s191 = sphi 0, %s191
      %s193 = sphi 0, %s191
      %s194 = sphi 0, %s193
      %s208 = sphi 0, %s194
      %s212 = sphi 0, %s212
      %s214 = sphi 0, %s212
      %s215 = sphi 0, %s214
      %s229 = sphi 0, %s215
      %s233 = sphi 0, %s233
      %s235 = sphi 0, %s233
      %s236 = sphi 0, %s235
      %s250 = sphi 0, %s236
      %s254 = sphi 0, %s254
      %s256 = sphi 0, %s254
      %s257 = sphi 0, %s256
      %s271 = sphi 0, %s257
      %s275 = sphi 0, %s275
      %s277 = sphi 0, %s275
      %s278 = sphi 0, %s277
      %s292 = sphi 0, %s278
      %s296 = sphi 0, %s296
      %s298 = sphi 0, %s296
      %s299 = sphi 0, %s298
      %s313 = sphi 0, %s299
      %s319 = sphi 0, %s321
      %s322 = sphi 0, %s319
      %s323 = sphi 0, %s322
      %s339 = sphi 0, %s323
    $region4: #{tpu_custom_call.1} parent=1 // loop_header_branch
      %34 = sbr.rel (%p32) target = $region8
    $region5: #{tpu_custom_call.1} parent=1 // loop_body
      %s36 = ssub.s32 %s31, 1
      %s37 = ssub.s32 %s31, 2
      %s38 = sadd.s32 %s31, 1
      %s39 = ssub.s32 %s31, %s38
      %p40 = scmp.eq.s32.totalorder %s39, 0
      %s42 = sadd.s32 %s41, 1
      %s43 = scalar_select %p40, %s41, %s42
      %p46 = pneg %p40
      %p47 = scmp.eq.s32.totalorder %s31, 1
      %p48 = por %p46, %p47
      %p49 = scmp.ne.s32.totalorder %s41, %s44
      %p50 = scmp.eq.s32.totalorder %s31, 0
      %p51 = por %p49, %p50
      %p52 = scmp.ne.s32.totalorder %s41, %s44
      %p53 = scmp.eq.s32.totalorder %s36, 1
      %p54 = por %p52, %p53
      %p55 = scmp.ne.s32.totalorder %s44, %s45
      %p56 = scmp.eq.s32.totalorder %s36, 0
      %p57 = por %p55, %p56
      %p58 = scmp.ne.s32.totalorder %s44, %s45
      %p59 = scmp.eq.s32.totalorder %s37, 1
      %p60 = por %p58, %p59
      %p62 = scmp.ne.s32.totalorder %s45, %s61
      %p63 = scmp.eq.s32.totalorder %s37, 0
      %p64 = por %p62, %p63
      %s66 = sadd.s32 %s65, 1
      %p69 = scmp.eq.s32.totalorder %s31, 1
      %p70 = scmp.ne.s32.totalorder %s65, %s67
      %p71 = scmp.eq.s32.totalorder %s31, 0
      %p72 = por %p70, %p71
      %p73 = scmp.ne.s32.totalorder %s65, %s67
      %p74 = scmp.eq.s32.totalorder %s36, 1
      %p75 = por %p73, %p74
      %p76 = scmp.ne.s32.totalorder %s67, %s68
      %p77 = scmp.eq.s32.totalorder %s36, 0
      %p78 = por %p76, %p77
      %p79 = scmp.ne.s32.totalorder %s67, %s68
      %p80 = scmp.eq.s32.totalorder %s37, 1
      %p81 = por %p79, %p80
      %p83 = scmp.ne.s32.totalorder %s68, %s82
      %p84 = scmp.eq.s32.totalorder %s37, 0
      %p85 = por %p83, %p84
      %s87 = sadd.s32 %s86, 1
      %p90 = scmp.eq.s32.totalorder %s31, 1
      %p91 = scmp.ne.s32.totalorder %s86, %s88
      %p92 = scmp.eq.s32.totalorder %s31, 0
      %p93 = por %p91, %p92
      %p94 = scmp.ne.s32.totalorder %s86, %s88
      %p95 = scmp.eq.s32.totalorder %s36, 1
      %p96 = por %p94, %p95
      %p97 = scmp.ne.s32.totalorder %s88, %s89
      %p98 = scmp.eq.s32.totalorder %s36, 0
      %p99 = por %p97, %p98
      %p100 = scmp.ne.s32.totalorder %s88, %s89
      %p101 = scmp.eq.s32.totalorder %s37, 1
      %p102 = por %p100, %p101
      %p104 = scmp.ne.s32.totalorder %s89, %s103
      %p105 = scmp.eq.s32.totalorder %s37, 0
      %p106 = por %p104, %p105
      %s108 = sadd.s32 %s107, 1
      %p111 = scmp.eq.s32.totalorder %s31, 1
      %p112 = scmp.ne.s32.totalorder %s107, %s109
      %p113 = scmp.eq.s32.totalorder %s31, 0
      %p114 = por %p112, %p113
      %p115 = scmp.ne.s32.totalorder %s107, %s109
      %p116 = scmp.eq.s32.totalorder %s36, 1
      %p117 = por %p115, %p116
      %p118 = scmp.ne.s32.totalorder %s109, %s110
      %p119 = scmp.eq.s32.totalorder %s36, 0
      %p120 = por %p118, %p119
      %p121 = scmp.ne.s32.totalorder %s109, %s110
      %p122 = scmp.eq.s32.totalorder %s37, 1
      %p123 = por %p121, %p122
      %p125 = scmp.ne.s32.totalorder %s110, %s124
      %p126 = scmp.eq.s32.totalorder %s37, 0
      %p127 = por %p125, %p126
      %s129 = sadd.s32 %s128, 1
      %p132 = scmp.eq.s32.totalorder %s31, 1
      %p133 = scmp.ne.s32.totalorder %s128, %s130
      %p134 = scmp.eq.s32.totalorder %s31, 0
      %p135 = por %p133, %p134
      %p136 = scmp.ne.s32.totalorder %s128, %s130
      %p137 = scmp.eq.s32.totalorder %s36, 1
      %p138 = por %p136, %p137
      %p139 = scmp.ne.s32.totalorder %s130, %s131
      %p140 = scmp.eq.s32.totalorder %s36, 0
      %p141 = por %p139, %p140
      %p142 = scmp.ne.s32.totalorder %s130, %s131
      %p143 = scmp.eq.s32.totalorder %s37, 1
      %p144 = por %p142, %p143
      %p146 = scmp.ne.s32.totalorder %s131, %s145
      %p147 = scmp.eq.s32.totalorder %s37, 0
      %p148 = por %p146, %p147
      %s150 = sadd.s32 %s149, 1
      %p153 = scmp.eq.s32.totalorder %s31, 1
      %p154 = scmp.ne.s32.totalorder %s149, %s151
      %p155 = scmp.eq.s32.totalorder %s31, 0
      %p156 = por %p154, %p155
      %p157 = scmp.ne.s32.totalorder %s149, %s151
      %p158 = scmp.eq.s32.totalorder %s36, 1
      %p159 = por %p157, %p158
      %p160 = scmp.ne.s32.totalorder %s151, %s152
      %p161 = scmp.eq.s32.totalorder %s36, 0
      %p162 = por %p160, %p161
      %p163 = scmp.ne.s32.totalorder %s151, %s152
      %p164 = scmp.eq.s32.totalorder %s37, 1
      %p165 = por %p163, %p164
      %p167 = scmp.ne.s32.totalorder %s152, %s166
      %p168 = scmp.eq.s32.totalorder %s37, 0
      %p169 = por %p167, %p168
      %s171 = sadd.s32 %s170, 1
      %p174 = scmp.eq.s32.totalorder %s31, 1
      %p175 = scmp.ne.s32.totalorder %s170, %s172
      %p176 = scmp.eq.s32.totalorder %s31, 0
      %p177 = por %p175, %p176
      %p178 = scmp.ne.s32.totalorder %s170, %s172
      %p179 = scmp.eq.s32.totalorder %s36, 1
      %p180 = por %p178, %p179
      %p181 = scmp.ne.s32.totalorder %s172, %s173
      %p182 = scmp.eq.s32.totalorder %s36, 0
      %p183 = por %p181, %p182
      %p184 = scmp.ne.s32.totalorder %s172, %s173
      %p185 = scmp.eq.s32.totalorder %s37, 1
      %p186 = por %p184, %p185
      %p188 = scmp.ne.s32.totalorder %s173, %s187
      %p189 = scmp.eq.s32.totalorder %s37, 0
      %p190 = por %p188, %p189
      %s192 = sadd.s32 %s191, 1
      %p195 = scmp.eq.s32.totalorder %s31, 1
      %p196 = scmp.ne.s32.totalorder %s191, %s193
      %p197 = scmp.eq.s32.totalorder %s31, 0
      %p198 = por %p196, %p197
      %p199 = scmp.ne.s32.totalorder %s191, %s193
      %p200 = scmp.eq.s32.totalorder %s36, 1
      %p201 = por %p199, %p200
      %p202 = scmp.ne.s32.totalorder %s193, %s194
      %p203 = scmp.eq.s32.totalorder %s36, 0
      %p204 = por %p202, %p203
      %p205 = scmp.ne.s32.totalorder %s193, %s194
      %p206 = scmp.eq.s32.totalorder %s37, 1
      %p207 = por %p205, %p206
      %p209 = scmp.ne.s32.totalorder %s194, %s208
      %p210 = scmp.eq.s32.totalorder %s37, 0
      %p211 = por %p209, %p210
      %s213 = sadd.s32 %s212, 1
      %p216 = scmp.eq.s32.totalorder %s31, 1
      %p217 = scmp.ne.s32.totalorder %s212, %s214
      %p218 = scmp.eq.s32.totalorder %s31, 0
      %p219 = por %p217, %p218
      %p220 = scmp.ne.s32.totalorder %s212, %s214
      %p221 = scmp.eq.s32.totalorder %s36, 1
      %p222 = por %p220, %p221
      %p223 = scmp.ne.s32.totalorder %s214, %s215
      %p224 = scmp.eq.s32.totalorder %s36, 0
      %p225 = por %p223, %p224
      %p226 = scmp.ne.s32.totalorder %s214, %s215
      %p227 = scmp.eq.s32.totalorder %s37, 1
      %p228 = por %p226, %p227
      %p230 = scmp.ne.s32.totalorder %s215, %s229
      %p231 = scmp.eq.s32.totalorder %s37, 0
      %p232 = por %p230, %p231
      %s234 = sadd.s32 %s233, 1
      %p237 = scmp.eq.s32.totalorder %s31, 1
      %p238 = scmp.ne.s32.totalorder %s233, %s235
      %p239 = scmp.eq.s32.totalorder %s31, 0
      %p240 = por %p238, %p239
      %p241 = scmp.ne.s32.totalorder %s233, %s235
      %p242 = scmp.eq.s32.totalorder %s36, 1
      %p243 = por %p241, %p242
      %p244 = scmp.ne.s32.totalorder %s235, %s236
      %p245 = scmp.eq.s32.totalorder %s36, 0
      %p246 = por %p244, %p245
      %p247 = scmp.ne.s32.totalorder %s235, %s236
      %p248 = scmp.eq.s32.totalorder %s37, 1
      %p249 = por %p247, %p248
      %p251 = scmp.ne.s32.totalorder %s236, %s250
      %p252 = scmp.eq.s32.totalorder %s37, 0
      %p253 = por %p251, %p252
      %s255 = sadd.s32 %s254, 1
      %p258 = scmp.eq.s32.totalorder %s31, 1
      %p259 = scmp.ne.s32.totalorder %s254, %s256
      %p260 = scmp.eq.s32.totalorder %s31, 0
      %p261 = por %p259, %p260
      %p262 = scmp.ne.s32.totalorder %s254, %s256
      %p263 = scmp.eq.s32.totalorder %s36, 1
      %p264 = por %p262, %p263
      %p265 = scmp.ne.s32.totalorder %s256, %s257
      %p266 = scmp.eq.s32.totalorder %s36, 0
      %p267 = por %p265, %p266
      %p268 = scmp.ne.s32.totalorder %s256, %s257
      %p269 = scmp.eq.s32.totalorder %s37, 1
      %p270 = por %p268, %p269
      %p272 = scmp.ne.s32.totalorder %s257, %s271
      %p273 = scmp.eq.s32.totalorder %s37, 0
      %p274 = por %p272, %p273
      %s276 = sadd.s32 %s275, 1
      %p279 = scmp.eq.s32.totalorder %s31, 1
      %p280 = scmp.ne.s32.totalorder %s275, %s277
      %p281 = scmp.eq.s32.totalorder %s31, 0
      %p282 = por %p280, %p281
      %p283 = scmp.ne.s32.totalorder %s275, %s277
      %p284 = scmp.eq.s32.totalorder %s36, 1
      %p285 = por %p283, %p284
      %p286 = scmp.ne.s32.totalorder %s277, %s278
      %p287 = scmp.eq.s32.totalorder %s36, 0
      %p288 = por %p286, %p287
      %p289 = scmp.ne.s32.totalorder %s277, %s278
      %p290 = scmp.eq.s32.totalorder %s37, 1
      %p291 = por %p289, %p290
      %p293 = scmp.ne.s32.totalorder %s278, %s292
      %p294 = scmp.eq.s32.totalorder %s37, 0
      %p295 = por %p293, %p294
      %s297 = sadd.s32 %s296, 1
      %p300 = scmp.eq.s32.totalorder %s31, 1
      %p301 = scmp.ne.s32.totalorder %s296, %s298
      %p302 = scmp.eq.s32.totalorder %s31, 0
      %p303 = por %p301, %p302
      %p304 = scmp.ne.s32.totalorder %s296, %s298
      %p305 = scmp.eq.s32.totalorder %s36, 1
      %p306 = por %p304, %p305
      %p307 = scmp.ne.s32.totalorder %s298, %s299
      %p308 = scmp.eq.s32.totalorder %s36, 0
      %p309 = por %p307, %p308
      %p310 = scmp.ne.s32.totalorder %s298, %s299
      %p311 = scmp.eq.s32.totalorder %s37, 1
      %p312 = por %p310, %p311
      %p314 = scmp.ne.s32.totalorder %s299, %s313
      %p315 = scmp.eq.s32.totalorder %s37, 0
      %p316 = por %p314, %p315
      %s317 = ssub.s32 %s31, %s38
      %p318 = scmp.eq.s32.totalorder %s317, 0
      %s320 = sadd.s32 %s319, 1
      %s321 = scalar_select %p318, %s319, %s320
      %p324 = pneg %p318
      %p325 = scmp.eq.s32.totalorder %s31, 1
      %p326 = por %p324, %p325
      %p327 = scmp.ne.s32.totalorder %s319, %s322
      %p328 = scmp.eq.s32.totalorder %s31, 0
      %p329 = por %p327, %p328
      %p330 = scmp.ne.s32.totalorder %s319, %s322
      %p331 = scmp.eq.s32.totalorder %s36, 1
      %p332 = por %p330, %p331
      %p333 = scmp.ne.s32.totalorder %s322, %s323
      %p334 = scmp.eq.s32.totalorder %s36, 0
      %p335 = por %p333, %p334
      %p336 = scmp.ne.s32.totalorder %s322, %s323
      %p337 = scmp.eq.s32.totalorder %s37, 1
      %p338 = por %p336, %p337
      %p340 = scmp.ne.s32.totalorder %s323, %s339
      %p341 = scmp.eq.s32.totalorder %s37, 0
      %p342 = por %p340, %p341
      %p343 = scmp.le.s32.totalorder 1, %s31
      %p344 = scmp.lt.s32.totalorder %s31, 3
      %p345 = pnand %p343, %p344
      %p346 = pneg %p345
      // Predicated region
      $region9: #{tpu_custom_call.1} parent=5 // pred_check
        _
      $region10: #{tpu_custom_call.1} parent=5 // pred_check_branch
        %348 = sbr.rel (%p345) target = $region12
      $region11: #{tpu_custom_call.1} parent=5 // pred_region
        %s349 = ssub.s32 %s31, 1
        // Predicated region
        $region13: #{tpu_custom_call.1} parent=11 // pred_check
          %p350 = pneg %p78
        $region14: #{tpu_custom_call.1} parent=11 // pred_check_branch
          %352 = sbr.rel (%p350) target = $region16
        $region15: #{tpu_custom_call.1} parent=11 // pred_region
          %s354 = ssub.s32 16, 16
          %355 = vsyncadd [#allocation6], %s354
          %s357 = sshll.u32 [#allocation5], 4
          %s358 = int_to_ptr.vmem [resolvable:$true] %s357
          %360 = dma.hbm_to_vmem [thread:$0]  %s1, 16, %s358, [#allocation6]
        $region16: #{tpu_custom_call.1} parent=11 // pred_fallthru
          _
        // Predicated region
        $region17: #{tpu_custom_call.1} parent=11 // pred_check
          %p361 = pneg %p99
        $region18: #{tpu_custom_call.1} parent=11 // pred_check_branch
          %363 = sbr.rel (%p361) target = $region20
        $region19: #{tpu_custom_call.1} parent=11 // pred_region
          %s365 = ssub.s32 16, 16
          %366 = vsyncadd [#allocation6], %s365
          %s368 = sshll.u32 [#allocation7], 4
          %s369 = int_to_ptr.vmem [resolvable:$true] %s368
          %371 = dma.hbm_to_vmem [thread:$0]  %s2, 16, %s369, [#allocation6]
        $region20: #{tpu_custom_call.1} parent=11 // pred_fallthru
          _
        // Predicated region
        $region21: #{tpu_custom_call.1} parent=11 // pred_check
          %p372 = pneg %p120
        $region22: #{tpu_custom_call.1} parent=11 // pred_check_branch
          %374 = sbr.rel (%p372) target = $region24
        $region23: #{tpu_custom_call.1} parent=11 // pred_region
          %s376 = ssub.s32 256, 256
          %377 = vsyncadd [#allocation9], %s376
          %s378 = sshll.u32 [#allocation8], 4
          %s379 = int_to_ptr.vmem [resolvable:$true] %s378
          %384 = dma.hbm_to_vmem [thread:$0]  %s3, 256, %s379, [#allocation9], 64, 64, 4
        $region24: #{tpu_custom_call.1} parent=11 // pred_fallthru
          _
        // Predicated region
        $region25: #{tpu_custom_call.1} parent=11 // pred_check
          %p385 = pneg %p141
        $region26: #{tpu_custom_call.1} parent=11 // pred_check_branch
          %387 = sbr.rel (%p385) target = $region28
        $region27: #{tpu_custom_call.1} parent=11 // pred_region
          %s389 = ssub.s32 16, 16
          %390 = vsyncadd [#allocation9], %s389
          %s392 = sshll.u32 [#allocation10], 4
          %s393 = int_to_ptr.vmem [resolvable:$true] %s392
          %395 = dma.hbm_to_vmem [thread:$0]  %s4, 16, %s393, [#allocation9]
        $region28: #{tpu_custom_call.1} parent=11 // pred_fallthru
          _
        // Predicated region
        $region29: #{tpu_custom_call.1} parent=11 // pred_check
          %p396 = pneg %p162
        $region30: #{tpu_custom_call.1} parent=11 // pred_check_branch
          %398 = sbr.rel (%p396) target = $region32
        $region31: #{tpu_custom_call.1} parent=11 // pred_region
          %s400 = ssub.s32 256, 256
          %401 = vsyncadd [#allocation12], %s400
          %s402 = sshll.u32 [#allocation11], 4
          %s403 = int_to_ptr.vmem [resolvable:$true] %s402
          %408 = dma.hbm_to_vmem [thread:$0]  %s5, 256, %s403, [#allocation12], 64, 64, 4
        $region32: #{tpu_custom_call.1} parent=11 // pred_fallthru
          _
        // Predicated region
        $region33: #{tpu_custom_call.1} parent=11 // pred_check
          %p409 = pneg %p183
        $region34: #{tpu_custom_call.1} parent=11 // pred_check_branch
          %411 = sbr.rel (%p409) target = $region36
        $region35: #{tpu_custom_call.1} parent=11 // pred_region
          %s413 = ssub.s32 16, 16
          %414 = vsyncadd [#allocation12], %s413
          %s416 = sshll.u32 [#allocation13], 4
          %s417 = int_to_ptr.vmem [resolvable:$true] %s416
          %419 = dma.hbm_to_vmem [thread:$0]  %s6, 16, %s417, [#allocation12]
        $region36: #{tpu_custom_call.1} parent=11 // pred_fallthru
          _
        // Predicated region
        $region37: #{tpu_custom_call.1} parent=11 // pred_check
          %p420 = pneg %p204
        $region38: #{tpu_custom_call.1} parent=11 // pred_check_branch
          %422 = sbr.rel (%p420) target = $region40
        $region39: #{tpu_custom_call.1} parent=11 // pred_region
          %s424 = ssub.s32 16, 16
          %425 = vsyncadd [#allocation15], %s424
          %s427 = sshll.u32 [#allocation14], 4
          %s428 = int_to_ptr.vmem [resolvable:$true] %s427
          %430 = dma.hbm_to_vmem [thread:$0]  %s7, 16, %s428, [#allocation15]
        $region40: #{tpu_custom_call.1} parent=11 // pred_fallthru
          _
        // Predicated region
        $region41: #{tpu_custom_call.1} parent=11 // pred_check
          %p431 = pneg %p225
        $region42: #{tpu_custom_call.1} parent=11 // pred_check_branch
          %433 = sbr.rel (%p431) target = $region44
        $region43: #{tpu_custom_call.1} parent=11 // pred_region
          %s435 = ssub.s32 16, 16
          %436 = vsyncadd [#allocation15], %s435
          %s438 = sshll.u32 [#allocation16], 4
          %s439 = int_to_ptr.vmem [resolvable:$true] %s438
          %441 = dma.hbm_to_vmem [thread:$0]  %s8, 16, %s439, [#allocation15]
        $region44: #{tpu_custom_call.1} parent=11 // pred_fallthru
          _
        // Predicated region
        $region45: #{tpu_custom_call.1} parent=11 // pred_check
          %p442 = pneg %p246
        $region46: #{tpu_custom_call.1} parent=11 // pred_check_branch
          %444 = sbr.rel (%p442) target = $region48
        $region47: #{tpu_custom_call.1} parent=11 // pred_region
          %s446 = ssub.s32 256, 256
          %447 = vsyncadd [#allocation18], %s446
          %s448 = sshll.u32 [#allocation17], 4
          %s449 = int_to_ptr.vmem [resolvable:$true] %s448
          %454 = dma.hbm_to_vmem [thread:$0]  %s9, 256, %s449, [#allocation18], 64, 64, 4
        $region48: #{tpu_custom_call.1} parent=11 // pred_fallthru
          _
        // Predicated region
        $region49: #{tpu_custom_call.1} parent=11 // pred_check
          %p455 = pneg %p267
        $region50: #{tpu_custom_call.1} parent=11 // pred_check_branch
          %457 = sbr.rel (%p455) target = $region52
        $region51: #{tpu_custom_call.1} parent=11 // pred_region
          %s459 = ssub.s32 16, 16
          %460 = vsyncadd [#allocation18], %s459
          %s462 = sshll.u32 [#allocation19], 4
          %s463 = int_to_ptr.vmem [resolvable:$true] %s462
          %465 = dma.hbm_to_vmem [thread:$0]  %s10, 16, %s463, [#allocation18]
        $region52: #{tpu_custom_call.1} parent=11 // pred_fallthru
          _
        // Predicated region
        $region53: #{tpu_custom_call.1} parent=11 // pred_check
          %p466 = pneg %p288
        $region54: #{tpu_custom_call.1} parent=11 // pred_check_branch
          %468 = sbr.rel (%p466) target = $region56
        $region55: #{tpu_custom_call.1} parent=11 // pred_region
          %s470 = ssub.s32 1024, 1024
          %471 = vsyncadd [#allocation21], %s470
          %s472 = sshll.u32 [#allocation20], 4
          %s473 = int_to_ptr.vmem [resolvable:$true] %s472
          %478 = dma.hbm_to_vmem [thread:$0]  %s11, 1024, %s473, [#allocation21], 64, 64, 4
        $region56: #{tpu_custom_call.1} parent=11 // pred_fallthru
          _
        // Predicated region
        $region57: #{tpu_custom_call.1} parent=11 // pred_check
          %p479 = pneg %p309
        $region58: #{tpu_custom_call.1} parent=11 // pred_check_branch
          %481 = sbr.rel (%p479) target = $region60
        $region59: #{tpu_custom_call.1} parent=11 // pred_region
          %s483 = ssub.s32 16, 16
          %484 = vsyncadd [#allocation21], %s483
          %s486 = sshll.u32 [#allocation22], 4
          %s487 = int_to_ptr.vmem [resolvable:$true] %s486
          %489 = dma.hbm_to_vmem [thread:$0]  %s12, 16, %s487, [#allocation21]
        $region60: #{tpu_custom_call.1} parent=11 // pred_fallthru
          _
      $region12: #{tpu_custom_call.1} parent=5 // pred_fallthru
        _
      %p490 = scmp.lt.s32.totalorder %s31, 2
      // Predicated region
      $region61: #{tpu_custom_call.1} parent=5 // pred_check
        %p491 = pneg %p490
      $region62: #{tpu_custom_call.1} parent=5 // pred_check_branch
        %493 = sbr.rel (%p491) target = $region64
      $region63: #{tpu_custom_call.1} parent=5 // pred_region
        // Predicated region
        $region65: #{tpu_custom_call.1} parent=63 // pred_check
          %p494 = pneg %p51
        $region66: #{tpu_custom_call.1} parent=63 // pred_check_branch
          %496 = sbr.rel (%p494) target = $region68
        $region67: #{tpu_custom_call.1} parent=63 // pred_region
          %s497 = sand.u32 %s41, 1
          %s498 = scalar_lea.sflag [#allocation3], %s497
          %s499 = sand.u32 %s41, 1
          %s500 = smul.addr %s499, 8
          %s501 = scalar_lea.vmem [#allocation2], %s500
          %s503 = ssub.s32 128, 128
          %504 = vsyncadd %s498, %s503
          %s505 = smul.addr %s31, 128
          %s506 = scalar_lea.hbm %s0, %s505
          %s508 = sshll.u32 %s501, 4
          %s509 = int_to_ptr.vmem [resolvable:$true] %s508
          %511 = dma.hbm_to_vmem [thread:$0]  %s506, 128, %s509, %s498
        $region68: #{tpu_custom_call.1} parent=63 // pred_fallthru
          _
      $region64: #{tpu_custom_call.1} parent=5 // pred_fallthru
        _
      %p512 = scmp.le.s32.totalorder 1, %s31
      %p513 = scmp.lt.s32.totalorder %s31, 3
      %p514 = pnand %p512, %p513
      %p515 = pneg %p514
      // Predicated region
      $region69: #{tpu_custom_call.1} parent=5 // pred_check
        _
      $region70: #{tpu_custom_call.1} parent=5 // pred_check_branch
        %517 = sbr.rel (%p514) target = $region72
      $region71: #{tpu_custom_call.1} parent=5 // pred_region
        %s518 = ssub.s32 %s31, 1
        %s519 = sand.u32 %s44, 1
        %s520 = scalar_lea.sflag [#allocation3], %s519
        %s521 = sand.u32 %s44, 1
        %s522 = smul.addr %s521, 8
        %s523 = scalar_lea.vmem [#allocation2], %s522
        // Predicated region
        $region73: #{tpu_custom_call.1} parent=71 // pred_check
          %p524 = pneg %p57
        $region74: #{tpu_custom_call.1} parent=71 // pred_check_branch
          %526 = sbr.rel (%p524) target = $region76
        $region75: #{tpu_custom_call.1} parent=71 // pred_region
          %527 = dma.done %s520, 128
        $region76: #{tpu_custom_call.1} parent=71 // pred_fallthru
          _
        // Predicated region
        $region77: #{tpu_custom_call.1} parent=71 // pred_check
          %p528 = pneg %p78
        $region78: #{tpu_custom_call.1} parent=71 // pred_check_branch
          %530 = sbr.rel (%p528) target = $region80
        $region79: #{tpu_custom_call.1} parent=71 // pred_region
          %531 = dma.done [#allocation6], 16
        $region80: #{tpu_custom_call.1} parent=71 // pred_fallthru
          _
        // Predicated region
        $region81: #{tpu_custom_call.1} parent=71 // pred_check
          %p532 = pneg %p99
        $region82: #{tpu_custom_call.1} parent=71 // pred_check_branch
          %534 = sbr.rel (%p532) target = $region84
        $region83: #{tpu_custom_call.1} parent=71 // pred_region
          %535 = dma.done [#allocation6], 16
        $region84: #{tpu_custom_call.1} parent=71 // pred_fallthru
          _
        // Predicated region
        $region85: #{tpu_custom_call.1} parent=71 // pred_check
          %p536 = pneg %p120
        $region86: #{tpu_custom_call.1} parent=71 // pred_check_branch
          %538 = sbr.rel (%p536) target = $region88
        $region87: #{tpu_custom_call.1} parent=71 // pred_region
          %539 = dma.done [#allocation9], 256
        $region88: #{tpu_custom_call.1} parent=71 // pred_fallthru
          _
        // Predicated region
        $region89: #{tpu_custom_call.1} parent=71 // pred_check
          %p540 = pneg %p141
        $region90: #{tpu_custom_call.1} parent=71 // pred_check_branch
          %542 = sbr.rel (%p540) target = $region92
        $region91: #{tpu_custom_call.1} parent=71 // pred_region
          %543 = dma.done [#allocation9], 16
        $region92: #{tpu_custom_call.1} parent=71 // pred_fallthru
          _
        // Predicated region
        $region93: #{tpu_custom_call.1} parent=71 // pred_check
          %p544 = pneg %p162
        $region94: #{tpu_custom_call.1} parent=71 // pred_check_branch
          %546 = sbr.rel (%p544) target = $region96
        $region95: #{tpu_custom_call.1} parent=71 // pred_region
          %547 = dma.done [#allocation12], 256
        $region96: #{tpu_custom_call.1} parent=71 // pred_fallthru
          _
        // Predicated region
        $region97: #{tpu_custom_call.1} parent=71 // pred_check
          %p548 = pneg %p183
        $region98: #{tpu_custom_call.1} parent=71 // pred_check_branch
          %550 = sbr.rel (%p548) target = $region100
        $region99: #{tpu_custom_call.1} parent=71 // pred_region
          %551 = dma.done [#allocation12], 16
        $region100: #{tpu_custom_call.1} parent=71 // pred_fallthru
          _
        // Predicated region
        $region101: #{tpu_custom_call.1} parent=71 // pred_check
          %p552 = pneg %p204
        $region102: #{tpu_custom_call.1} parent=71 // pred_check_branch
          %554 = sbr.rel (%p552) target = $region104
        $region103: #{tpu_custom_call.1} parent=71 // pred_region
          %555 = dma.done [#allocation15], 16
        $region104: #{tpu_custom_call.1} parent=71 // pred_fallthru
          _
        // Predicated region
        $region105: #{tpu_custom_call.1} parent=71 // pred_check
          %p556 = pneg %p225
        $region106: #{tpu_custom_call.1} parent=71 // pred_check_branch
          %558 = sbr.rel (%p556) target = $region108
        $region107: #{tpu_custom_call.1} parent=71 // pred_region
          %559 = dma.done [#allocation15], 16
        $region108: #{tpu_custom_call.1} parent=71 // pred_fallthru
          _
        // Predicated region
        $region109: #{tpu_custom_call.1} parent=71 // pred_check
          %p560 = pneg %p246
        $region110: #{tpu_custom_call.1} parent=71 // pred_check_branch
          %562 = sbr.rel (%p560) target = $region112
        $region111: #{tpu_custom_call.1} parent=71 // pred_region
          %563 = dma.done [#allocation18], 256
        $region112: #{tpu_custom_call.1} parent=71 // pred_fallthru
          _
        // Predicated region
        $region113: #{tpu_custom_call.1} parent=71 // pred_check
          %p564 = pneg %p267
        $region114: #{tpu_custom_call.1} parent=71 // pred_check_branch
          %566 = sbr.rel (%p564) target = $region116
        $region115: #{tpu_custom_call.1} parent=71 // pred_region
          %567 = dma.done [#allocation18], 16
        $region116: #{tpu_custom_call.1} parent=71 // pred_fallthru
          _
        // Predicated region
        $region117: #{tpu_custom_call.1} parent=71 // pred_check
          %p568 = pneg %p288
        $region118: #{tpu_custom_call.1} parent=71 // pred_check_branch
          %570 = sbr.rel (%p568) target = $region120
        $region119: #{tpu_custom_call.1} parent=71 // pred_region
          %571 = dma.done [#allocation21], 1024
        $region120: #{tpu_custom_call.1} parent=71 // pred_fallthru
          _
        // Predicated region
        $region121: #{tpu_custom_call.1} parent=71 // pred_check
          %p572 = pneg %p309
        $region122: #{tpu_custom_call.1} parent=71 // pred_check_branch
          %574 = sbr.rel (%p572) target = $region124
        $region123: #{tpu_custom_call.1} parent=71 // pred_region
          %575 = dma.done [#allocation21], 16
        $region124: #{tpu_custom_call.1} parent=71 // pred_fallthru
          _
        %s576 = sand.u32 %s44, 1
        %s577 = scalar_lea.sflag [#allocation3], %s576
        %s578 = sand.u32 %s44, 1
        %s579 = smul.addr %s578, 8
        %s580 = scalar_lea.vmem [#allocation2], %s579
        %p581 = pneg %p57
        %p582 = pneg %p54
        %p583 = pneg %p78
        %p584 = pneg %p75
        %p585 = pneg %p99
        %p586 = pneg %p96
        %p587 = pneg %p120
        %p588 = pneg %p117
        %p589 = pneg %p141
        %p590 = pneg %p138
        %p591 = pneg %p162
        %p592 = pneg %p159
        %p593 = pneg %p183
        %p594 = pneg %p180
        %p595 = pneg %p204
        %p596 = pneg %p201
        %p597 = pneg %p225
        %p598 = pneg %p222
        %p599 = pneg %p246
        %p600 = pneg %p243
        %p601 = pneg %p267
        %p602 = pneg %p264
        %p603 = pneg %p288
        %p604 = pneg %p285
        %p605 = pneg %p309
        %p606 = pneg %p306
        %p607 = pneg %p335
        %p608 = pneg %p332
        %s609 = sand.u32 %s322, 1
        %s610 = scalar_lea.sflag [#allocation4], %s609
        %s611 = sand.u32 %s322, 1
        %s612 = smul.addr %s611, 8
        %s613 = scalar_lea.vmem [#allocation23], %s612
        %v615 = vld [vmem:[%s523] sm:$0xff]
        %v616 = vld [vmem:[#allocation5] sm:$0x1]
        %v617 = vld [vmem:[#allocation7] sm:$0x1]
        %vm618 = vcmask 261120
        %v619 = vsel %vm618, %v615, 0.0
        %620 = vadd.xlane.f32.xlu0 %v619
        %v621 = vpop.xlane.xlu0 %620
        %v622 = vrcp.pop 32.0
        %v623 = vmul.f32 %v621, %v622
        %v624 = vsub.f32 %v615, %v623
        %v625 = vmul.f32 %v624, %v624
        %v626 = vsel %vm618, %v625, 0.0
        %627 = vadd.xlane.f32.xlu0 %v626
        %v628 = vpop.xlane.xlu0 %627
        %v629 = vmul.f32 %v628, %v622
        %v630 = vadd.f32 %v629, 1e-05
        %v631 = vrsqrt.pop %v630
        %v632 = vmul.f32 %v624, %v631
        %v634 = vlaneseq
        %v635 = vshrl.u32 %v634, 7
        %v636 = vsub.s32 0, %v635
        %v637 = vrot.slane %v616, %v636
        %v639 = vmul.f32 %v632, %v637
        %v641 = vlaneseq
        %v642 = vshrl.u32 %v641, 7
        %v643 = vsub.s32 0, %v642
        %v644 = vrot.slane %v617, %v643
        %v646 = vadd.f32 %v639, %v644
        %v647 = vpack.c.bf16 %v646, %v646
        %v648 = vld [vmem:[#allocation8] sm:$0xf]
        %v649 = vld [vmem:[#allocation8 + $0x4] sm:$0xf]
        %v650 = vld [vmem:[#allocation8 + $0x8] sm:$0xf]
        %v651 = vld [vmem:[#allocation8 + $0xc] sm:$0xf]
        %v652 = vld [vmem:[#allocation10] sm:$0x1]
        %v654 = vlaneseq
        %v655 = vshrl.u32 %v654, 7
        %v656 = vsub.s32 0, %v655
        %v657 = vrot.slane %v652, %v656
        %v663 = vunpack.c.l.b16 %v648
        %v664 = vunpack.c.l.b16 %v649
        %v665 = vunpack.c.l.b16 %v650
        %v666 = vunpack.c.l.b16 %v651
        %v667 = vpack.c.b16 %v664, %v663
        %v668 = vpack.c.b16 %v666, %v665
        %v672 = vsel %vm618, %v647, 0
        %674 = vmatprep.subr.bf16.mxu0 0
        %675 = vmatpush1.bf16.msra.mxu0 %v667
        %676 = vmatprep.subr.bf16.mxu0 0
        %677 = vmatpush1.bf16.msra.mxu0 %v668
        %678 = vmatprep.subr.bf16.mxu0 0
        %679 = vmatpush1.bf16.msra.mxu0 0
        %680 = vmatprep.subr.bf16.mxu0 0
        %681 = vmatpush1.bf16.msra.mxu0 0
        %682 = vmatprep.subr.bf16.mxu0 0
        %683 = vmatpush1.bf16.msra.mxu0 0
        %684 = vmatprep.subr.bf16.mxu0 0
        %685 = vmatpush1.bf16.msra.mxu0 0
        %686 = vmatprep.subr.bf16.mxu0 0
        %687 = vmatpush1.bf16.msra.mxu0 0
        %688 = vmatprep.subr.bf16.mxu0 0
        %689 = vmatpush1.bf16.msra.mxu0 0
        %690 = vmatprep.subr.bf16.mxu0 0
        %691 = vmatpush1.bf16.msra.mxu0 0
        %692 = vmatprep.subr.bf16.mxu0 0
        %693 = vmatpush1.bf16.msra.mxu0 0
        %694 = vmatprep.subr.bf16.mxu0 0
        %695 = vmatpush1.bf16.msra.mxu0 0
        %696 = vmatprep.subr.bf16.mxu0 0
        %697 = vmatpush1.bf16.msra.mxu0 0
        %698 = vmatprep.subr.bf16.mxu0 0
        %699 = vmatpush1.bf16.msra.mxu0 0
        %700 = vmatprep.subr.bf16.mxu0 0
        %701 = vmatpush1.bf16.msra.mxu0 0
        %702 = vmatprep.subr.bf16.mxu0 0
        %703 = vmatpush1.bf16.msra.mxu0 0
        %704 = vmatprep.subr.bf16.mxu0 0
        %705 = vmatpush1.bf16.msra.mxu0 0
        %706 = vmatprep.mubr.bf16.mxu0 0
        %707 = vmatmul.mubr.bf16.gmra.mrb[0].mxu0 %v672
        %v708 = vpop.f32.mrb[0].mxu0
        %v709 = vadd.f32 %v657, %v708
        %v710 = vpop.f32.mrb[0].mxu0
        %v711 = vpop.f32.mrb[0].mxu0
        %v712 = vpop.f32.mrb[0].mxu0
        %713 = vdwg.mxu0
        %v714 = vlaneseq
        %v715 = vshrl.u32 %v714, 7
        %v716 = vlaneseq
        %v717 = vand.u32 %v716, 127
        %vm718 = vcmp.ge.s32.totalorder %v715, %v717
        %v719 = vmul.f32 %v709, 0.35355338
        %v720 = vpack.c.bf16 %v719, %v719
        %v721 = vpack.c.bf16 %v709, %v709
        %723 = vrot.lane.b32.xlu0 %v721, 96
        %v724 = vpop.permute.xlu0 %723
        %vm725 = vcmask 64512
        %v727 = vsel %vm725, %v720, 0
        %v730 = vsel %vm725, %v724, 0
        %732 = vmatprep.subr.bf16.mxu0 0
        %733 = vmatpush1.bf16.xpose.msra.mxu0 %v730
        %734 = vmatprep.subr.bf16.mxu0 0
        %735 = vmatpush1.bf16.xpose.msra.mxu0 0
        %736 = vmatprep.subr.bf16.mxu0 0
        %737 = vmatpush1.bf16.xpose.msra.mxu0 0
        %738 = vmatprep.subr.bf16.mxu0 0
        %739 = vmatpush1.bf16.xpose.msra.mxu0 0
        %740 = vmatprep.subr.bf16.mxu0 0
        %741 = vmatpush1.bf16.xpose.msra.mxu0 0
        %742 = vmatprep.subr.bf16.mxu0 0
        %743 = vmatpush1.bf16.xpose.msra.mxu0 0
        %744 = vmatprep.subr.bf16.mxu0 0
        %745 = vmatpush1.bf16.xpose.msra.mxu0 0
        %746 = vmatprep.subr.bf16.mxu0 0
        %747 = vmatpush1.bf16.xpose.msra.mxu0 0
        %748 = vmatprep.subr.bf16.mxu0 0
        %749 = vmatpush1.bf16.xpose.msra.mxu0 0
        %750 = vmatprep.subr.bf16.mxu0 0
        %751 = vmatpush1.bf16.xpose.msra.mxu0 0
        %752 = vmatprep.subr.bf16.mxu0 0
        %753 = vmatpush1.bf16.xpose.msra.mxu0 0
        %754 = vmatprep.subr.bf16.mxu0 0
        %755 = vmatpush1.bf16.xpose.msra.mxu0 0
        %756 = vmatprep.subr.bf16.mxu0 0
        %757 = vmatpush1.bf16.xpose.msra.mxu0 0
        %758 = vmatprep.subr.bf16.mxu0 0
        %759 = vmatpush1.bf16.xpose.msra.mxu0 0
        %760 = vmatprep.subr.bf16.mxu0 0
        %761 = vmatpush1.bf16.xpose.msra.mxu0 0
        %762 = vmatprep.subr.bf16.mxu0 0
        %763 = vmatpush1.bf16.xpose.msra.mxu0 0
        %764 = vmatprep.mubr.bf16.mxu0 0
        %765 = vmatmul.mubr.bf16.gmra.mrb[0].mxu0 %v727
        %v766 = vpop.f32.mrb[0].mxu0
        %v767 = vadd.f32 0.0, %v766
        %v768 = vpop.f32.mrb[0].mxu0
        %v769 = vpop.f32.mrb[0].mxu0
        %v770 = vpop.f32.mrb[0].mxu0
        %771 = vdwg.mxu0
        %v772 = vsel %vm718, %v767, -1e+30
        %v773 = vsel %vm725, %v772, -inf
        %774 = vmax.xlane.f32.xlu0 %v773
        %v775 = vpop.xlane.xlu0 %774
        %v776 = vsub.f32 %v772, %v775
        %v777 = vmul.f32 %v776, 1.442695
        %v778 = vpow.pop %v777
        %v779 = vsel %vm725, %v778, 0.0
        %780 = vadd.xlane.f32.xlu0 %v779
        %v781 = vpop.xlane.xlu0 %780
        %v782 = vrcp.pop %v781
        %v783 = vmul.f32 %v778, %v782
        %v784 = vpack.c.bf16 %v783, %v783
        %785 = vrot.lane.b32.xlu0 %v721, 64
        %v786 = vpop.permute.xlu0 %785
        %v788 = vsel %vm725, %v784, 0
        %vm790 = vcmask 1043456
        %v792 = vsel %vm790, %v786, 0
        %794 = vmatprep.subr.bf16.mxu0 0
        %795 = vmatpush1.bf16.msra.mxu0 %v792
        %796 = vmatprep.subr.bf16.mxu0 0
        %797 = vmatpush1.bf16.msra.mxu0 0
        %798 = vmatprep.subr.bf16.mxu0 0
        %799 = vmatpush1.bf16.msra.mxu0 0
        %800 = vmatprep.subr.bf16.mxu0 0
        %801 = vmatpush1.bf16.msra.mxu0 0
        %802 = vmatprep.subr.bf16.mxu0 0
        %803 = vmatpush1.bf16.msra.mxu0 0
        %804 = vmatprep.subr.bf16.mxu0 0
        %805 = vmatpush1.bf16.msra.mxu0 0
        %806 = vmatprep.subr.bf16.mxu0 0
        %807 = vmatpush1.bf16.msra.mxu0 0
        %808 = vmatprep.subr.bf16.mxu0 0
        %809 = vmatpush1.bf16.msra.mxu0 0
        %810 = vmatprep.subr.bf16.mxu0 0
        %811 = vmatpush1.bf16.msra.mxu0 0
        %812 = vmatprep.subr.bf16.mxu0 0
        %813 = vmatpush1.bf16.msra.mxu0 0
        %814 = vmatprep.subr.bf16.mxu0 0
        %815 = vmatpush1.bf16.msra.mxu0 0
        %816 = vmatprep.subr.bf16.mxu0 0
        %817 = vmatpush1.bf16.msra.mxu0 0
        %818 = vmatprep.subr.bf16.mxu0 0
        %819 = vmatpush1.bf16.msra.mxu0 0
        %820 = vmatprep.subr.bf16.mxu0 0
        %821 = vmatpush1.bf16.msra.mxu0 0
        %822 = vmatprep.subr.bf16.mxu0 0
        %823 = vmatpush1.bf16.msra.mxu0 0
        %824 = vmatprep.subr.bf16.mxu0 0
        %825 = vmatpush1.bf16.msra.mxu0 0
        %826 = vmatprep.mubr.bf16.mxu0 0
        %827 = vmatmul.mubr.bf16.gmra.mrb[0].mxu0 %v788
        %v828 = vpop.f32.mrb[0].mxu0
        %v829 = vadd.f32 0.0, %v828
        %v830 = vpop.f32.mrb[0].mxu0
        %v831 = vpop.f32.mrb[0].mxu0
        %v832 = vpop.f32.mrb[0].mxu0
        %833 = vdwg.mxu0
        %835 = vrot.lane.b32.xlu0 %v720, 120
        %v836 = vpop.permute.xlu0 %835
        %837 = vrot.lane.b32.xlu0 %v721, 88
        %v838 = vpop.permute.xlu0 %837
        %v840 = vsel %vm725, %v836, 0
        %v843 = vsel %vm725, %v838, 0
        %845 = vmatprep.subr.bf16.mxu0 0
        %846 = vmatpush1.bf16.xpose.msra.mxu0 %v843
        %847 = vmatprep.subr.bf16.mxu0 0
        %848 = vmatpush1.bf16.xpose.msra.mxu0 0
        %849 = vmatprep.subr.bf16.mxu0 0
        %850 = vmatpush1.bf16.xpose.msra.mxu0 0
        %851 = vmatprep.subr.bf16.mxu0 0
        %852 = vmatpush1.bf16.xpose.msra.mxu0 0
        %853 = vmatprep.subr.bf16.mxu0 0
        %854 = vmatpush1.bf16.xpose.msra.mxu0 0
        %855 = vmatprep.subr.bf16.mxu0 0
        %856 = vmatpush1.bf16.xpose.msra.mxu0 0
        %857 = vmatprep.subr.bf16.mxu0 0
        %858 = vmatpush1.bf16.xpose.msra.mxu0 0
        %859 = vmatprep.subr.bf16.mxu0 0
        %860 = vmatpush1.bf16.xpose.msra.mxu0 0
        %861 = vmatprep.subr.bf16.mxu0 0
        %862 = vmatpush1.bf16.xpose.msra.mxu0 0
        %863 = vmatprep.subr.bf16.mxu0 0
        %864 = vmatpush1.bf16.xpose.msra.mxu0 0
        %865 = vmatprep.subr.bf16.mxu0 0
        %866 = vmatpush1.bf16.xpose.msra.mxu0 0
        %867 = vmatprep.subr.bf16.mxu0 0
        %868 = vmatpush1.bf16.xpose.msra.mxu0 0
        %869 = vmatprep.subr.bf16.mxu0 0
        %870 = vmatpush1.bf16.xpose.msra.mxu0 0
        %871 = vmatprep.subr.bf16.mxu0 0
        %872 = vmatpush1.bf16.xpose.msra.mxu0 0
        %873 = vmatprep.subr.bf16.mxu0 0
        %874 = vmatpush1.bf16.xpose.msra.mxu0 0
        %875 = vmatprep.subr.bf16.mxu0 0
        %876 = vmatpush1.bf16.xpose.msra.mxu0 0
        %877 = vmatprep.mubr.bf16.mxu0 0
        %878 = vmatmul.mubr.bf16.gmra.mrb[0].mxu0 %v840
        %v879 = vpop.f32.mrb[0].mxu0
        %v880 = vadd.f32 0.0, %v879
        %v881 = vpop.f32.mrb[0].mxu0
        %v882 = vpop.f32.mrb[0].mxu0
        %v883 = vpop.f32.mrb[0].mxu0
        %884 = vdwg.mxu0
        %v885 = vsel %vm718, %v880, -1e+30
        %v886 = vsel %vm725, %v885, -inf
        %887 = vmax.xlane.f32.xlu0 %v886
        %v888 = vpop.xlane.xlu0 %887
        %v889 = vsub.f32 %v885, %v888
        %v890 = vmul.f32 %v889, 1.442695
        %v891 = vpow.pop %v890
        %v892 = vsel %vm725, %v891, 0.0
        %893 = vadd.xlane.f32.xlu0 %v892
        %v894 = vpop.xlane.xlu0 %893
        %v895 = vrcp.pop %v894
        %v896 = vmul.f32 %v891, %v895
        %v897 = vpack.c.bf16 %v896, %v896
        %898 = vrot.lane.b32.xlu0 %v721, 56
        %v899 = vpop.permute.xlu0 %898
        %v901 = vsel %vm725, %v897, 0
        %v904 = vsel %vm790, %v899, 0
        %906 = vmatprep.subr.bf16.mxu0 0
        %907 = vmatpush1.bf16.msra.mxu0 %v904
        %908 = vmatprep.subr.bf16.mxu0 0
        %909 = vmatpush1.bf16.msra.mxu0 0
        %910 = vmatprep.subr.bf16.mxu0 0
        %911 = vmatpush1.bf16.msra.mxu0 0
        %912 = vmatprep.subr.bf16.mxu0 0
        %913 = vmatpush1.bf16.msra.mxu0 0
        %914 = vmatprep.subr.bf16.mxu0 0
        %915 = vmatpush1.bf16.msra.mxu0 0
        %916 = vmatprep.subr.bf16.mxu0 0
        %917 = vmatpush1.bf16.msra.mxu0 0
        %918 = vmatprep.subr.bf16.mxu0 0
        %919 = vmatpush1.bf16.msra.mxu0 0
        %920 = vmatprep.subr.bf16.mxu0 0
        %921 = vmatpush1.bf16.msra.mxu0 0
        %922 = vmatprep.subr.bf16.mxu0 0
        %923 = vmatpush1.bf16.msra.mxu0 0
        %924 = vmatprep.subr.bf16.mxu0 0
        %925 = vmatpush1.bf16.msra.mxu0 0
        %926 = vmatprep.subr.bf16.mxu0 0
        %927 = vmatpush1.bf16.msra.mxu0 0
        %928 = vmatprep.subr.bf16.mxu0 0
        %929 = vmatpush1.bf16.msra.mxu0 0
        %930 = vmatprep.subr.bf16.mxu0 0
        %931 = vmatpush1.bf16.msra.mxu0 0
        %932 = vmatprep.subr.bf16.mxu0 0
        %933 = vmatpush1.bf16.msra.mxu0 0
        %934 = vmatprep.subr.bf16.mxu0 0
        %935 = vmatpush1.bf16.msra.mxu0 0
        %936 = vmatprep.subr.bf16.mxu0 0
        %937 = vmatpush1.bf16.msra.mxu0 0
        %938 = vmatprep.mubr.bf16.mxu0 0
        %939 = vmatmul.mubr.bf16.gmra.mrb[0].mxu0 %v901
        %v940 = vpop.f32.mrb[0].mxu0
        %v941 = vadd.f32 0.0, %v940
        %v942 = vpop.f32.mrb[0].mxu0
        %v943 = vpop.f32.mrb[0].mxu0
        %v944 = vpop.f32.mrb[0].mxu0
        %945 = vdwg.mxu0
        %946 = vrot.lane.b32.xlu0 %v720, 112
        %v947 = vpop.permute.xlu0 %946
        %948 = vrot.lane.b32.xlu0 %v721, 80
        %v949 = vpop.permute.xlu0 %948
        %v951 = vsel %vm725, %v947, 0
        %v954 = vsel %vm725, %v949, 0
        %956 = vmatprep.subr.bf16.mxu0 0
        %957 = vmatpush1.bf16.xpose.msra.mxu0 %v954
        %958 = vmatprep.subr.bf16.mxu0 0
        %959 = vmatpush1.bf16.xpose.msra.mxu0 0
        %960 = vmatprep.subr.bf16.mxu0 0
        %961 = vmatpush1.bf16.xpose.msra.mxu0 0
        %962 = vmatprep.subr.bf16.mxu0 0
        %963 = vmatpush1.bf16.xpose.msra.mxu0 0
        %964 = vmatprep.subr.bf16.mxu0 0
        %965 = vmatpush1.bf16.xpose.msra.mxu0 0
        %966 = vmatprep.subr.bf16.mxu0 0
        %967 = vmatpush1.bf16.xpose.msra.mxu0 0
        %968 = vmatprep.subr.bf16.mxu0 0
        %969 = vmatpush1.bf16.xpose.msra.mxu0 0
        %970 = vmatprep.subr.bf16.mxu0 0
        %971 = vmatpush1.bf16.xpose.msra.mxu0 0
        %972 = vmatprep.subr.bf16.mxu0 0
        %973 = vmatpush1.bf16.xpose.msra.mxu0 0
        %974 = vmatprep.subr.bf16.mxu0 0
        %975 = vmatpush1.bf16.xpose.msra.mxu0 0
        %976 = vmatprep.subr.bf16.mxu0 0
        %977 = vmatpush1.bf16.xpose.msra.mxu0 0
        %978 = vmatprep.subr.bf16.mxu0 0
        %979 = vmatpush1.bf16.xpose.msra.mxu0 0
        %980 = vmatprep.subr.bf16.mxu0 0
        %981 = vmatpush1.bf16.xpose.msra.mxu0 0
        %982 = vmatprep.subr.bf16.mxu0 0
        %983 = vmatpush1.bf16.xpose.msra.mxu0 0
        %984 = vmatprep.subr.bf16.mxu0 0
        %985 = vmatpush1.bf16.xpose.msra.mxu0 0
        %986 = vmatprep.subr.bf16.mxu0 0
        %987 = vmatpush1.bf16.xpose.msra.mxu0 0
        %988 = vmatprep.mubr.bf16.mxu0 0
        %989 = vmatmul.mubr.bf16.gmra.mrb[0].mxu0 %v951
        %v990 = vpop.f32.mrb[0].mxu0
        %v991 = vadd.f32 0.0, %v990
        %v992 = vpop.f32.mrb[0].mxu0
        %v993 = vpop.f32.mrb[0].mxu0
        %v994 = vpop.f32.mrb[0].mxu0
        %995 = vdwg.mxu0
        %v996 = vsel %vm718, %v991, -1e+30
        %v997 = vsel %vm725, %v996, -inf
        %998 = vmax.xlane.f32.xlu0 %v997
        %v999 = vpop.xlane.xlu0 %998
        %v1000 = vsub.f32 %v996, %v999
        %v1001 = vmul.f32 %v1000, 1.442695
        %v1002 = vpow.pop %v1001
        %v1003 = vsel %vm725, %v1002, 0.0
        %1004 = vadd.xlane.f32.xlu0 %v1003
        %v1005 = vpop.xlane.xlu0 %1004
        %v1006 = vrcp.pop %v1005
        %v1007 = vmul.f32 %v1002, %v1006
        %v1008 = vpack.c.bf16 %v1007, %v1007
        %1009 = vrot.lane.b32.xlu0 %v721, 48
        %v1010 = vpop.permute.xlu0 %1009
        %v1012 = vsel %vm725, %v1008, 0
        %v1015 = vsel %vm790, %v1010, 0
        %1017 = vmatprep.subr.bf16.mxu0 0
        %1018 = vmatpush1.bf16.msra.mxu0 %v1015
        %1019 = vmatprep.subr.bf16.mxu0 0
        %1020 = vmatpush1.bf16.msra.mxu0 0
        %1021 = vmatprep.subr.bf16.mxu0 0
        %1022 = vmatpush1.bf16.msra.mxu0 0
        %1023 = vmatprep.subr.bf16.mxu0 0
        %1024 = vmatpush1.bf16.msra.mxu0 0
        %1025 = vmatprep.subr.bf16.mxu0 0
        %1026 = vmatpush1.bf16.msra.mxu0 0
        %1027 = vmatprep.subr.bf16.mxu0 0
        %1028 = vmatpush1.bf16.msra.mxu0 0
        %1029 = vmatprep.subr.bf16.mxu0 0
        %1030 = vmatpush1.bf16.msra.mxu0 0
        %1031 = vmatprep.subr.bf16.mxu0 0
        %1032 = vmatpush1.bf16.msra.mxu0 0
        %1033 = vmatprep.subr.bf16.mxu0 0
        %1034 = vmatpush1.bf16.msra.mxu0 0
        %1035 = vmatprep.subr.bf16.mxu0 0
        %1036 = vmatpush1.bf16.msra.mxu0 0
        %1037 = vmatprep.subr.bf16.mxu0 0
        %1038 = vmatpush1.bf16.msra.mxu0 0
        %1039 = vmatprep.subr.bf16.mxu0 0
        %1040 = vmatpush1.bf16.msra.mxu0 0
        %1041 = vmatprep.subr.bf16.mxu0 0
        %1042 = vmatpush1.bf16.msra.mxu0 0
        %1043 = vmatprep.subr.bf16.mxu0 0
        %1044 = vmatpush1.bf16.msra.mxu0 0
        %1045 = vmatprep.subr.bf16.mxu0 0
        %1046 = vmatpush1.bf16.msra.mxu0 0
        %1047 = vmatprep.subr.bf16.mxu0 0
        %1048 = vmatpush1.bf16.msra.mxu0 0
        %1049 = vmatprep.mubr.bf16.mxu0 0
        %1050 = vmatmul.mubr.bf16.gmra.mrb[0].mxu0 %v1012
        %v1051 = vpop.f32.mrb[0].mxu0
        %v1052 = vadd.f32 0.0, %v1051
        %v1053 = vpop.f32.mrb[0].mxu0
        %v1054 = vpop.f32.mrb[0].mxu0
        %v1055 = vpop.f32.mrb[0].mxu0
        %1056 = vdwg.mxu0
        %1057 = vrot.lane.b32.xlu0 %v720, 104
        %v1058 = vpop.permute.xlu0 %1057
        %1059 = vrot.lane.b32.xlu0 %v721, 72
        %v1060 = vpop.permute.xlu0 %1059
        %v1062 = vsel %vm725, %v1058, 0
        %v1065 = vsel %vm725, %v1060, 0
        %1067 = vmatprep.subr.bf16.mxu0 0
        %1068 = vmatpush1.bf16.xpose.msra.mxu0 %v1065
        %1069 = vmatprep.subr.bf16.mxu0 0
        %1070 = vmatpush1.bf16.xpose.msra.mxu0 0
        %1071 = vmatprep.subr.bf16.mxu0 0
        %1072 = vmatpush1.bf16.xpose.msra.mxu0 0
        %1073 = vmatprep.subr.bf16.mxu0 0
        %1074 = vmatpush1.bf16.xpose.msra.mxu0 0
        %1075 = vmatprep.subr.bf16.mxu0 0
        %1076 = vmatpush1.bf16.xpose.msra.mxu0 0
        %1077 = vmatprep.subr.bf16.mxu0 0
        %1078 = vmatpush1.bf16.xpose.msra.mxu0 0
        %1079 = vmatprep.subr.bf16.mxu0 0
        %1080 = vmatpush1.bf16.xpose.msra.mxu0 0
        %1081 = vmatprep.subr.bf16.mxu0 0
        %1082 = vmatpush1.bf16.xpose.msra.mxu0 0
        %1083 = vmatprep.subr.bf16.mxu0 0
        %1084 = vmatpush1.bf16.xpose.msra.mxu0 0
        %1085 = vmatprep.subr.bf16.mxu0 0
        %1086 = vmatpush1.bf16.xpose.msra.mxu0 0
        %1087 = vmatprep.subr.bf16.mxu0 0
        %1088 = vmatpush1.bf16.xpose.msra.mxu0 0
        %1089 = vmatprep.subr.bf16.mxu0 0
        %1090 = vmatpush1.bf16.xpose.msra.mxu0 0
        %1091 = vmatprep.subr.bf16.mxu0 0
        %1092 = vmatpush1.bf16.xpose.msra.mxu0 0
        %1093 = vmatprep.subr.bf16.mxu0 0
        %1094 = vmatpush1.bf16.xpose.msra.mxu0 0
        %1095 = vmatprep.subr.bf16.mxu0 0
        %1096 = vmatpush1.bf16.xpose.msra.mxu0 0
        %1097 = vmatprep.subr.bf16.mxu0 0
        %1098 = vmatpush1.bf16.xpose.msra.mxu0 0
        %1099 = vmatprep.mubr.bf16.mxu0 0
        %1100 = vmatmul.mubr.bf16.gmra.mrb[0].mxu0 %v1062
        %v1101 = vpop.f32.mrb[0].mxu0
        %v1102 = vadd.f32 0.0, %v1101
        %v1103 = vpop.f32.mrb[0].mxu0
        %v1104 = vpop.f32.mrb[0].mxu0
        %v1105 = vpop.f32.mrb[0].mxu0
        %1106 = vdwg.mxu0
        %v1107 = vsel %vm718, %v1102, -1e+30
        %v1108 = vsel %vm725, %v1107, -inf
        %1109 = vmax.xlane.f32.xlu0 %v1108
        %v1110 = vpop.xlane.xlu0 %1109
        %v1111 = vsub.f32 %v1107, %v1110
        %v1112 = vmul.f32 %v1111, 1.442695
        %v1113 = vpow.pop %v1112
        %v1114 = vsel %vm725, %v1113, 0.0
        %1115 = vadd.xlane.f32.xlu0 %v1114
        %v1116 = vpop.xlane.xlu0 %1115
        %v1117 = vrcp.pop %v1116
        %v1118 = vmul.f32 %v1113, %v1117
        %v1119 = vpack.c.bf16 %v1118, %v1118
        %1120 = vrot.lane.b32.xlu0 %v721, 40
        %v1121 = vpop.permute.xlu0 %1120
        %v1123 = vsel %vm725, %v1119, 0
        %v1126 = vsel %vm790, %v1121, 0
        %1128 = vmatprep.subr.bf16.mxu0 0
        %1129 = vmatpush1.bf16.msra.mxu0 %v1126
        %1130 = vmatprep.subr.bf16.mxu0 0
        %1131 = vmatpush1.bf16.msra.mxu0 0
        %1132 = vmatprep.subr.bf16.mxu0 0
        %1133 = vmatpush1.bf16.msra.mxu0 0
        %1134 = vmatprep.subr.bf16.mxu0 0
        %1135 = vmatpush1.bf16.msra.mxu0 0
        %1136 = vmatprep.subr.bf16.mxu0 0
        %1137 = vmatpush1.bf16.msra.mxu0 0
        %1138 = vmatprep.subr.bf16.mxu0 0
        %1139 = vmatpush1.bf16.msra.mxu0 0
        %1140 = vmatprep.subr.bf16.mxu0 0
        %1141 = vmatpush1.bf16.msra.mxu0 0
        %1142 = vmatprep.subr.bf16.mxu0 0
        %1143 = vmatpush1.bf16.msra.mxu0 0
        %1144 = vmatprep.subr.bf16.mxu0 0
        %1145 = vmatpush1.bf16.msra.mxu0 0
        %1146 = vmatprep.subr.bf16.mxu0 0
        %1147 = vmatpush1.bf16.msra.mxu0 0
        %1148 = vmatprep.subr.bf16.mxu0 0
        %1149 = vmatpush1.bf16.msra.mxu0 0
        %1150 = vmatprep.subr.bf16.mxu0 0
        %1151 = vmatpush1.bf16.msra.mxu0 0
        %1152 = vmatprep.subr.bf16.mxu0 0
        %1153 = vmatpush1.bf16.msra.mxu0 0
        %1154 = vmatprep.subr.bf16.mxu0 0
        %1155 = vmatpush1.bf16.msra.mxu0 0
        %1156 = vmatprep.subr.bf16.mxu0 0
        %1157 = vmatpush1.bf16.msra.mxu0 0
        %1158 = vmatprep.subr.bf16.mxu0 0
        %1159 = vmatpush1.bf16.msra.mxu0 0
        %1160 = vmatprep.mubr.bf16.mxu0 0
        %1161 = vmatmul.mubr.bf16.gmra.mrb[0].mxu0 %v1123
        %v1162 = vpop.f32.mrb[0].mxu0
        %v1163 = vadd.f32 0.0, %v1162
        %v1164 = vpop.f32.mrb[0].mxu0
        %v1165 = vpop.f32.mrb[0].mxu0
        %v1166 = vpop.f32.mrb[0].mxu0
        %1167 = vdwg.mxu0
        %1169 = vrot.lane.b32.xlu0 %v941, 8
        %v1170 = vpop.permute.xlu0 %1169
        %1173 = vrot.lane.b32.xlu0 %v1052, 16
        %v1174 = vpop.permute.xlu0 %1173
        %1177 = vrot.lane.b32.xlu0 %v1163, 24
        %v1178 = vpop.permute.xlu0 %1177
        %v1180 = vsel %vm725, %v829, %v1170
        %vm1181 = vcmask 130048
        %v1182 = vsel %vm1181, %v1180, %v1174
        %vm1183 = vcmask 195584
        %v1184 = vsel %vm1183, %v1182, %v1178
        %v1185 = vpack.c.bf16 %v1184, %v1184
        %v1186 = vld [vmem:[#allocation11] sm:$0xf]
        %v1187 = vld [vmem:[#allocation11 + $0x4] sm:$0xf]
        %v1188 = vld [vmem:[#allocation11 + $0x8] sm:$0xf]
        %v1189 = vld [vmem:[#allocation11 + $0xc] sm:$0xf]
        %v1194 = vunpack.c.l.b16 %v1186
        %v1195 = vunpack.c.l.b16 %v1187
        %v1196 = vunpack.c.l.b16 %v1188
        %v1197 = vunpack.c.l.b16 %v1189
        %v1198 = vpack.c.b16 %v1195, %v1194
        %v1199 = vpack.c.b16 %v1197, %v1196
        %v1203 = vsel %vm618, %v1185, 0
        %1205 = vmatprep.subr.bf16.mxu0 0
        %1206 = vmatpush1.bf16.msra.mxu0 %v1198
        %1207 = vmatprep.subr.bf16.mxu0 0
        %1208 = vmatpush1.bf16.msra.mxu0 %v1199
        %1209 = vmatprep.subr.bf16.mxu0 0
        %1210 = vmatpush1.bf16.msra.mxu0 0
        %1211 = vmatprep.subr.bf16.mxu0 0
        %1212 = vmatpush1.bf16.msra.mxu0 0
        %1213 = vmatprep.subr.bf16.mxu0 0
        %1214 = vmatpush1.bf16.msra.mxu0 0
        %1215 = vmatprep.subr.bf16.mxu0 0
        %1216 = vmatpush1.bf16.msra.mxu0 0
        %1217 = vmatprep.subr.bf16.mxu0 0
        %1218 = vmatpush1.bf16.msra.mxu0 0
        %1219 = vmatprep.subr.bf16.mxu0 0
        %1220 = vmatpush1.bf16.msra.mxu0 0
        %1221 = vmatprep.subr.bf16.mxu0 0
        %1222 = vmatpush1.bf16.msra.mxu0 0
        %1223 = vmatprep.subr.bf16.mxu0 0
        %1224 = vmatpush1.bf16.msra.mxu0 0
        %1225 = vmatprep.subr.bf16.mxu0 0
        %1226 = vmatpush1.bf16.msra.mxu0 0
        %1227 = vmatprep.subr.bf16.mxu0 0
        %1228 = vmatpush1.bf16.msra.mxu0 0
        %1229 = vmatprep.subr.bf16.mxu0 0
        %1230 = vmatpush1.bf16.msra.mxu0 0
        %1231 = vmatprep.subr.bf16.mxu0 0
        %1232 = vmatpush1.bf16.msra.mxu0 0
        %1233 = vmatprep.subr.bf16.mxu0 0
        %1234 = vmatpush1.bf16.msra.mxu0 0
        %1235 = vmatprep.subr.bf16.mxu0 0
        %1236 = vmatpush1.bf16.msra.mxu0 0
        %1237 = vmatprep.mubr.bf16.mxu0 0
        %1238 = vmatmul.mubr.bf16.gmra.mrb[0].mxu0 %v1203
        %v1239 = vpop.f32.mrb[0].mxu0
        %v1240 = vadd.f32 0.0, %v1239
        %v1241 = vpop.f32.mrb[0].mxu0
        %v1242 = vpop.f32.mrb[0].mxu0
        %v1243 = vpop.f32.mrb[0].mxu0
        %1244 = vdwg.mxu0
        %v1245 = vadd.f32 %v615, %v1240
        %v1246 = vld [vmem:[#allocation13] sm:$0x1]
        %v1248 = vlaneseq
        %v1249 = vshrl.u32 %v1248, 7
        %v1250 = vsub.s32 0, %v1249
        %v1251 = vrot.slane %v1246, %v1250
        %v1253 = vadd.f32 %v1245, %v1251
        %v1254 = vld [vmem:[#allocation14] sm:$0x1]
        %v1255 = vld [vmem:[#allocation16] sm:$0x1]
        %v1256 = vsel %vm618, %v1253, 0.0
        %1257 = vadd.xlane.f32.xlu0 %v1256
        %v1258 = vpop.xlane.xlu0 %1257
        %v1259 = vmul.f32 %v1258, %v622
        %v1260 = vsub.f32 %v1253, %v1259
        %v1261 = vmul.f32 %v1260, %v1260
        %v1262 = vsel %vm618, %v1261, 0.0
        %1263 = vadd.xlane.f32.xlu0 %v1262
        %v1264 = vpop.xlane.xlu0 %1263
        %v1265 = vmul.f32 %v1264, %v622
        %v1266 = vadd.f32 %v1265, 1e-05
        %v1267 = vrsqrt.pop %v1266
        %v1268 = vmul.f32 %v1260, %v1267
        %v1270 = vlaneseq
        %v1271 = vshrl.u32 %v1270, 7
        %v1272 = vsub.s32 0, %v1271
        %v1273 = vrot.slane %v1254, %v1272
        %v1275 = vmul.f32 %v1268, %v1273
        %v1277 = vlaneseq
        %v1278 = vshrl.u32 %v1277, 7
        %v1279 = vsub.s32 0, %v1278
        %v1280 = vrot.slane %v1255, %v1279
        %v1282 = vadd.f32 %v1275, %v1280
        %v1283 = vpack.c.bf16 %v1282, %v1282
        %v1284 = vld [vmem:[#allocation19] sm:$0x1]
        %v1285 = vld [vmem:[#allocation17] sm:$0xf]
        %v1286 = vld [vmem:[#allocation17 + $0x4] sm:$0xf]
        %v1287 = vld [vmem:[#allocation17 + $0x8] sm:$0xf]
        %v1288 = vld [vmem:[#allocation17 + $0xc] sm:$0xf]
        %v1290 = vlaneseq
        %v1291 = vshrl.u32 %v1290, 7
        %v1292 = vsub.s32 0, %v1291
        %v1293 = vrot.slane %v1284, %v1292
        %v1299 = vunpack.c.l.b16 %v1285
        %v1300 = vunpack.c.l.b16 %v1286
        %v1301 = vunpack.c.l.b16 %v1287
        %v1302 = vunpack.c.l.b16 %v1288
        %v1303 = vpack.c.b16 %v1300, %v1299
        %v1304 = vpack.c.b16 %v1302, %v1301
        %v1308 = vsel %vm618, %v1283, 0
        %1310 = vmatprep.subr.bf16.mxu0 0
        %1311 = vmatpush1.bf16.msra.mxu0 %v1303
        %1312 = vmatprep.subr.bf16.mxu0 0
        %1313 = vmatpush1.bf16.msra.mxu0 %v1304
        %1314 = vmatprep.subr.bf16.mxu0 0
        %1315 = vmatpush1.bf16.msra.mxu0 0
        %1316 = vmatprep.subr.bf16.mxu0 0
        %1317 = vmatpush1.bf16.msra.mxu0 0
        %1318 = vmatprep.subr.bf16.mxu0 0
        %1319 = vmatpush1.bf16.msra.mxu0 0
        %1320 = vmatprep.subr.bf16.mxu0 0
        %1321 = vmatpush1.bf16.msra.mxu0 0
        %1322 = vmatprep.subr.bf16.mxu0 0
        %1323 = vmatpush1.bf16.msra.mxu0 0
        %1324 = vmatprep.subr.bf16.mxu0 0
        %1325 = vmatpush1.bf16.msra.mxu0 0
        %1326 = vmatprep.subr.bf16.mxu0 0
        %1327 = vmatpush1.bf16.msra.mxu0 0
        %1328 = vmatprep.subr.bf16.mxu0 0
        %1329 = vmatpush1.bf16.msra.mxu0 0
        %1330 = vmatprep.subr.bf16.mxu0 0
        %1331 = vmatpush1.bf16.msra.mxu0 0
        %1332 = vmatprep.subr.bf16.mxu0 0
        %1333 = vmatpush1.bf16.msra.mxu0 0
        %1334 = vmatprep.subr.bf16.mxu0 0
        %1335 = vmatpush1.bf16.msra.mxu0 0
        %1336 = vmatprep.subr.bf16.mxu0 0
        %1337 = vmatpush1.bf16.msra.mxu0 0
        %1338 = vmatprep.subr.bf16.mxu0 0
        %1339 = vmatpush1.bf16.msra.mxu0 0
        %1340 = vmatprep.subr.bf16.mxu0 0
        %1341 = vmatpush1.bf16.msra.mxu0 0
        %1342 = vmatprep.mubr.bf16.mxu0 0
        %1343 = vmatmul.mubr.bf16.gmra.mrb[0].mxu0 %v1308
        %v1344 = vpop.f32.mrb[0].mxu0
        %v1345 = vadd.f32 %v1293, %v1344
        %v1346 = vpop.f32.mrb[0].mxu0
        %v1347 = vpop.f32.mrb[0].mxu0
        %v1348 = vpop.f32.mrb[0].mxu0
        %1349 = vdwg.mxu0
        %v1350 = vmax.f32 %v1345, 0.0
        %v1351 = vpack.c.bf16 %v1350, %v1350
        %v1352 = vld [vmem:[#allocation20] sm:$0xf]
        %v1353 = vld [vmem:[#allocation20 + $0x4] sm:$0xf]
        %v1354 = vld [vmem:[#allocation20 + $0x8] sm:$0xf]
        %v1355 = vld [vmem:[#allocation20 + $0xc] sm:$0xf]
        %v1356 = vld [vmem:[#allocation20 + $0x10] sm:$0xf]
        %v1357 = vld [vmem:[#allocation20 + $0x14] sm:$0xf]
        %v1358 = vld [vmem:[#allocation20 + $0x18] sm:$0xf]
        %v1359 = vld [vmem:[#allocation20 + $0x1c] sm:$0xf]
        %v1360 = vld [vmem:[#allocation20 + $0x20] sm:$0xf]
        %v1361 = vld [vmem:[#allocation20 + $0x24] sm:$0xf]
        %v1362 = vld [vmem:[#allocation20 + $0x28] sm:$0xf]
        %v1363 = vld [vmem:[#allocation20 + $0x2c] sm:$0xf]
        %v1364 = vld [vmem:[#allocation20 + $0x30] sm:$0xf]
        %v1365 = vld [vmem:[#allocation20 + $0x34] sm:$0xf]
        %v1366 = vld [vmem:[#allocation20 + $0x38] sm:$0xf]
        %v1367 = vld [vmem:[#allocation20 + $0x3c] sm:$0xf]
        %v1384 = vunpack.c.l.b16 %v1352
        %v1385 = vunpack.c.l.b16 %v1353
        %v1386 = vunpack.c.l.b16 %v1354
        %v1387 = vunpack.c.l.b16 %v1355
        %v1388 = vunpack.c.l.b16 %v1356
        %v1389 = vunpack.c.l.b16 %v1357
        %v1390 = vunpack.c.l.b16 %v1358
        %v1391 = vunpack.c.l.b16 %v1359
        %v1392 = vunpack.c.l.b16 %v1360
        %v1393 = vunpack.c.l.b16 %v1361
        %v1394 = vunpack.c.l.b16 %v1362
        %v1395 = vunpack.c.l.b16 %v1363
        %v1396 = vunpack.c.l.b16 %v1364
        %v1397 = vunpack.c.l.b16 %v1365
        %v1398 = vunpack.c.l.b16 %v1366
        %v1399 = vunpack.c.l.b16 %v1367
        %v1400 = vpack.c.b16 %v1385, %v1384
        %v1401 = vpack.c.b16 %v1387, %v1386
        %v1402 = vpack.c.b16 %v1389, %v1388
        %v1403 = vpack.c.b16 %v1391, %v1390
        %v1404 = vpack.c.b16 %v1393, %v1392
        %v1405 = vpack.c.b16 %v1395, %v1394
        %v1406 = vpack.c.b16 %v1397, %v1396
        %v1407 = vpack.c.b16 %v1399, %v1398
        %1416 = vmatprep.subr.bf16.mxu0 0
        %1417 = vmatpush1.bf16.msra.mxu0 %v1400
        %1418 = vmatprep.subr.bf16.mxu0 0
        %1419 = vmatpush1.bf16.msra.mxu0 %v1401
        %1420 = vmatprep.subr.bf16.mxu0 0
        %1421 = vmatpush1.bf16.msra.mxu0 %v1402
        %1422 = vmatprep.subr.bf16.mxu0 0
        %1423 = vmatpush1.bf16.msra.mxu0 %v1403
        %1424 = vmatprep.subr.bf16.mxu0 0
        %1425 = vmatpush1.bf16.msra.mxu0 %v1404
        %1426 = vmatprep.subr.bf16.mxu0 0
        %1427 = vmatpush1.bf16.msra.mxu0 %v1405
        %1428 = vmatprep.subr.bf16.mxu0 0
        %1429 = vmatpush1.bf16.msra.mxu0 %v1406
        %1430 = vmatprep.subr.bf16.mxu0 0
        %1431 = vmatpush1.bf16.msra.mxu0 %v1407
        %1432 = vmatprep.subr.bf16.mxu0 0
        %1433 = vmatpush1.bf16.msra.mxu0 0
        %1434 = vmatprep.subr.bf16.mxu0 0
        %1435 = vmatpush1.bf16.msra.mxu0 0
        %1436 = vmatprep.subr.bf16.mxu0 0
        %1437 = vmatpush1.bf16.msra.mxu0 0
        %1438 = vmatprep.subr.bf16.mxu0 0
        %1439 = vmatpush1.bf16.msra.mxu0 0
        %1440 = vmatprep.subr.bf16.mxu0 0
        %1441 = vmatpush1.bf16.msra.mxu0 0
        %1442 = vmatprep.subr.bf16.mxu0 0
        %1443 = vmatpush1.bf16.msra.mxu0 0
        %1444 = vmatprep.subr.bf16.mxu0 0
        %1445 = vmatpush1.bf16.msra.mxu0 0
        %1446 = vmatprep.subr.bf16.mxu0 0
        %1447 = vmatpush1.bf16.msra.mxu0 0
        %1448 = vmatprep.mubr.bf16.mxu0 0
        %1449 = vmatmul.mubr.bf16.gmra.mrb[0].mxu0 %v1351
        %v1450 = vpop.f32.mrb[0].mxu0
        %v1451 = vadd.f32 0.0, %v1450
        %v1452 = vpop.f32.mrb[0].mxu0
        %v1453 = vpop.f32.mrb[0].mxu0
        %v1454 = vpop.f32.mrb[0].mxu0
        %1455 = vdwg.mxu0
        %v1456 = vadd.f32 %v1253, %v1451
        %v1457 = vld [vmem:[#allocation22] sm:$0x1]
        %v1459 = vlaneseq
        %v1460 = vshrl.u32 %v1459, 7
        %v1461 = vsub.s32 0, %v1460
        %v1462 = vrot.slane %v1457, %v1461
        %v1464 = vadd.f32 %v1456, %v1462
        %1465 = vst.msk [vmem:[%s613] sm:$0xff] %vm618, %v1464
        %s1466 = sand.u32 %s322, 1
        %s1467 = scalar_lea.sflag [#allocation4], %s1466
        %s1468 = sand.u32 %s322, 1
        %s1469 = smul.addr %s1468, 8
        %s1470 = scalar_lea.vmem [#allocation23], %s1469
        // Predicated region
        $region125: #{tpu_custom_call.1} parent=71 // pred_check
          %p1471 = pneg %p332
        $region126: #{tpu_custom_call.1} parent=71 // pred_check_branch
          %1473 = sbr.rel (%p1471) target = $region128
        $region127: #{tpu_custom_call.1} parent=71 // pred_region
          %s1475 = ssub.s32 128, 128
          %1476 = vsyncadd %s1467, %s1475
          %s1477 = smul.addr %s36, 128
          %s1478 = scalar_lea.hbm %s13, %s1477
          %s1480 = sshll.u32 %s1470, 4
          %s1481 = int_to_ptr.vmem [resolvable:$true] %s1480
          %1483 = dma.vmem_to_hbm [thread:$0]  %s1481, 128, %s1478, %s1467
        $region128: #{tpu_custom_call.1} parent=71 // pred_fallthru
          _
      $region72: #{tpu_custom_call.1} parent=5 // pred_fallthru
        _
      %p1484 = scmp.le.s32.totalorder 2, %s31
      // Predicated region
      $region129: #{tpu_custom_call.1} parent=5 // pred_check
        %p1485 = pneg %p1484
      $region130: #{tpu_custom_call.1} parent=5 // pred_check_branch
        %1487 = sbr.rel (%p1485) target = $region132
      $region131: #{tpu_custom_call.1} parent=5 // pred_region
        %s1488 = ssub.s32 %s31, 2
        // Predicated region
        $region133: #{tpu_custom_call.1} parent=131 // pred_check
          %p1489 = pneg %p338
        $region134: #{tpu_custom_call.1} parent=131 // pred_check_branch
          %1491 = sbr.rel (%p1489) target = $region136
        $region135: #{tpu_custom_call.1} parent=131 // pred_region
          %s1492 = sand.u32 %s323, 1
          %s1493 = scalar_lea.sflag [#allocation4], %s1492
          %s1494 = sand.u32 %s323, 1
          %s1495 = smul.addr %s1494, 8
          %s1496 = scalar_lea.vmem [#allocation23], %s1495
          %1497 = dma.done %s1493, 128
        $region136: #{tpu_custom_call.1} parent=131 // pred_fallthru
          _
      $region132: #{tpu_custom_call.1} parent=5 // pred_fallthru
        _
    $region6: #{tpu_custom_call.1} parent=1 // loop_footer
      %s35 = sadd.s32 1, %s31
    $region7: #{tpu_custom_call.1} parent=1 // loop_footer_branch
      %30 = sbr.rel target = $region3
    $region8: #{tpu_custom_call.1} parent=1 // loop_exit
      _
    %1498 = vsyncpa [#allocation3], 1
    %s1499 = scalar_lea.sflag [#allocation3], 1
    %1500 = vsyncpa %s1499, 1
    %1501 = vsyncpa [#allocation6], 1
    %1502 = vsyncpa [#allocation9], 1
    %1503 = vsyncpa [#allocation12], 1
    %1504 = vsyncpa [#allocation15], 1
    %1505 = vsyncpa [#allocation18], 1
    %1506 = vsyncpa [#allocation21], 1
    %1507 = vsyncpa [#allocation4], 1
    %s1508 = scalar_lea.sflag [#allocation4], 1
    %1509 = vsyncpa %s1508, 1

</llo_original>
